<compile_context>
chip_gen: v7x
topology: tpu7x:2x2x1
jax: 0.10.0
libtpu: 0.0.40
codegen_flags: <defaults>
</compile_context>

<pallas_src>
import jax
import jax.numpy as jnp
from jax import lax
from jax.experimental import pallas as pl
from jax.experimental.pallas import tpu as pltpu


# ----------------------------- Pallas kernels ------------------------------

def _conv_pool_kernel(w_ref, p_ref, b_ref, o_ref):
    """pooled = 0.25 * sum_g tanh(W_g @ P + b_g).

    w_ref: (4*Cp, K) bf16  -- 4 pool-phase copies of the conv weight
    p_ref: (K, tile) bf16  -- 6x6/stride-5 patch columns (pool-sampled)
    b_ref: (4*Cp, 1) f32
    o_ref: (Cp, tile) bf16 -- pooled, tanh'd conv output
    """
    cp = o_ref.shape[0]
    y = jnp.dot(w_ref[...], p_ref[...],
                preferred_element_type=jnp.float32) + b_ref[...]
    t = jnp.tanh(y)
    pooled = 0.25 * (t[0:cp] + t[cp:2 * cp] + t[2 * cp:3 * cp] + t[3 * cp:4 * cp])
    o_ref[...] = pooled.astype(o_ref.dtype)


def conv1_pool(p1, w1q, b1q, *, tile_n=512):
    """Fused conv1 + tanh + avgpool1.  p1: (K, M) bf16 with M = B*21*21."""
    K, M = p1.shape
    R = w1q.shape[0]          # 4 * Cout_pad = 32
    C = R // 4                # 8 (Cout 6 padded to 8)
    tile = min(tile_n, M)
    return pl.pallas_call(
        _conv_pool_kernel,
        out_shape=jax.ShapeDtypeStruct((C, M), jnp.bfloat16),
        grid=(pl.cdiv(M, tile),),
        in_specs=[
            pl.BlockSpec((R, K), lambda i: (0, 0)),     # weights resident
            pl.BlockSpec((K, tile), lambda i: (0, i)),  # patch column tile
            pl.BlockSpec((R, 1), lambda i: (0, 0)),     # bias resident
        ],
        out_specs=pl.BlockSpec((C, tile), lambda i: (0, i)),
        compiler_params=pltpu.CompilerParams(
            dimension_semantics=("parallel",),          # 2 tiles -> v7x megacore
        ),
    )(w1q, p1, b1q)


def _stage2_kernel(p2t_ref, w2q_ref, b2q_ref, w3r_ref, b3_ref,
                   w4t_ref, b4_ref, w5t_ref, b5_ref, o_ref):
    """Fused conv2 + tanh + pool2 + flatten + FC head + sigmoid.

    p2t_ref: (16*B, 216) bf16, rows ordered (pos=p*4+q, b)
    w2q_ref: (4, 216, 16) bf16  -- one (K, Cout) slab per pool phase
    w3r_ref: (16, 16, 120) f32  -- FC1 weight regrouped per spatial position
    """
    nb = o_ref.shape[0]                       # batch
    rows = p2t_ref.shape[0]                   # 16 * nb

    # conv2 for the 4 pool phases; tanh; average -> pooled activations
    a = jnp.zeros((rows, 16), jnp.float32)
    for g in range(4):
        yg = jnp.dot(p2t_ref[...], w2q_ref[g],
                     preferred_element_type=jnp.float32) + b2q_ref[g]
        a = a + jnp.tanh(yg)
    a = 0.25 * a                              # (16*B, 16): rows (pos, b), cols c

    # FC1 accumulated over the 16 pooled spatial positions (torch (c,y,x) order
    # is baked into w3r at init) -> no in-kernel flatten/transpose needed.
    h1 = jnp.zeros((nb, 120), jnp.float32)
    for pos in range(16):
        a_pos = a[pos * nb:(pos + 1) * nb, :]                     # (B, 16)
        h1 = h1 + jnp.dot(a_pos, w3r_ref[pos],
                          preferred_element_type=jnp.float32)
    h1 = jnp.tanh(h1 + b3_ref[...])
    h2 = jnp.tanh(jnp.dot(h1, w4t_ref[...],
                          preferred_element_type=jnp.float32) + b4_ref[...])
    y = jnp.dot(h2, w5t_ref[...],
                preferred_element_type=jnp.float32) + b5_ref[...]
    o_ref[...] = jax.nn.sigmoid(y)


def stage2_fused(p2t, p):
    B = p2t.shape[0] // 16
    return pl.pallas_call(
        _stage2_kernel,
        out_shape=jax.ShapeDtypeStruct((B, 1), jnp.float32),
    )(p2t, p["w2q3"], p["b2q3"], p["w3r"], p["b3"],
      p["w4t"], p["b4"], p["w5t"], p["b5"])


# ------------------------------- init / glue --------------------------------

def expand_conv_pool_weight(w, cout_pad):
    """(Cout, Cin, 5, 5) -> (4*cout_pad, Cin*36).

    The 5x5 conv weight is embedded in a 6x6 window at the 4 pool-phase
    offsets (dy, dx) in {0,1}^2; rows are group-major, flattened (cin, u, v)
    to match conv_general_dilated_patches' (c, h, w) feature order.
    """
    cout, cin = w.shape[:2]
    groups = []
    for dy in (0, 1):
        for dx in (0, 1):
            w6 = jnp.zeros((cout_pad, cin, 6, 6), w.dtype)
            w6 = w6.at[:cout, :, dy:dy + 5, dx:dx + 5].set(w)
            groups.append(w6.reshape(cout_pad, cin * 36))
    return jnp.concatenate(groups, axis=0)


def init_params(key):
    def uniform(k, shape, fan_in):
        bound = fan_in ** -0.5
        return jax.random.uniform(k, shape, jnp.float32, -bound, bound)

    ks = jax.random.split(key, 10)
    # torch-layout parameters (same init distribution as torch defaults)
    w1 = uniform(ks[0], (6, 3, 5, 5), 75);    b1 = uniform(ks[1], (6,), 75)
    w2 = uniform(ks[2], (16, 6, 5, 5), 150);  b2 = uniform(ks[3], (16,), 150)
    w3 = uniform(ks[4], (120, 256), 256);     b3 = uniform(ks[5], (120,), 256)
    w4 = uniform(ks[6], (84, 120), 120);      b4 = uniform(ks[7], (84,), 120)
    w5 = uniform(ks[8], (1, 84), 84);         b5 = uniform(ks[9], (1,), 84)

    p = {}
    # conv1: 4 pool-phase groups over 6x6 windows, Cout 6 -> 8 rows per group
    p["w1q"] = expand_conv_pool_weight(w1, 8).astype(jnp.bfloat16)      # (32, 108)
    p["b1q"] = jnp.tile(jnp.pad(b1, (0, 2)), 4).reshape(32, 1)          # (32, 1)
    # conv2: (64, 216) group-major -> (4, 216, 16) slabs for the fused kernel
    w2q = expand_conv_pool_weight(w2, 16)                               # (64, 216)
    p["w2q3"] = w2q.reshape(4, 16, 216).transpose(0, 2, 1).astype(jnp.bfloat16)
    p["b2q3"] = jnp.broadcast_to(b2.reshape(1, 1, 16), (4, 1, 16))
    # FC1 regrouped per pooled spatial position: w3r[pos, c, f] = w3[f, c*16+pos]
    p["w3r"] = w3.reshape(120, 16, 16).transpose(2, 1, 0)               # (16, 16, 120)
    p["b3"] = b3.reshape(1, 120)
    p["w4t"] = w4.T                                                     # (120, 84)
    p["b4"] = b4.reshape(1, 84)
    p["w5t"] = w5.T                                                     # (84, 1)
    p["b5"] = b5.reshape(1, 1)
    return p


def cnn_forward(x, p):
    B = x.shape[0]
    xb = x.astype(jnp.bfloat16)

    # Stage 1: 6x6/stride-5 patches = exactly the conv1 windows feeding the
    # AvgPool2d(2, stride=5)-sampled positions (one XLA op, no Python loop).
    pt1 = lax.conv_general_dilated_patches(
        xb, (6, 6), (5, 5), 'VALID',
        dimension_numbers=('NCHW', 'OIHW', 'NCHW'))          # (B, 108, 21, 21)
    p1 = pt1.transpose(1, 0, 2, 3).reshape(108, B * 21 * 21)  # cols = (b, p, q)
    pooled1 = conv1_pool(p1, p["w1q"], p["b1q"])              # (8, B*441) bf16
    y1 = pooled1.reshape(8, B, 21, 21)[:6].transpose(1, 0, 2, 3)  # (B, 6, 21, 21)

    # Stage 2 patches (again pool-sparse), then the fully fused tail kernel.
    pt2 = lax.conv_general_dilated_patches(
        y1, (6, 6), (5, 5), 'VALID',
        dimension_numbers=('NCHW', 'OIHW', 'NCHW'))          # (B, 216, 4, 4)
    p2t = pt2.transpose(2, 3, 0, 1).reshape(16 * B, 216)      # rows = (pos, b)

    return stage2_fused(p2t, p)                               # (B, 1)


if __name__ == "__main__":
    key = jax.random.PRNGKey(0)
    k_params, k_x = jax.random.split(key)
    params = init_params(k_params)
    # Spatial size 106 is forced by the module: 106 -conv5-> 102 -pool(2,s5)->
    # 21 -conv5-> 17 -pool-> 4, giving 16*4*4 = 256 features for the FC head.
    x = jax.random.normal(k_x, (2, 3, 106, 106), jnp.float32)

    out = jax.jit(cnn_forward)(x, params)
    out = jax.block_until_ready(out)
    assert out.shape == (2, 1)
    assert bool(jnp.all((out >= 0.0) & (out <= 1.0)))
    print("KERNEL_OK")
</pallas_src>

<mosaic_0001>
module attributes {stable_mosaic.version = 11 : i64} {
  func.func @_conv_pool_kernel(%arg0: i32, %arg1: memref<32x108xbf16, #tpu.memory_space<vmem>>, %arg2: memref<108x512xbf16, #tpu.memory_space<vmem>>, %arg3: memref<32x1xf32, #tpu.memory_space<vmem>>, %arg4: memref<8x512xbf16, #tpu.memory_space<vmem>>) attributes {dimension_semantics = [#tpu.dimension_semantics<parallel>], iteration_bounds = array<i64: 2>, scalar_prefetch = 0 : i64, scratch_operands = 0 : i64, tpu.core_type = #tpu.core_type<tc>, window_params = [{pipeline_mode = #tpu.pipeline_mode<synchronous>, transform_indices = @transform_0, window_bounds = array<i64: 32, 108>}, {transform_indices = @transform_1, window_bounds = array<i64: 108, 512>}, {pipeline_mode = #tpu.pipeline_mode<synchronous>, transform_indices = @transform_2, window_bounds = array<i64: 32, 1>}, {transform_indices = @transform_3, window_bounds = array<i64: 8, 512>}]} {
    %c0 = arith.constant 0 : index
    %c0_0 = arith.constant 0 : index
    %0 = vector.load %arg1[%c0, %c0_0] : memref<32x108xbf16, #tpu.memory_space<vmem>>, vector<32x108xbf16>
    %c0_1 = arith.constant 0 : index
    %c0_2 = arith.constant 0 : index
    %1 = vector.load %arg2[%c0_1, %c0_2] : memref<108x512xbf16, #tpu.memory_space<vmem>>, vector<108x512xbf16>
    %cst = arith.constant dense<0.000000e+00> : vector<32x512xf32>
    %2 = tpu.matmul %0, %1, %cst {dimension_numbers = #tpu.dot_dimension_numbers<[1], [0], [0], [1], [0, 0, 1, 1], [], []>} : vector<32x108xbf16>, vector<108x512xbf16>, vector<32x512xf32> -> vector<32x512xf32>
    %c0_3 = arith.constant 0 : index
    %c0_4 = arith.constant 0 : index
    %3 = vector.load %arg3[%c0_3, %c0_4] : memref<32x1xf32, #tpu.memory_space<vmem>>, vector<32x1xf32>
    %4 = vector.broadcast %3 : vector<32x1xf32> to vector<32x512xf32>
    %5 = arith.addf %2, %4 : vector<32x512xf32>
    %6 = math.tanh %5 : vector<32x512xf32>
    %7 = vector.extract_strided_slice %6 {offsets = [0, 0], sizes = [8, 512], strides = [1, 1]} : vector<32x512xf32> to vector<8x512xf32>
    %8 = vector.extract_strided_slice %6 {offsets = [8, 0], sizes = [8, 512], strides = [1, 1]} : vector<32x512xf32> to vector<8x512xf32>
    %9 = arith.addf %7, %8 : vector<8x512xf32>
    %10 = vector.extract_strided_slice %6 {offsets = [16, 0], sizes = [8, 512], strides = [1, 1]} : vector<32x512xf32> to vector<8x512xf32>
    %11 = arith.addf %9, %10 : vector<8x512xf32>
    %12 = vector.extract_strided_slice %6 {offsets = [24, 0], sizes = [8, 512], strides = [1, 1]} : vector<32x512xf32> to vector<8x512xf32>
    %13 = arith.addf %11, %12 : vector<8x512xf32>
    %cst_5 = arith.constant 2.500000e-01 : f32
    %14 = vector.broadcast %cst_5 : f32 to vector<8x512xf32>
    %15 = arith.mulf %14, %13 : vector<8x512xf32>
    %16 = arith.truncf %15 : vector<8x512xf32> to vector<8x512xbf16>
    %c0_6 = arith.constant 0 : index
    %c0_7 = arith.constant 0 : index
    %17 = vector.load %arg4[%c0_6, %c0_7] : memref<8x512xbf16, #tpu.memory_space<vmem>>, vector<8x512xbf16>
    tpu.vector_store %arg4[%c0_6, %c0_7], %16 {strides = array<i32>} : memref<8x512xbf16, #tpu.memory_space<vmem>>, vector<8x512xbf16>,
    return
  }
  func.func @transform_0(%arg0: i32) -> (i32, i32) {
    %c0_i32 = arith.constant 0 : i32
    %c0_i32_0 = arith.constant 0 : i32
    %c0_i32_1 = arith.constant 0 : i32
    return %c0_i32, %c0_i32_0 : i32, i32
  }
  func.func @transform_1(%arg0: i32) -> (i32, i32) {
    %c0_i32 = arith.constant 0 : i32
    %c0_i32_0 = arith.constant 0 : i32
    return %c0_i32, %arg0 : i32, i32
  }
  func.func @transform_2(%arg0: i32) -> (i32, i32) {
    %c0_i32 = arith.constant 0 : i32
    %c0_i32_0 = arith.constant 0 : i32
    %c0_i32_1 = arith.constant 0 : i32
    return %c0_i32, %c0_i32_0 : i32, i32
  }
  func.func @transform_3(%arg0: i32) -> (i32, i32) {
    %c0_i32 = arith.constant 0 : i32
    %c0_i32_0 = arith.constant 0 : i32
    return %c0_i32, %arg0 : i32, i32
  }
}

module attributes {stable_mosaic.version = 11 : i64} {
  func.func @_stage2_kernel(%arg0: memref<32x216xbf16, #tpu.memory_space<vmem>>, %arg1: memref<4x216x16xbf16, #tpu.memory_space<vmem>>, %arg2: memref<4x1x16xf32, #tpu.memory_space<vmem>>, %arg3: memref<16x16x120xf32, #tpu.memory_space<vmem>>, %arg4: memref<1x120xf32, #tpu.memory_space<vmem>>, %arg5: memref<120x84xf32, #tpu.memory_space<vmem>>, %arg6: memref<1x84xf32, #tpu.memory_space<vmem>>, %arg7: memref<84x1xf32, #tpu.memory_space<vmem>>, %arg8: memref<1x1xf32, #tpu.memory_space<vmem>>, %arg9: memref<2x1xf32, #tpu.memory_space<vmem>>) attributes {dimension_semantics = [], scalar_prefetch = 0 : i64, scratch_operands = 0 : i64, tpu.core_type = #tpu.core_type<tc>} {
    %cst = arith.constant 0.000000e+00 : f32
    %0 = vector.broadcast %cst : f32 to vector<32x16xf32>
    %c0 = arith.constant 0 : index
    %c0_0 = arith.constant 0 : index
    %1 = vector.load %arg0[%c0, %c0_0] : memref<32x216xbf16, #tpu.memory_space<vmem>>, vector<32x216xbf16>
    %c0_1 = arith.constant 0 : index
    %c0_2 = arith.constant 0 : index
    %c0_3 = arith.constant 0 : index
    %2 = vector.load %arg1[%c0_1, %c0_2, %c0_3] : memref<4x216x16xbf16, #tpu.memory_space<vmem>>, vector<1x216x16xbf16>
    %3 = vector.shape_cast %2 : vector<1x216x16xbf16> to vector<216x16xbf16>
    %cst_4 = arith.constant dense<0.000000e+00> : vector<32x16xf32>
    %4 = tpu.matmul %1, %3, %cst_4 {dimension_numbers = #tpu.dot_dimension_numbers<[1], [0], [0], [1], [0, 0, 1, 1], [], []>} : vector<32x216xbf16>, vector<216x16xbf16>, vector<32x16xf32> -> vector<32x16xf32>
    %c0_5 = arith.constant 0 : index
    %c0_6 = arith.constant 0 : index
    %c0_7 = arith.constant 0 : index
    %5 = vector.load %arg2[%c0_5, %c0_6, %c0_7] : memref<4x1x16xf32, #tpu.memory_space<vmem>>, vector<1x1x16xf32>
    %6 = vector.shape_cast %5 : vector<1x1x16xf32> to vector<1x16xf32>
    %7 = vector.broadcast %6 : vector<1x16xf32> to vector<32x16xf32>
    %8 = arith.addf %4, %7 : vector<32x16xf32>
    %9 = math.tanh %8 : vector<32x16xf32>
    %10 = arith.addf %0, %9 : vector<32x16xf32>
    %c0_8 = arith.constant 0 : index
    %c0_9 = arith.constant 0 : index
    %11 = vector.load %arg0[%c0_8, %c0_9] : memref<32x216xbf16, #tpu.memory_space<vmem>>, vector<32x216xbf16>
    %c1 = arith.constant 1 : index
    %c0_10 = arith.constant 0 : index
    %c0_11 = arith.constant 0 : index
    %12 = vector.load %arg1[%c1, %c0_10, %c0_11] : memref<4x216x16xbf16, #tpu.memory_space<vmem>>, vector<1x216x16xbf16>
    %13 = vector.shape_cast %12 : vector<1x216x16xbf16> to vector<216x16xbf16>
    %cst_12 = arith.constant dense<0.000000e+00> : vector<32x16xf32>
    %14 = tpu.matmul %11, %13, %cst_12 {dimension_numbers = #tpu.dot_dimension_numbers<[1], [0], [0], [1], [0, 0, 1, 1], [], []>} : vector<32x216xbf16>, vector<216x16xbf16>, vector<32x16xf32> -> vector<32x16xf32>
    %c1_13 = arith.constant 1 : index
    %c0_14 = arith.constant 0 : index
    %c0_15 = arith.constant 0 : index
    %15 = vector.load %arg2[%c1_13, %c0_14, %c0_15] : memref<4x1x16xf32, #tpu.memory_space<vmem>>, vector<1x1x16xf32>
    %16 = vector.shape_cast %15 : vector<1x1x16xf32> to vector<1x16xf32>
    %17 = vector.broadcast %16 : vector<1x16xf32> to vector<32x16xf32>
    %18 = arith.addf %14, %17 : vector<32x16xf32>
    %19 = math.tanh %18 : vector<32x16xf32>
    %20 = arith.addf %10, %19 : vector<32x16xf32>
    %c0_16 = arith.constant 0 : index
    %c0_17 = arith.constant 0 : index
    %21 = vector.load %arg0[%c0_16, %c0_17] : memref<32x216xbf16, #tpu.memory_space<vmem>>, vector<32x216xbf16>
    %c2 = arith.constant 2 : index
    %c0_18 = arith.constant 0 : index
    %c0_19 = arith.constant 0 : index
    %22 = vector.load %arg1[%c2, %c0_18, %c0_19] : memref<4x216x16xbf16, #tpu.memory_space<vmem>>, vector<1x216x16xbf16>
    %23 = vector.shape_cast %22 : vector<1x216x16xbf16> to vector<216x16xbf16>
    %cst_20 = arith.constant dense<0.000000e+00> : vector<32x16xf32>
    %24 = tpu.matmul %21, %23, %cst_20 {dimension_numbers = #tpu.dot_dimension_numbers<[1], [0], [0], [1], [0, 0, 1, 1], [], []>} : vector<32x216xbf16>, vector<216x16xbf16>, vector<32x16xf32> -> vector<32x16xf32>
    %c2_21 = arith.constant 2 : index
    %c0_22 = arith.constant 0 : index
    %c0_23 = arith.constant 0 : index
    %25 = vector.load %arg2[%c2_21, %c0_22, %c0_23] : memref<4x1x16xf32, #tpu.memory_space<vmem>>, vector<1x1x16xf32>
    %26 = vector.shape_cast %25 : vector<1x1x16xf32> to vector<1x16xf32>
    %27 = vector.broadcast %26 : vector<1x16xf32> to vector<32x16xf32>
    %28 = arith.addf %24, %27 : vector<32x16xf32>
    %29 = math.tanh %28 : vector<32x16xf32>
    %30 = arith.addf %20, %29 : vector<32x16xf32>
    %c0_24 = arith.constant 0 : index
    %c0_25 = arith.constant 0 : index
    %31 = vector.load %arg0[%c0_24, %c0_25] : memref<32x216xbf16, #tpu.memory_space<vmem>>, vector<32x216xbf16>
    %c3 = arith.constant 3 : index
    %c0_26 = arith.constant 0 : index
    %c0_27 = arith.constant 0 : index
    %32 = vector.load %arg1[%c3, %c0_26, %c0_27] : memref<4x216x16xbf16, #tpu.memory_space<vmem>>, vector<1x216x16xbf16>
    %33 = vector.shape_cast %32 : vector<1x216x16xbf16> to vector<216x16xbf16>
    %cst_28 = arith.constant dense<0.000000e+00> : vector<32x16xf32>
    %34 = tpu.matmul %31, %33, %cst_28 {dimension_numbers = #tpu.dot_dimension_numbers<[1], [0], [0], [1], [0, 0, 1, 1], [], []>} : vector<32x216xbf16>, vector<216x16xbf16>, vector<32x16xf32> -> vector<32x16xf32>
    %c3_29 = arith.constant 3 : index
    %c0_30 = arith.constant 0 : index
    %c0_31 = arith.constant 0 : index
    %35 = vector.load %arg2[%c3_29, %c0_30, %c0_31] : memref<4x1x16xf32, #tpu.memory_space<vmem>>, vector<1x1x16xf32>
    %36 = vector.shape_cast %35 : vector<1x1x16xf32> to vector<1x16xf32>
    %37 = vector.broadcast %36 : vector<1x16xf32> to vector<32x16xf32>
    %38 = arith.addf %34, %37 : vector<32x16xf32>
    %39 = math.tanh %38 : vector<32x16xf32>
    %40 = arith.addf %30, %39 : vector<32x16xf32>
    %cst_32 = arith.constant 2.500000e-01 : f32
    %41 = vector.broadcast %cst_32 : f32 to vector<32x16xf32>
    %42 = arith.mulf %41, %40 : vector<32x16xf32>
    %cst_33 = arith.constant 0.000000e+00 : f32
    %43 = vector.broadcast %cst_33 : f32 to vector<2x120xf32>
    %44 = vector.extract_strided_slice %42 {offsets = [0, 0], sizes = [2, 16], strides = [1, 1]} : vector<32x16xf32> to vector<2x16xf32>
    %c0_34 = arith.constant 0 : index
    %c0_35 = arith.constant 0 : index
    %c0_36 = arith.constant 0 : index
    %45 = vector.load %arg3[%c0_34, %c0_35, %c0_36] : memref<16x16x120xf32, #tpu.memory_space<vmem>>, vector<1x16x120xf32>
    %46 = vector.shape_cast %45 : vector<1x16x120xf32> to vector<16x120xf32>
    %cst_37 = arith.constant dense<0.000000e+00> : vector<2x120xf32>
    %47 = tpu.matmul %44, %46, %cst_37 {dimension_numbers = #tpu.dot_dimension_numbers<[1], [0], [0], [1], [0, 0, 1, 1], [], []>} : vector<2x16xf32>, vector<16x120xf32>, vector<2x120xf32> -> vector<2x120xf32>
    %48 = arith.addf %43, %47 : vector<2x120xf32>
    %49 = vector.extract_strided_slice %42 {offsets = [2, 0], sizes = [2, 16], strides = [1, 1]} : vector<32x16xf32> to vector<2x16xf32>
    %c1_38 = arith.constant 1 : index
    %c0_39 = arith.constant 0 : index
    %c0_40 = arith.constant 0 : index
    %50 = vector.load %arg3[%c1_38, %c0_39, %c0_40] : memref<16x16x120xf32, #tpu.memory_space<vmem>>, vector<1x16x120xf32>
    %51 = vector.shape_cast %50 : vector<1x16x120xf32> to vector<16x120xf32>
    %cst_41 = arith.constant dense<0.000000e+00> : vector<2x120xf32>
    %52 = tpu.matmul %49, %51, %cst_41 {dimension_numbers = #tpu.dot_dimension_numbers<[1], [0], [0], [1], [0, 0, 1, 1], [], []>} : vector<2x16xf32>, vector<16x120xf32>, vector<2x120xf32> -> vector<2x120xf32>
    %53 = arith.addf %48, %52 : vector<2x120xf32>
    %54 = vector.extract_strided_slice %42 {offsets = [4, 0], sizes = [2, 16], strides = [1, 1]} : vector<32x16xf32> to vector<2x16xf32>
    %c2_42 = arith.constant 2 : index
    %c0_43 = arith.constant 0 : index
    %c0_44 = arith.constant 0 : index
    %55 = vector.load %arg3[%c2_42, %c0_43, %c0_44] : memref<16x16x120xf32, #tpu.memory_space<vmem>>, vector<1x16x120xf32>
    %56 = vector.shape_cast %55 : vector<1x16x120xf32> to vector<16x120xf32>
    %cst_45 = arith.constant dense<0.000000e+00> : vector<2x120xf32>
    %57 = tpu.matmul %54, %56, %cst_45 {dimension_numbers = #tpu.dot_dimension_numbers<[1], [0], [0], [1], [0, 0, 1, 1], [], []>} : vector<2x16xf32>, vector<16x120xf32>, vector<2x120xf32> -> vector<2x120xf32>
    %58 = arith.addf %53, %57 : vector<2x120xf32>
    %59 = vector.extract_strided_slice %42 {offsets = [6, 0], sizes = [2, 16], strides = [1, 1]} : vector<32x16xf32> to vector<2x16xf32>
    %c3_46 = arith.constant 3 : index
    %c0_47 = arith.constant 0 : index
    %c0_48 = arith.constant 0 : index
    %60 = vector.load %arg3[%c3_46, %c0_47, %c0_48] : memref<16x16x120xf32, #tpu.memory_space<vmem>>, vector<1x16x120xf32>
    %61 = vector.shape_cast %60 : vector<1x16x120xf32> to vector<16x120xf32>
    %cst_49 = arith.constant dense<0.000000e+00> : vector<2x120xf32>
    %62 = tpu.matmul %59, %61, %cst_49 {dimension_numbers = #tpu.dot_dimension_numbers<[1], [0], [0], [1], [0, 0, 1, 1], [], []>} : vector<2x16xf32>, vector<16x120xf32>, vector<2x120xf32> -> vector<2x120xf32>
    %63 = arith.addf %58, %62 : vector<2x120xf32>
    %64 = vector.extract_strided_slice %42 {offsets = [8, 0], sizes = [2, 16], strides = [1, 1]} : vector<32x16xf32> to vector<2x16xf32>
    %c4 = arith.constant 4 : index
    %c0_50 = arith.constant 0 : index
    %c0_51 = arith.constant 0 : index
    %65 = vector.load %arg3[%c4, %c0_50, %c0_51] : memref<16x16x120xf32, #tpu.memory_space<vmem>>, vector<1x16x120xf32>
    %66 = vector.shape_cast %65 : vector<1x16x120xf32> to vector<16x120xf32>
    %cst_52 = arith.constant dense<0.000000e+00> : vector<2x120xf32>
    %67 = tpu.matmul %64, %66, %cst_52 {dimension_numbers = #tpu.dot_dimension_numbers<[1], [0], [0], [1], [0, 0, 1, 1], [], []>} : vector<2x16xf32>, vector<16x120xf32>, vector<2x120xf32> -> vector<2x120xf32>
    %68 = arith.addf %63, %67 : vector<2x120xf32>
    %69 = vector.extract_strided_slice %42 {offsets = [10, 0], sizes = [2, 16], strides = [1, 1]} : vector<32x16xf32> to vector<2x16xf32>
    %c5 = arith.constant 5 : index
    %c0_53 = arith.constant 0 : index
    %c0_54 = arith.constant 0 : index
    %70 = vector.load %arg3[%c5, %c0_53, %c0_54] : memref<16x16x120xf32, #tpu.memory_space<vmem>>, vector<1x16x120xf32>
    %71 = vector.shape_cast %70 : vector<1x16x120xf32> to vector<16x120xf32>
    %cst_55 = arith.constant dense<0.000000e+00> : vector<2x120xf32>
    %72 = tpu.matmul %69, %71, %cst_55 {dimension_numbers = #tpu.dot_dimension_numbers<[1], [0], [0], [1], [0, 0, 1, 1], [], []>} : vector<2x16xf32>, vector<16x120xf32>, vector<2x120xf32> -> vector<2x120xf32>
    %73 = arith.addf %68, %72 : vector<2x120xf32>
    %74 = vector.extract_strided_slice %42 {offsets = [12, 0], sizes = [2, 16], strides = [1, 1]} : vector<32x16xf32> to vector<2x16xf32>
    %c6 = arith.constant 6 : index
    %c0_56 = arith.constant 0 : index
    %c0_57 = arith.constant 0 : index
    %75 = vector.load %arg3[%c6, %c0_56, %c0_57] : memref<16x16x120xf32, #tpu.memory_space<vmem>>, vector<1x16x120xf32>
    %76 = vector.shape_cast %75 : vector<1x16x120xf32> to vector<16x120xf32>
    %cst_58 = arith.constant dense<0.000000e+00> : vector<2x120xf32>
    %77 = tpu.matmul %74, %76, %cst_58 {dimension_numbers = #tpu.dot_dimension_numbers<[1], [0], [0], [1], [0, 0, 1, 1], [], []>} : vector<2x16xf32>, vector<16x120xf32>, vector<2x120xf32> -> vector<2x120xf32>
    %78 = arith.addf %73, %77 : vector<2x120xf32>
    %79 = vector.extract_strided_slice %42 {offsets = [14, 0], sizes = [2, 16], strides = [1, 1]} : vector<32x16xf32> to vector<2x16xf32>
    %c7 = arith.constant 7 : index
    %c0_59 = arith.constant 0 : index
    %c0_60 = arith.constant 0 : index
    %80 = vector.load %arg3[%c7, %c0_59, %c0_60] : memref<16x16x120xf32, #tpu.memory_space<vmem>>, vector<1x16x120xf32>
    %81 = vector.shape_cast %80 : vector<1x16x120xf32> to vector<16x120xf32>
    %cst_61 = arith.constant dense<0.000000e+00> : vector<2x120xf32>
    %82 = tpu.matmul %79, %81, %cst_61 {dimension_numbers = #tpu.dot_dimension_numbers<[1], [0], [0], [1], [0, 0, 1, 1], [], []>} : vector<2x16xf32>, vector<16x120xf32>, vector<2x120xf32> -> vector<2x120xf32>
    %83 = arith.addf %78, %82 : vector<2x120xf32>
    %84 = vector.extract_strided_slice %42 {offsets = [16, 0], sizes = [2, 16], strides = [1, 1]} : vector<32x16xf32> to vector<2x16xf32>
    %c8 = arith.constant 8 : index
    %c0_62 = arith.constant 0 : index
    %c0_63 = arith.constant 0 : index
    %85 = vector.load %arg3[%c8, %c0_62, %c0_63] : memref<16x16x120xf32, #tpu.memory_space<vmem>>, vector<1x16x120xf32>
    %86 = vector.shape_cast %85 : vector<1x16x120xf32> to vector<16x120xf32>
    %cst_64 = arith.constant dense<0.000000e+00> : vector<2x120xf32>
    %87 = tpu.matmul %84, %86, %cst_64 {dimension_numbers = #tpu.dot_dimension_numbers<[1], [0], [0], [1], [0, 0, 1, 1], [], []>} : vector<2x16xf32>, vector<16x120xf32>, vector<2x120xf32> -> vector<2x120xf32>
    %88 = arith.addf %83, %87 : vector<2x120xf32>
    %89 = vector.extract_strided_slice %42 {offsets = [18, 0], sizes = [2, 16], strides = [1, 1]} : vector<32x16xf32> to vector<2x16xf32>
    %c9 = arith.constant 9 : index
    %c0_65 = arith.constant 0 : index
    %c0_66 = arith.constant 0 : index
    %90 = vector.load %arg3[%c9, %c0_65, %c0_66] : memref<16x16x120xf32, #tpu.memory_space<vmem>>, vector<1x16x120xf32>
    %91 = vector.shape_cast %90 : vector<1x16x120xf32> to vector<16x120xf32>
    %cst_67 = arith.constant dense<0.000000e+00> : vector<2x120xf32>
    %92 = tpu.matmul %89, %91, %cst_67 {dimension_numbers = #tpu.dot_dimension_numbers<[1], [0], [0], [1], [0, 0, 1, 1], [], []>} : vector<2x16xf32>, vector<16x120xf32>, vector<2x120xf32> -> vector<2x120xf32>
    %93 = arith.addf %88, %92 : vector<2x120xf32>
    %94 = vector.extract_strided_slice %42 {offsets = [20, 0], sizes = [2, 16], strides = [1, 1]} : vector<32x16xf32> to vector<2x16xf32>
    %c10 = arith.constant 10 : index
    %c0_68 = arith.constant 0 : index
    %c0_69 = arith.constant 0 : index
    %95 = vector.load %arg3[%c10, %c0_68, %c0_69] : memref<16x16x120xf32, #tpu.memory_space<vmem>>, vector<1x16x120xf32>
    %96 = vector.shape_cast %95 : vector<1x16x120xf32> to vector<16x120xf32>
    %cst_70 = arith.constant dense<0.000000e+00> : vector<2x120xf32>
    %97 = tpu.matmul %94, %96, %cst_70 {dimension_numbers = #tpu.dot_dimension_numbers<[1], [0], [0], [1], [0, 0, 1, 1], [], []>} : vector<2x16xf32>, vector<16x120xf32>, vector<2x120xf32> -> vector<2x120xf32>
    %98 = arith.addf %93, %97 : vector<2x120xf32>
    %99 = vector.extract_strided_slice %42 {offsets = [22, 0], sizes = [2, 16], strides = [1, 1]} : vector<32x16xf32> to vector<2x16xf32>
    %c11 = arith.constant 11 : index
    %c0_71 = arith.constant 0 : index
    %c0_72 = arith.constant 0 : index
    %100 = vector.load %arg3[%c11, %c0_71, %c0_72] : memref<16x16x120xf32, #tpu.memory_space<vmem>>, vector<1x16x120xf32>
    %101 = vector.shape_cast %100 : vector<1x16x120xf32> to vector<16x120xf32>
    %cst_73 = arith.constant dense<0.000000e+00> : vector<2x120xf32>
    %102 = tpu.matmul %99, %101, %cst_73 {dimension_numbers = #tpu.dot_dimension_numbers<[1], [0], [0], [1], [0, 0, 1, 1], [], []>} : vector<2x16xf32>, vector<16x120xf32>, vector<2x120xf32> -> vector<2x120xf32>
    %103 = arith.addf %98, %102 : vector<2x120xf32>
    %104 = vector.extract_strided_slice %42 {offsets = [24, 0], sizes = [2, 16], strides = [1, 1]} : vector<32x16xf32> to vector<2x16xf32>
    %c12 = arith.constant 12 : index
    %c0_74 = arith.constant 0 : index
    %c0_75 = arith.constant 0 : index
    %105 = vector.load %arg3[%c12, %c0_74, %c0_75] : memref<16x16x120xf32, #tpu.memory_space<vmem>>, vector<1x16x120xf32>
    %106 = vector.shape_cast %105 : vector<1x16x120xf32> to vector<16x120xf32>
    %cst_76 = arith.constant dense<0.000000e+00> : vector<2x120xf32>
    %107 = tpu.matmul %104, %106, %cst_76 {dimension_numbers = #tpu.dot_dimension_numbers<[1], [0], [0], [1], [0, 0, 1, 1], [], []>} : vector<2x16xf32>, vector<16x120xf32>, vector<2x120xf32> -> vector<2x120xf32>
    %108 = arith.addf %103, %107 : vector<2x120xf32>
    %109 = vector.extract_strided_slice %42 {offsets = [26, 0], sizes = [2, 16], strides = [1, 1]} : vector<32x16xf32> to vector<2x16xf32>
    %c13 = arith.constant 13 : index
    %c0_77 = arith.constant 0 : index
    %c0_78 = arith.constant 0 : index
    %110 = vector.load %arg3[%c13, %c0_77, %c0_78] : memref<16x16x120xf32, #tpu.memory_space<vmem>>, vector<1x16x120xf32>
    %111 = vector.shape_cast %110 : vector<1x16x120xf32> to vector<16x120xf32>
    %cst_79 = arith.constant dense<0.000000e+00> : vector<2x120xf32>
    %112 = tpu.matmul %109, %111, %cst_79 {dimension_numbers = #tpu.dot_dimension_numbers<[1], [0], [0], [1], [0, 0, 1, 1], [], []>} : vector<2x16xf32>, vector<16x120xf32>, vector<2x120xf32> -> vector<2x120xf32>
    %113 = arith.addf %108, %112 : vector<2x120xf32>
    %114 = vector.extract_strided_slice %42 {offsets = [28, 0], sizes = [2, 16], strides = [1, 1]} : vector<32x16xf32> to vector<2x16xf32>
    %c14 = arith.constant 14 : index
    %c0_80 = arith.constant 0 : index
    %c0_81 = arith.constant 0 : index
    %115 = vector.load %arg3[%c14, %c0_80, %c0_81] : memref<16x16x120xf32, #tpu.memory_space<vmem>>, vector<1x16x120xf32>
    %116 = vector.shape_cast %115 : vector<1x16x120xf32> to vector<16x120xf32>
    %cst_82 = arith.constant dense<0.000000e+00> : vector<2x120xf32>
    %117 = tpu.matmul %114, %116, %cst_82 {dimension_numbers = #tpu.dot_dimension_numbers<[1], [0], [0], [1], [0, 0, 1, 1], [], []>} : vector<2x16xf32>, vector<16x120xf32>, vector<2x120xf32> -> vector<2x120xf32>
    %118 = arith.addf %113, %117 : vector<2x120xf32>
    %119 = vector.extract_strided_slice %42 {offsets = [30, 0], sizes = [2, 16], strides = [1, 1]} : vector<32x16xf32> to vector<2x16xf32>
    %c15 = arith.constant 15 : index
    %c0_83 = arith.constant 0 : index
    %c0_84 = arith.constant 0 : index
    %120 = vector.load %arg3[%c15, %c0_83, %c0_84] : memref<16x16x120xf32, #tpu.memory_space<vmem>>, vector<1x16x120xf32>
    %121 = vector.shape_cast %120 : vector<1x16x120xf32> to vector<16x120xf32>
    %cst_85 = arith.constant dense<0.000000e+00> : vector<2x120xf32>
    %122 = tpu.matmul %119, %121, %cst_85 {dimension_numbers = #tpu.dot_dimension_numbers<[1], [0], [0], [1], [0, 0, 1, 1], [], []>} : vector<2x16xf32>, vector<16x120xf32>, vector<2x120xf32> -> vector<2x120xf32>
    %123 = arith.addf %118, %122 : vector<2x120xf32>
    %c0_86 = arith.constant 0 : index
    %c0_87 = arith.constant 0 : index
    %124 = vector.load %arg4[%c0_86, %c0_87] : memref<1x120xf32, #tpu.memory_space<vmem>>, vector<1x120xf32>
    %125 = vector.broadcast %124 : vector<1x120xf32> to vector<2x120xf32>
    %126 = arith.addf %123, %125 : vector<2x120xf32>
    %127 = math.tanh %126 : vector<2x120xf32>
    %c0_88 = arith.constant 0 : index
    %c0_89 = arith.constant 0 : index
    %128 = vector.load %arg5[%c0_88, %c0_89] : memref<120x84xf32, #tpu.memory_space<vmem>>, vector<120x84xf32>
    %cst_90 = arith.constant dense<0.000000e+00> : vector<2x84xf32>
    %129 = tpu.matmul %127, %128, %cst_90 {dimension_numbers = #tpu.dot_dimension_numbers<[1], [0], [0], [1], [0, 0, 1, 1], [], []>} : vector<2x120xf32>, vector<120x84xf32>, vector<2x84xf32> -> vector<2x84xf32>
    %c0_91 = arith.constant 0 : index
    %c0_92 = arith.constant 0 : index
    %130 = vector.load %arg6[%c0_91, %c0_92] : memref<1x84xf32, #tpu.memory_space<vmem>>, vector<1x84xf32>
    %131 = vector.broadcast %130 : vector<1x84xf32> to vector<2x84xf32>
    %132 = arith.addf %129, %131 : vector<2x84xf32>
    %133 = math.tanh %132 : vector<2x84xf32>
    %c0_93 = arith.constant 0 : index
    %c0_94 = arith.constant 0 : index
    %134 = vector.load %arg7[%c0_93, %c0_94] : memref<84x1xf32, #tpu.memory_space<vmem>>, vector<84x1xf32>
    %cst_95 = arith.constant dense<0.000000e+00> : vector<2x1xf32>
    %135 = tpu.matmul %133, %134, %cst_95 {dimension_numbers = #tpu.dot_dimension_numbers<[1], [0], [0], [1], [0, 0, 1, 1], [], []>} : vector<2x84xf32>, vector<84x1xf32>, vector<2x1xf32> -> vector<2x1xf32>
    %c0_96 = arith.constant 0 : index
    %c0_97 = arith.constant 0 : index
    %136 = vector.load %arg8[%c0_96, %c0_97] : memref<1x1xf32, #tpu.memory_space<vmem>>, vector<1x1xf32>
    %137 = vector.broadcast %136 : vector<1x1xf32> to vector<2x1xf32>
    %138 = arith.addf %135, %137 : vector<2x1xf32>
    %139 = arith.negf %138 : vector<2x1xf32>
    %140 = math.exp %139 : vector<2x1xf32>
    %cst_98 = arith.constant 1.000000e+00 : f32
    %141 = vector.broadcast %cst_98 : f32 to vector<2x1xf32>
    %142 = arith.addf %141, %140 : vector<2x1xf32>
    %143 = arith.divf %141, %142 : vector<2x1xf32>
    %c0_99 = arith.constant 0 : index
    %c0_100 = arith.constant 0 : index
    %144 = vector.load %arg9[%c0_99, %c0_100] : memref<2x1xf32, #tpu.memory_space<vmem>>, vector<2x1xf32>
    tpu.vector_store %arg9[%c0_99, %c0_100], %143 {strides = array<i32>} : memref<2x1xf32, #tpu.memory_space<vmem>>, vector<2x1xf32>,
    return
  }
}

</mosaic_0001>

<llo_original>
// kernel: cnn_forward.2
$region0: #{cnn_forward.2}
  #allocation0 [shape = 'u32[]', space=smem, size = 0x4, offset = 0x4, fixed_abs, tag = 'smem constant byte address 0x4 - core index']
  #allocation1 [shape = 'u32[144,128]{1,0:T(1,128)}', space=vmem, size = 0x12000, scoped, tag = 'internal scratch']
  %s0 = inlined_call_operand.vmem [shape: bf16[32,108], index: 0, kind: input, shape index: {}]
  %s1 = inlined_call_operand.vmem [shape: bf16[108,882], index: 1, kind: input, shape index: {}]
  %s2 = inlined_call_operand.vmem [shape: f32[32,1], index: 2, kind: input, shape index: {}]
  %s3 = inlined_call_operand.vmem [shape: bf16[8,882], index: 3, kind: output, shape index: {}]
  %s4 = sld [smem:[#allocation0]]
  $region173: #{cnn_forward.2} parent=0
    _
  %s6 = ssub.s32 1, %s4
  %s7 = scalar_select 0, %s6, %s4
  $region1: #{cnn_forward.2} parent=0
    #allocation2 [shape = 'u8[229376]{0}', space=vmem, size = 0x38000, scoped, tag = 'input window, operand 1']
    #allocation3 [shape = 'u8[16384]{0}', space=vmem, size = 0x4000, scoped, tag = 'output window, operand 0']
    loop: start=0, step=1, limit=4
    $region2: #{cnn_forward.2} parent=1 // loop_pre_header
      _
    $region3: #{cnn_forward.2} parent=1 // loop_header
      %s9 = sphi 0, %s13
      %p10 = scmp.ge.s32.totalorder %s9, 4
      %s17 = sphi 0, %s17
      %s19 = sphi 0, %s17
      %s20 = sphi 0, %s19
      %s34 = sphi 0, %s20
      %s40 = sphi 0, %s42
      %s43 = sphi 0, %s40
      %s44 = sphi 0, %s43
      %s60 = sphi 0, %s44
      %s64 = sphi 0, %s64
      %s66 = sphi 0, %s64
      %s67 = sphi 0, %s66
      %s81 = sphi 0, %s67
      %s87 = sphi 0, %s89
      %s90 = sphi 0, %s87
      %s91 = sphi 0, %s90
      %s107 = sphi 0, %s91
    $region4: #{cnn_forward.2} parent=1 // loop_header_branch
      %12 = sbr.rel (%p10) target = $region8
    $region5: #{cnn_forward.2} parent=1 // loop_body
      %s14 = ssub.s32 %s9, 1
      %s15 = ssub.s32 %s9, 2
      %s16 = sadd.s32 %s9, 1
      %s18 = sadd.s32 %s17, 1
      %p21 = scmp.eq.s32.totalorder %s9, 1
      %p22 = scmp.ne.s32.totalorder %s17, %s19
      %p23 = scmp.eq.s32.totalorder %s9, 0
      %p24 = por %p22, %p23
      %p25 = scmp.ne.s32.totalorder %s17, %s19
      %p26 = scmp.eq.s32.totalorder %s14, 1
      %p27 = por %p25, %p26
      %p28 = scmp.ne.s32.totalorder %s19, %s20
      %p29 = scmp.eq.s32.totalorder %s14, 0
      %p30 = por %p28, %p29
      %p31 = scmp.ne.s32.totalorder %s19, %s20
      %p32 = scmp.eq.s32.totalorder %s15, 1
      %p33 = por %p31, %p32
      %p35 = scmp.ne.s32.totalorder %s20, %s34
      %p36 = scmp.eq.s32.totalorder %s15, 0
      %p37 = por %p35, %p36
      %s38 = ssub.s32 %s9, %s16
      %p39 = scmp.eq.s32.totalorder %s38, 0
      %s41 = sadd.s32 %s40, 1
      %s42 = scalar_select %p39, %s40, %s41
      %p45 = pneg %p39
      %p46 = scmp.eq.s32.totalorder %s9, 1
      %p47 = por %p45, %p46
      %p48 = scmp.ne.s32.totalorder %s40, %s43
      %p49 = scmp.eq.s32.totalorder %s9, 0
      %p50 = por %p48, %p49
      %p51 = scmp.ne.s32.totalorder %s40, %s43
      %p52 = scmp.eq.s32.totalorder %s14, 1
      %p53 = por %p51, %p52
      %p54 = scmp.ne.s32.totalorder %s43, %s44
      %p55 = scmp.eq.s32.totalorder %s14, 0
      %p56 = por %p54, %p55
      %p57 = scmp.ne.s32.totalorder %s43, %s44
      %p58 = scmp.eq.s32.totalorder %s15, 1
      %p59 = por %p57, %p58
      %p61 = scmp.ne.s32.totalorder %s44, %s60
      %p62 = scmp.eq.s32.totalorder %s15, 0
      %p63 = por %p61, %p62
      %s65 = sadd.s32 %s64, 1
      %p68 = scmp.eq.s32.totalorder %s9, 1
      %p69 = scmp.ne.s32.totalorder %s64, %s66
      %p70 = scmp.eq.s32.totalorder %s9, 0
      %p71 = por %p69, %p70
      %p72 = scmp.ne.s32.totalorder %s64, %s66
      %p73 = scmp.eq.s32.totalorder %s14, 1
      %p74 = por %p72, %p73
      %p75 = scmp.ne.s32.totalorder %s66, %s67
      %p76 = scmp.eq.s32.totalorder %s14, 0
      %p77 = por %p75, %p76
      %p78 = scmp.ne.s32.totalorder %s66, %s67
      %p79 = scmp.eq.s32.totalorder %s15, 1
      %p80 = por %p78, %p79
      %p82 = scmp.ne.s32.totalorder %s67, %s81
      %p83 = scmp.eq.s32.totalorder %s15, 0
      %p84 = por %p82, %p83
      %s85 = ssub.s32 %s9, %s16
      %p86 = scmp.eq.s32.totalorder %s85, 0
      %s88 = sadd.s32 %s87, 1
      %s89 = scalar_select %p86, %s87, %s88
      %p92 = pneg %p86
      %p93 = scmp.eq.s32.totalorder %s9, 1
      %p94 = por %p92, %p93
      %p95 = scmp.ne.s32.totalorder %s87, %s90
      %p96 = scmp.eq.s32.totalorder %s9, 0
      %p97 = por %p95, %p96
      %p98 = scmp.ne.s32.totalorder %s87, %s90
      %p99 = scmp.eq.s32.totalorder %s14, 1
      %p100 = por %p98, %p99
      %p101 = scmp.ne.s32.totalorder %s90, %s91
      %p102 = scmp.eq.s32.totalorder %s14, 0
      %p103 = por %p101, %p102
      %p104 = scmp.ne.s32.totalorder %s90, %s91
      %p105 = scmp.eq.s32.totalorder %s15, 1
      %p106 = por %p104, %p105
      %p108 = scmp.ne.s32.totalorder %s91, %s107
      %p109 = scmp.eq.s32.totalorder %s15, 0
      %p110 = por %p108, %p109
      %p111 = scmp.le.s32.totalorder 1, %s9
      %p112 = scmp.lt.s32.totalorder %s9, 3
      %p113 = pnand %p111, %p112
      %p114 = pneg %p113
      // Predicated region
      $region9: #{cnn_forward.2} parent=5 // pred_check
        _
      $region10: #{cnn_forward.2} parent=5 // pred_check_branch
        %116 = sbr.rel (%p113) target = $region12
      $region11: #{cnn_forward.2} parent=5 // pred_region
        %s117 = ssub.s32 %s9, 1
        // Predicated region
        $region13: #{cnn_forward.2} parent=11 // pred_check
          %p118 = pneg %p30
        $region14: #{cnn_forward.2} parent=11 // pred_check_branch
          %120 = sbr.rel (%p118) target = $region16
        $region15: #{cnn_forward.2} parent=11 // pred_region
          _
        $region16: #{cnn_forward.2} parent=11 // pred_fallthru
          _
        // Predicated region
        $region17: #{cnn_forward.2} parent=11 // pred_check
          %p121 = pneg %p77
        $region18: #{cnn_forward.2} parent=11 // pred_check_branch
          %123 = sbr.rel (%p121) target = $region20
        $region19: #{cnn_forward.2} parent=11 // pred_region
          _
        $region20: #{cnn_forward.2} parent=11 // pred_fallthru
          _
      $region12: #{cnn_forward.2} parent=5 // pred_fallthru
        _
      %p124 = scmp.lt.s32.totalorder %s9, 2
      // Predicated region
      $region21: #{cnn_forward.2} parent=5 // pred_check
        %p125 = pneg %p124
      $region22: #{cnn_forward.2} parent=5 // pred_check_branch
        %127 = sbr.rel (%p125) target = $region24
      $region23: #{cnn_forward.2} parent=5 // pred_region
        // Predicated region
        $region25: #{cnn_forward.2} parent=23 // pred_check
          %p128 = pneg %p50
        $region26: #{cnn_forward.2} parent=23 // pred_check_branch
          %130 = sbr.rel (%p128) target = $region28
        $region27: #{cnn_forward.2} parent=23 // pred_region
          %s131 = sand.u32 %s40, 1
          %s132 = sand.u32 %s40, 1
          %s133 = smul.addr %s132, 224
          %s134 = scalar_lea.vmem [#allocation2], %s133
          %s135 = smul.u32 4, %s9
          %s136 = ssub.s32 7, %s135
          %p137 = scmp.lt.s32.totalorder %s136, 4
          %s138 = scalar_select %p137, %s136, 4
          %s139 = smul.u32 896, %s138
          %p140 = scmp.ne.s32.totalorder 0, %s139
          %s141 = smul.addr %s135, 4
          %s142 = scalar_lea.vmem %s1, %s141
          %s143 = smul.u32 %s138, 4
          // Predicated region
          $region29: #{cnn_forward.2} parent=27 // pred_check
            %p144 = pneg %p140
          $region30: #{cnn_forward.2} parent=27 // pred_check_branch
            %146 = sbr.rel (%p144) target = $region32
          $region31: #{cnn_forward.2} parent=27 // pred_region
            %p147 = scmp.lt.u32.totalorder %s143, 8
            %p148 = pneg %p147
            // Predicated region
            $region33: #{cnn_forward.2} parent=31 // pred_check
              _
            $region34: #{cnn_forward.2} parent=31 // pred_check_branch
              %150 = sbr.rel (%p147) target = $region36
            $region35: #{cnn_forward.2} parent=31 // pred_region
              %s191 = sand.u32 %s143, 7
              %p192 = scmp.eq.s32.totalorder %s191, 0
              // Predicated region
              $region48: #{cnn_forward.2} parent=35 // pred_check
                %p193 = pneg %p192
              $region49: #{cnn_forward.2} parent=35 // pred_check_branch
                %195 = sbr.rel (%p193) target = $region51
              $region50: #{cnn_forward.2} parent=35 // pred_region
                %s196 = sshrl.u32 %s143, 3
                %s197 = sshrl.u32 %s196, 3
                // While loop
                $region52: #{cnn_forward.2} parent=50 // loop_pre_header
                  _
                $region53: #{cnn_forward.2} parent=50 // loop_header
                  %s201 = sphi 0, %s203
                  %p202 = scmp.ge.s32.totalorder %s201, %s197
                  %s206 = sphi 0, %s435
                  %s207 = sphi %s142, %s438
                  %s208 = sphi %s134, %s439
                $region54: #{cnn_forward.2} parent=50 // loop_header_branch
                  %205 = sbr.rel (%p202) target = $region58
                $region55: #{cnn_forward.2} parent=50 // loop_body
                  %v209 = vld [vmem:[%s207] sm:$0xff]
                  %210 = vst [vmem:[%s208] sm:$0xff] %v209
                  %v211 = vld [vmem:[%s207 + $0x8] sm:$0xff]
                  %212 = vst [vmem:[%s208 + $0x8] sm:$0xff] %v211
                  %v213 = vld [vmem:[%s207 + $0x10] sm:$0xff]
                  %214 = vst [vmem:[%s208 + $0x10] sm:$0xff] %v213
                  %v215 = vld [vmem:[%s207 + $0x18] sm:$0xff]
                  %216 = vst [vmem:[%s208 + $0x18] sm:$0xff] %v215
                  %v217 = vld [vmem:[%s207 + $0x20] sm:$0xff]
                  %218 = vst [vmem:[%s208 + $0x20] sm:$0xff] %v217
                  %v219 = vld [vmem:[%s207 + $0x28] sm:$0xff]
                  %220 = vst [vmem:[%s208 + $0x28] sm:$0xff] %v219
                  %v221 = vld [vmem:[%s207 + $0x30] sm:$0xff]
                  %222 = vst [vmem:[%s208 + $0x30] sm:$0xff] %v221
                  %v223 = vld [vmem:[%s207 + $0x38] sm:$0xff]
                  %224 = vst [vmem:[%s208 + $0x38] sm:$0xff] %v223
                  %v225 = vld [vmem:[%s207 + $0x1c] sm:$0xff]
                  %226 = vst [vmem:[%s208 + $0x10] sm:$0xff] %v225
                  %v227 = vld [vmem:[%s207 + $0x24] sm:$0xff]
                  %228 = vst [vmem:[%s208 + $0x18] sm:$0xff] %v227
                  %v229 = vld [vmem:[%s207 + $0x2c] sm:$0xff]
                  %230 = vst [vmem:[%s208 + $0x20] sm:$0xff] %v229
                  %v231 = vld [vmem:[%s207 + $0x34] sm:$0xff]
                  %232 = vst [vmem:[%s208 + $0x28] sm:$0xff] %v231
                  %v233 = vld [vmem:[%s207 + $0x3c] sm:$0xff]
                  %234 = vst [vmem:[%s208 + $0x30] sm:$0xff] %v233
                  %v235 = vld [vmem:[%s207 + $0x44] sm:$0xff]
                  %236 = vst [vmem:[%s208 + $0x38] sm:$0xff] %v235
                  %v237 = vld [vmem:[%s207 + $0x4c] sm:$0xff]
                  %238 = vst [vmem:[%s208 + $0x40] sm:$0xff] %v237
                  %v239 = vld [vmem:[%s207 + $0x54] sm:$0xff]
                  %240 = vst [vmem:[%s208 + $0x48] sm:$0xff] %v239
                  %v241 = vld [vmem:[%s207 + $0x38] sm:$0xff]
                  %242 = vst [vmem:[%s208 + $0x20] sm:$0xff] %v241
                  %v243 = vld [vmem:[%s207 + $0x40] sm:$0xff]
                  %244 = vst [vmem:[%s208 + $0x28] sm:$0xff] %v243
                  %v245 = vld [vmem:[%s207 + $0x48] sm:$0xff]
                  %246 = vst [vmem:[%s208 + $0x30] sm:$0xff] %v245
                  %v247 = vld [vmem:[%s207 + $0x50] sm:$0xff]
                  %248 = vst [vmem:[%s208 + $0x38] sm:$0xff] %v247
                  %v249 = vld [vmem:[%s207 + $0x58] sm:$0xff]
                  %250 = vst [vmem:[%s208 + $0x40] sm:$0xff] %v249
                  %v251 = vld [vmem:[%s207 + $0x60] sm:$0xff]
                  %252 = vst [vmem:[%s208 + $0x48] sm:$0xff] %v251
                  %v253 = vld [vmem:[%s207 + $0x68] sm:$0xff]
                  %254 = vst [vmem:[%s208 + $0x50] sm:$0xff] %v253
                  %v255 = vld [vmem:[%s207 + $0x70] sm:$0xff]
                  %256 = vst [vmem:[%s208 + $0x58] sm:$0xff] %v255
                  %v257 = vld [vmem:[%s207 + $0x54] sm:$0xff]
                  %258 = vst [vmem:[%s208 + $0x30] sm:$0xff] %v257
                  %v259 = vld [vmem:[%s207 + $0x5c] sm:$0xff]
                  %260 = vst [vmem:[%s208 + $0x38] sm:$0xff] %v259
                  %v261 = vld [vmem:[%s207 + $0x64] sm:$0xff]
                  %262 = vst [vmem:[%s208 + $0x40] sm:$0xff] %v261
                  %v263 = vld [vmem:[%s207 + $0x6c] sm:$0xff]
                  %264 = vst [vmem:[%s208 + $0x48] sm:$0xff] %v263
                  %v265 = vld [vmem:[%s207 + $0x74] sm:$0xff]
                  %266 = vst [vmem:[%s208 + $0x50] sm:$0xff] %v265
                  %v267 = vld [vmem:[%s207 + $0x7c] sm:$0xff]
                  %268 = vst [vmem:[%s208 + $0x58] sm:$0xff] %v267
                  %v269 = vld [vmem:[%s207 + $0x84] sm:$0xff]
                  %270 = vst [vmem:[%s208 + $0x60] sm:$0xff] %v269
                  %v271 = vld [vmem:[%s207 + $0x8c] sm:$0xff]
                  %272 = vst [vmem:[%s208 + $0x68] sm:$0xff] %v271
                  %v273 = vld [vmem:[%s207 + $0x70] sm:$0xff]
                  %274 = vst [vmem:[%s208 + $0x40] sm:$0xff] %v273
                  %v275 = vld [vmem:[%s207 + $0x78] sm:$0xff]
                  %276 = vst [vmem:[%s208 + $0x48] sm:$0xff] %v275
                  %v277 = vld [vmem:[%s207 + $0x80] sm:$0xff]
                  %278 = vst [vmem:[%s208 + $0x50] sm:$0xff] %v277
                  %v279 = vld [vmem:[%s207 + $0x88] sm:$0xff]
                  %280 = vst [vmem:[%s208 + $0x58] sm:$0xff] %v279
                  %v281 = vld [vmem:[%s207 + $0x90] sm:$0xff]
                  %282 = vst [vmem:[%s208 + $0x60] sm:$0xff] %v281
                  %v283 = vld [vmem:[%s207 + $0x98] sm:$0xff]
                  %284 = vst [vmem:[%s208 + $0x68] sm:$0xff] %v283
                  %v285 = vld [vmem:[%s207 + $0xa0] sm:$0xff]
                  %286 = vst [vmem:[%s208 + $0x70] sm:$0xff] %v285
                  %v287 = vld [vmem:[%s207 + $0xa8] sm:$0xff]
                  %288 = vst [vmem:[%s208 + $0x78] sm:$0xff] %v287
                  %v289 = vld [vmem:[%s207 + $0x8c] sm:$0xff]
                  %290 = vst [vmem:[%s208 + $0x50] sm:$0xff] %v289
                  %v291 = vld [vmem:[%s207 + $0x94] sm:$0xff]
                  %292 = vst [vmem:[%s208 + $0x58] sm:$0xff] %v291
                  %v293 = vld [vmem:[%s207 + $0x9c] sm:$0xff]
                  %294 = vst [vmem:[%s208 + $0x60] sm:$0xff] %v293
                  %v295 = vld [vmem:[%s207 + $0xa4] sm:$0xff]
                  %296 = vst [vmem:[%s208 + $0x68] sm:$0xff] %v295
                  %v297 = vld [vmem:[%s207 + $0xac] sm:$0xff]
                  %298 = vst [vmem:[%s208 + $0x70] sm:$0xff] %v297
                  %v299 = vld [vmem:[%s207 + $0xb4] sm:$0xff]
                  %300 = vst [vmem:[%s208 + $0x78] sm:$0xff] %v299
                  %v301 = vld [vmem:[%s207 + $0xbc] sm:$0xff]
                  %302 = vst [vmem:[%s208 + $0x80] sm:$0xff] %v301
                  %v303 = vld [vmem:[%s207 + $0xc4] sm:$0xff]
                  %304 = vst [vmem:[%s208 + $0x88] sm:$0xff] %v303
                  %v305 = vld [vmem:[%s207 + $0xa8] sm:$0xff]
                  %306 = vst [vmem:[%s208 + $0x60] sm:$0xff] %v305
                  %v307 = vld [vmem:[%s207 + $0xb0] sm:$0xff]
                  %308 = vst [vmem:[%s208 + $0x68] sm:$0xff] %v307
                  %v309 = vld [vmem:[%s207 + $0xb8] sm:$0xff]
                  %310 = vst [vmem:[%s208 + $0x70] sm:$0xff] %v309
                  %v311 = vld [vmem:[%s207 + $0xc0] sm:$0xff]
                  %312 = vst [vmem:[%s208 + $0x78] sm:$0xff] %v311
                  %v313 = vld [vmem:[%s207 + $0xc8] sm:$0xff]
                  %314 = vst [vmem:[%s208 + $0x80] sm:$0xff] %v313
                  %v315 = vld [vmem:[%s207 + $0xd0] sm:$0xff]
                  %316 = vst [vmem:[%s208 + $0x88] sm:$0xff] %v315
                  %v317 = vld [vmem:[%s207 + $0xd8] sm:$0xff]
                  %318 = vst [vmem:[%s208 + $0x90] sm:$0xff] %v317
                  %v319 = vld [vmem:[%s207 + $0xe0] sm:$0xff]
                  %320 = vst [vmem:[%s208 + $0x98] sm:$0xff] %v319
                  %v321 = vld [vmem:[%s207 + $0xc4] sm:$0xff]
                  %322 = vst [vmem:[%s208 + $0x70] sm:$0xff] %v321
                  %v323 = vld [vmem:[%s207 + $0xcc] sm:$0xff]
                  %324 = vst [vmem:[%s208 + $0x78] sm:$0xff] %v323
                  %v325 = vld [vmem:[%s207 + $0xd4] sm:$0xff]
                  %326 = vst [vmem:[%s208 + $0x80] sm:$0xff] %v325
                  %v327 = vld [vmem:[%s207 + $0xdc] sm:$0xff]
                  %328 = vst [vmem:[%s208 + $0x88] sm:$0xff] %v327
                  %v329 = vld [vmem:[%s207 + $0xe4] sm:$0xff]
                  %330 = vst [vmem:[%s208 + $0x90] sm:$0xff] %v329
                  %v331 = vld [vmem:[%s207 + $0xec] sm:$0xff]
                  %332 = vst [vmem:[%s208 + $0x98] sm:$0xff] %v331
                  %v333 = vld [vmem:[%s207 + $0xf4] sm:$0xff]
                  %334 = vst [vmem:[%s208 + $0xa0] sm:$0xff] %v333
                  %v335 = vld [vmem:[%s207 + $0xfc] sm:$0xff]
                  %336 = vst [vmem:[%s208 + $0xa8] sm:$0xff] %v335
                  %v337 = vld [vmem:[%s207 + $0xe0] sm:$0xff]
                  %338 = vst [vmem:[%s208 + $0x80] sm:$0xff] %v337
                  %v339 = vld [vmem:[%s207 + $0xe8] sm:$0xff]
                  %340 = vst [vmem:[%s208 + $0x88] sm:$0xff] %v339
                  %v341 = vld [vmem:[%s207 + $0xf0] sm:$0xff]
                  %342 = vst [vmem:[%s208 + $0x90] sm:$0xff] %v341
                  %v343 = vld [vmem:[%s207 + $0xf8] sm:$0xff]
                  %344 = vst [vmem:[%s208 + $0x98] sm:$0xff] %v343
                  %v345 = vld [vmem:[%s207 + $0x100] sm:$0xff]
                  %346 = vst [vmem:[%s208 + $0xa0] sm:$0xff] %v345
                  %v347 = vld [vmem:[%s207 + $0x108] sm:$0xff]
                  %348 = vst [vmem:[%s208 + $0xa8] sm:$0xff] %v347
                  %v349 = vld [vmem:[%s207 + $0x110] sm:$0xff]
                  %350 = vst [vmem:[%s208 + $0xb0] sm:$0xff] %v349
                  %v351 = vld [vmem:[%s207 + $0x118] sm:$0xff]
                  %352 = vst [vmem:[%s208 + $0xb8] sm:$0xff] %v351
                  %v353 = vld [vmem:[%s207 + $0xfc] sm:$0xff]
                  %354 = vst [vmem:[%s208 + $0x90] sm:$0xff] %v353
                  %v355 = vld [vmem:[%s207 + $0x104] sm:$0xff]
                  %356 = vst [vmem:[%s208 + $0x98] sm:$0xff] %v355
                  %v357 = vld [vmem:[%s207 + $0x10c] sm:$0xff]
                  %358 = vst [vmem:[%s208 + $0xa0] sm:$0xff] %v357
                  %v359 = vld [vmem:[%s207 + $0x114] sm:$0xff]
                  %360 = vst [vmem:[%s208 + $0xa8] sm:$0xff] %v359
                  %v361 = vld [vmem:[%s207 + $0x11c] sm:$0xff]
                  %362 = vst [vmem:[%s208 + $0xb0] sm:$0xff] %v361
                  %v363 = vld [vmem:[%s207 + $0x124] sm:$0xff]
                  %364 = vst [vmem:[%s208 + $0xb8] sm:$0xff] %v363
                  %v365 = vld [vmem:[%s207 + $0x12c] sm:$0xff]
                  %366 = vst [vmem:[%s208 + $0xc0] sm:$0xff] %v365
                  %v367 = vld [vmem:[%s207 + $0x134] sm:$0xff]
                  %368 = vst [vmem:[%s208 + $0xc8] sm:$0xff] %v367
                  %v369 = vld [vmem:[%s207 + $0x118] sm:$0xff]
                  %370 = vst [vmem:[%s208 + $0xa0] sm:$0xff] %v369
                  %v371 = vld [vmem:[%s207 + $0x120] sm:$0xff]
                  %372 = vst [vmem:[%s208 + $0xa8] sm:$0xff] %v371
                  %v373 = vld [vmem:[%s207 + $0x128] sm:$0xff]
                  %374 = vst [vmem:[%s208 + $0xb0] sm:$0xff] %v373
                  %v375 = vld [vmem:[%s207 + $0x130] sm:$0xff]
                  %376 = vst [vmem:[%s208 + $0xb8] sm:$0xff] %v375
                  %v377 = vld [vmem:[%s207 + $0x138] sm:$0xff]
                  %378 = vst [vmem:[%s208 + $0xc0] sm:$0xff] %v377
                  %v379 = vld [vmem:[%s207 + $0x140] sm:$0xff]
                  %380 = vst [vmem:[%s208 + $0xc8] sm:$0xff] %v379
                  %v381 = vld [vmem:[%s207 + $0x148] sm:$0xff]
                  %382 = vst [vmem:[%s208 + $0xd0] sm:$0xff] %v381
                  %v383 = vld [vmem:[%s207 + $0x150] sm:$0xff]
                  %384 = vst [vmem:[%s208 + $0xd8] sm:$0xff] %v383
                  %v385 = vld [vmem:[%s207 + $0x134] sm:$0xff]
                  %386 = vst [vmem:[%s208 + $0xb0] sm:$0xff] %v385
                  %v387 = vld [vmem:[%s207 + $0x13c] sm:$0xff]
                  %388 = vst [vmem:[%s208 + $0xb8] sm:$0xff] %v387
                  %v389 = vld [vmem:[%s207 + $0x144] sm:$0xff]
                  %390 = vst [vmem:[%s208 + $0xc0] sm:$0xff] %v389
                  %v391 = vld [vmem:[%s207 + $0x14c] sm:$0xff]
                  %392 = vst [vmem:[%s208 + $0xc8] sm:$0xff] %v391
                  %v393 = vld [vmem:[%s207 + $0x154] sm:$0xff]
                  %394 = vst [vmem:[%s208 + $0xd0] sm:$0xff] %v393
                  %v395 = vld [vmem:[%s207 + $0x15c] sm:$0xff]
                  %396 = vst [vmem:[%s208 + $0xd8] sm:$0xff] %v395
                  %v397 = vld [vmem:[%s207 + $0x164] sm:$0xff]
                  %398 = vst [vmem:[%s208 + $0xe0] sm:$0xff] %v397
                  %v399 = vld [vmem:[%s207 + $0x16c] sm:$0xff]
                  %400 = vst [vmem:[%s208 + $0xe8] sm:$0xff] %v399
                  %v401 = vld [vmem:[%s207 + $0x150] sm:$0xff]
                  %402 = vst [vmem:[%s208 + $0xc0] sm:$0xff] %v401
                  %v403 = vld [vmem:[%s207 + $0x158] sm:$0xff]
                  %404 = vst [vmem:[%s208 + $0xc8] sm:$0xff] %v403
                  %v405 = vld [vmem:[%s207 + $0x160] sm:$0xff]
                  %406 = vst [vmem:[%s208 + $0xd0] sm:$0xff] %v405
                  %v407 = vld [vmem:[%s207 + $0x168] sm:$0xff]
                  %408 = vst [vmem:[%s208 + $0xd8] sm:$0xff] %v407
                  %v409 = vld [vmem:[%s207 + $0x170] sm:$0xff]
                  %410 = vst [vmem:[%s208 + $0xe0] sm:$0xff] %v409
                  %v411 = vld [vmem:[%s207 + $0x178] sm:$0xff]
                  %412 = vst [vmem:[%s208 + $0xe8] sm:$0xff] %v411
                  %v413 = vld [vmem:[%s207 + $0x180] sm:$0xff]
                  %414 = vst [vmem:[%s208 + $0xf0] sm:$0xff] %v413
                  %v415 = vld [vmem:[%s207 + $0x188] sm:$0xff]
                  %416 = vst [vmem:[%s208 + $0xf8] sm:$0xff] %v415
                  %v417 = vld [vmem:[%s207 + $0x16c] sm:$0xff]
                  %418 = vst [vmem:[%s208 + $0xd0] sm:$0xff] %v417
                  %v419 = vld [vmem:[%s207 + $0x174] sm:$0xff]
                  %420 = vst [vmem:[%s208 + $0xd8] sm:$0xff] %v419
                  %v421 = vld [vmem:[%s207 + $0x17c] sm:$0xff]
                  %422 = vst [vmem:[%s208 + $0xe0] sm:$0xff] %v421
                  %v423 = vld [vmem:[%s207 + $0x184] sm:$0xff]
                  %424 = vst [vmem:[%s208 + $0xe8] sm:$0xff] %v423
                  %v425 = vld [vmem:[%s207 + $0x18c] sm:$0xff]
                  %426 = vst [vmem:[%s208 + $0xf0] sm:$0xff] %v425
                  %v427 = vld [vmem:[%s207 + $0x194] sm:$0xff]
                  %428 = vst [vmem:[%s208 + $0xf8] sm:$0xff] %v427
                  %v429 = vld [vmem:[%s207 + $0x19c] sm:$0xff]
                  %430 = vst [vmem:[%s208 + $0x100] sm:$0xff] %v429
                  %v431 = vld [vmem:[%s207 + $0x1a4] sm:$0xff]
                  %432 = vst [vmem:[%s208 + $0x108] sm:$0xff] %v431
                  %s433 = sadd.s32 1, %s206
                  %p434 = scmp.ge.s32.totalorder %s433, %s197
                  %s435 = scalar_select %p434, 0, %s433
                  %s436 = smul.u32 %s435, 64
                  %s437 = smul.u32 %s435, 64
                  %s438 = scalar_lea.vmem %s142, %s436
                  %s439 = scalar_lea.vmem %s134, %s437 [#allocation2]
                $region56: #{cnn_forward.2} parent=50 // loop_footer
                  %s203 = sadd.s32 %s201, 1
                $region57: #{cnn_forward.2} parent=50 // loop_footer_branch
                  %200 = sbr.rel target = $region53
                $region58: #{cnn_forward.2} parent=50 // loop_exit
                  _
                %s440 = sshrl.u32 %s196, 3
                %s441 = sand.u32 %s196, 7
                %s442 = smul.u32 %s440, 8
                %s443 = smul.u32 128, %s442
                %s444 = sshra.s32 %s443, 4
                %s445 = scalar_lea.vmem %s142, %s444
                %s446 = smul.u32 128, %s442
                %s447 = sshra.s32 %s446, 4
                %s448 = scalar_lea.vmem %s134, %s447 [#allocation2]
                // While loop
                $region59: #{cnn_forward.2} parent=50 // loop_pre_header
                  _
                $region60: #{cnn_forward.2} parent=50 // loop_header
                  %s452 = sphi 0, %s454
                  %p453 = scmp.ge.s32.totalorder %s452, %s441
                  %s457 = sphi 0, %s490
                  %s458 = sphi %s445, %s493
                  %s459 = sphi %s448, %s494
                $region61: #{cnn_forward.2} parent=50 // loop_header_branch
                  %456 = sbr.rel (%p453) target = $region65
                $region62: #{cnn_forward.2} parent=50 // loop_body
                  %v460 = vld [vmem:[%s458] sm:$0xff]
                  %461 = vst [vmem:[%s459] sm:$0xff] %v460
                  %v462 = vld [vmem:[%s458 + $0x1c] sm:$0xff]
                  %463 = vst [vmem:[%s459 + $0x10] sm:$0xff] %v462
                  %v464 = vld [vmem:[%s458 + $0x38] sm:$0xff]
                  %465 = vst [vmem:[%s459 + $0x20] sm:$0xff] %v464
                  %v466 = vld [vmem:[%s458 + $0x54] sm:$0xff]
                  %467 = vst [vmem:[%s459 + $0x30] sm:$0xff] %v466
                  %v468 = vld [vmem:[%s458 + $0x70] sm:$0xff]
                  %469 = vst [vmem:[%s459 + $0x40] sm:$0xff] %v468
                  %v470 = vld [vmem:[%s458 + $0x8c] sm:$0xff]
                  %471 = vst [vmem:[%s459 + $0x50] sm:$0xff] %v470
                  %v472 = vld [vmem:[%s458 + $0xa8] sm:$0xff]
                  %473 = vst [vmem:[%s459 + $0x60] sm:$0xff] %v472
                  %v474 = vld [vmem:[%s458 + $0xc4] sm:$0xff]
                  %475 = vst [vmem:[%s459 + $0x70] sm:$0xff] %v474
                  %v476 = vld [vmem:[%s458 + $0xe0] sm:$0xff]
                  %477 = vst [vmem:[%s459 + $0x80] sm:$0xff] %v476
                  %v478 = vld [vmem:[%s458 + $0xfc] sm:$0xff]
                  %479 = vst [vmem:[%s459 + $0x90] sm:$0xff] %v478
                  %v480 = vld [vmem:[%s458 + $0x118] sm:$0xff]
                  %481 = vst [vmem:[%s459 + $0xa0] sm:$0xff] %v480
                  %v482 = vld [vmem:[%s458 + $0x134] sm:$0xff]
                  %483 = vst [vmem:[%s459 + $0xb0] sm:$0xff] %v482
                  %v484 = vld [vmem:[%s458 + $0x150] sm:$0xff]
                  %485 = vst [vmem:[%s459 + $0xc0] sm:$0xff] %v484
                  %v486 = vld [vmem:[%s458 + $0x16c] sm:$0xff]
                  %487 = vst [vmem:[%s459 + $0xd0] sm:$0xff] %v486
                  %s488 = sadd.s32 1, %s457
                  %p489 = scmp.ge.s32.totalorder %s488, %s441
                  %s490 = scalar_select %p489, 0, %s488
                  %s491 = smul.u32 %s490, 8
                  %s492 = smul.u32 %s490, 8
                  %s493 = scalar_lea.vmem %s445, %s491
                  %s494 = scalar_lea.vmem %s448, %s492 [#allocation2]
                $region63: #{cnn_forward.2} parent=50 // loop_footer
                  %s454 = sadd.s32 %s452, 1
                $region64: #{cnn_forward.2} parent=50 // loop_footer_branch
                  %451 = sbr.rel target = $region60
                $region65: #{cnn_forward.2} parent=50 // loop_exit
                  _
              $region51: #{cnn_forward.2} parent=35 // pred_fallthru
                _
              %p495 = pneg %p192
              // Predicated region
              $region66: #{cnn_forward.2} parent=35 // pred_check
                _
              $region67: #{cnn_forward.2} parent=35 // pred_check_branch
                %497 = sbr.rel (%p192) target = $region69
              $region68: #{cnn_forward.2} parent=35 // pred_region
                %s498 = sand.u32 %s143, 7
                %s499 = ssub.s32 %s143, %s498
                %s500 = scalar_lea.vmem %s142, %s499
                %s501 = ssub.s32 %s143, %s498
                %s502 = scalar_lea.vmem %s134, %s501 [#allocation2]
                %s503 = sshrl.u32 %s143, 3
                %s504 = sshrl.u32 %s503, 3
                // While loop
                $region70: #{cnn_forward.2} parent=68 // loop_pre_header
                  _
                $region71: #{cnn_forward.2} parent=68 // loop_header
                  %s508 = sphi 0, %s510
                  %p509 = scmp.ge.s32.totalorder %s508, %s504
                  %s513 = sphi 0, %s742
                  %s514 = sphi %s142, %s745
                  %s515 = sphi %s134, %s746
                $region72: #{cnn_forward.2} parent=68 // loop_header_branch
                  %512 = sbr.rel (%p509) target = $region76
                $region73: #{cnn_forward.2} parent=68 // loop_body
                  %v516 = vld [vmem:[%s514] sm:$0xff]
                  %517 = vst [vmem:[%s515] sm:$0xff] %v516
                  %v518 = vld [vmem:[%s514 + $0x8] sm:$0xff]
                  %519 = vst [vmem:[%s515 + $0x8] sm:$0xff] %v518
                  %v520 = vld [vmem:[%s514 + $0x10] sm:$0xff]
                  %521 = vst [vmem:[%s515 + $0x10] sm:$0xff] %v520
                  %v522 = vld [vmem:[%s514 + $0x18] sm:$0xff]
                  %523 = vst [vmem:[%s515 + $0x18] sm:$0xff] %v522
                  %v524 = vld [vmem:[%s514 + $0x20] sm:$0xff]
                  %525 = vst [vmem:[%s515 + $0x20] sm:$0xff] %v524
                  %v526 = vld [vmem:[%s514 + $0x28] sm:$0xff]
                  %527 = vst [vmem:[%s515 + $0x28] sm:$0xff] %v526
                  %v528 = vld [vmem:[%s514 + $0x30] sm:$0xff]
                  %529 = vst [vmem:[%s515 + $0x30] sm:$0xff] %v528
                  %v530 = vld [vmem:[%s514 + $0x38] sm:$0xff]
                  %531 = vst [vmem:[%s515 + $0x38] sm:$0xff] %v530
                  %v532 = vld [vmem:[%s514 + $0x1c] sm:$0xff]
                  %533 = vst [vmem:[%s515 + $0x10] sm:$0xff] %v532
                  %v534 = vld [vmem:[%s514 + $0x24] sm:$0xff]
                  %535 = vst [vmem:[%s515 + $0x18] sm:$0xff] %v534
                  %v536 = vld [vmem:[%s514 + $0x2c] sm:$0xff]
                  %537 = vst [vmem:[%s515 + $0x20] sm:$0xff] %v536
                  %v538 = vld [vmem:[%s514 + $0x34] sm:$0xff]
                  %539 = vst [vmem:[%s515 + $0x28] sm:$0xff] %v538
                  %v540 = vld [vmem:[%s514 + $0x3c] sm:$0xff]
                  %541 = vst [vmem:[%s515 + $0x30] sm:$0xff] %v540
                  %v542 = vld [vmem:[%s514 + $0x44] sm:$0xff]
                  %543 = vst [vmem:[%s515 + $0x38] sm:$0xff] %v542
                  %v544 = vld [vmem:[%s514 + $0x4c] sm:$0xff]
                  %545 = vst [vmem:[%s515 + $0x40] sm:$0xff] %v544
                  %v546 = vld [vmem:[%s514 + $0x54] sm:$0xff]
                  %547 = vst [vmem:[%s515 + $0x48] sm:$0xff] %v546
                  %v548 = vld [vmem:[%s514 + $0x38] sm:$0xff]
                  %549 = vst [vmem:[%s515 + $0x20] sm:$0xff] %v548
                  %v550 = vld [vmem:[%s514 + $0x40] sm:$0xff]
                  %551 = vst [vmem:[%s515 + $0x28] sm:$0xff] %v550
                  %v552 = vld [vmem:[%s514 + $0x48] sm:$0xff]
                  %553 = vst [vmem:[%s515 + $0x30] sm:$0xff] %v552
                  %v554 = vld [vmem:[%s514 + $0x50] sm:$0xff]
                  %555 = vst [vmem:[%s515 + $0x38] sm:$0xff] %v554
                  %v556 = vld [vmem:[%s514 + $0x58] sm:$0xff]
                  %557 = vst [vmem:[%s515 + $0x40] sm:$0xff] %v556
                  %v558 = vld [vmem:[%s514 + $0x60] sm:$0xff]
                  %559 = vst [vmem:[%s515 + $0x48] sm:$0xff] %v558
                  %v560 = vld [vmem:[%s514 + $0x68] sm:$0xff]
                  %561 = vst [vmem:[%s515 + $0x50] sm:$0xff] %v560
                  %v562 = vld [vmem:[%s514 + $0x70] sm:$0xff]
                  %563 = vst [vmem:[%s515 + $0x58] sm:$0xff] %v562
                  %v564 = vld [vmem:[%s514 + $0x54] sm:$0xff]
                  %565 = vst [vmem:[%s515 + $0x30] sm:$0xff] %v564
                  %v566 = vld [vmem:[%s514 + $0x5c] sm:$0xff]
                  %567 = vst [vmem:[%s515 + $0x38] sm:$0xff] %v566
                  %v568 = vld [vmem:[%s514 + $0x64] sm:$0xff]
                  %569 = vst [vmem:[%s515 + $0x40] sm:$0xff] %v568
                  %v570 = vld [vmem:[%s514 + $0x6c] sm:$0xff]
                  %571 = vst [vmem:[%s515 + $0x48] sm:$0xff] %v570
                  %v572 = vld [vmem:[%s514 + $0x74] sm:$0xff]
                  %573 = vst [vmem:[%s515 + $0x50] sm:$0xff] %v572
                  %v574 = vld [vmem:[%s514 + $0x7c] sm:$0xff]
                  %575 = vst [vmem:[%s515 + $0x58] sm:$0xff] %v574
                  %v576 = vld [vmem:[%s514 + $0x84] sm:$0xff]
                  %577 = vst [vmem:[%s515 + $0x60] sm:$0xff] %v576
                  %v578 = vld [vmem:[%s514 + $0x8c] sm:$0xff]
                  %579 = vst [vmem:[%s515 + $0x68] sm:$0xff] %v578
                  %v580 = vld [vmem:[%s514 + $0x70] sm:$0xff]
                  %581 = vst [vmem:[%s515 + $0x40] sm:$0xff] %v580
                  %v582 = vld [vmem:[%s514 + $0x78] sm:$0xff]
                  %583 = vst [vmem:[%s515 + $0x48] sm:$0xff] %v582
                  %v584 = vld [vmem:[%s514 + $0x80] sm:$0xff]
                  %585 = vst [vmem:[%s515 + $0x50] sm:$0xff] %v584
                  %v586 = vld [vmem:[%s514 + $0x88] sm:$0xff]
                  %587 = vst [vmem:[%s515 + $0x58] sm:$0xff] %v586
                  %v588 = vld [vmem:[%s514 + $0x90] sm:$0xff]
                  %589 = vst [vmem:[%s515 + $0x60] sm:$0xff] %v588
                  %v590 = vld [vmem:[%s514 + $0x98] sm:$0xff]
                  %591 = vst [vmem:[%s515 + $0x68] sm:$0xff] %v590
                  %v592 = vld [vmem:[%s514 + $0xa0] sm:$0xff]
                  %593 = vst [vmem:[%s515 + $0x70] sm:$0xff] %v592
                  %v594 = vld [vmem:[%s514 + $0xa8] sm:$0xff]
                  %595 = vst [vmem:[%s515 + $0x78] sm:$0xff] %v594
                  %v596 = vld [vmem:[%s514 + $0x8c] sm:$0xff]
                  %597 = vst [vmem:[%s515 + $0x50] sm:$0xff] %v596
                  %v598 = vld [vmem:[%s514 + $0x94] sm:$0xff]
                  %599 = vst [vmem:[%s515 + $0x58] sm:$0xff] %v598
                  %v600 = vld [vmem:[%s514 + $0x9c] sm:$0xff]
                  %601 = vst [vmem:[%s515 + $0x60] sm:$0xff] %v600
                  %v602 = vld [vmem:[%s514 + $0xa4] sm:$0xff]
                  %603 = vst [vmem:[%s515 + $0x68] sm:$0xff] %v602
                  %v604 = vld [vmem:[%s514 + $0xac] sm:$0xff]
                  %605 = vst [vmem:[%s515 + $0x70] sm:$0xff] %v604
                  %v606 = vld [vmem:[%s514 + $0xb4] sm:$0xff]
                  %607 = vst [vmem:[%s515 + $0x78] sm:$0xff] %v606
                  %v608 = vld [vmem:[%s514 + $0xbc] sm:$0xff]
                  %609 = vst [vmem:[%s515 + $0x80] sm:$0xff] %v608
                  %v610 = vld [vmem:[%s514 + $0xc4] sm:$0xff]
                  %611 = vst [vmem:[%s515 + $0x88] sm:$0xff] %v610
                  %v612 = vld [vmem:[%s514 + $0xa8] sm:$0xff]
                  %613 = vst [vmem:[%s515 + $0x60] sm:$0xff] %v612
                  %v614 = vld [vmem:[%s514 + $0xb0] sm:$0xff]
                  %615 = vst [vmem:[%s515 + $0x68] sm:$0xff] %v614
                  %v616 = vld [vmem:[%s514 + $0xb8] sm:$0xff]
                  %617 = vst [vmem:[%s515 + $0x70] sm:$0xff] %v616
                  %v618 = vld [vmem:[%s514 + $0xc0] sm:$0xff]
                  %619 = vst [vmem:[%s515 + $0x78] sm:$0xff] %v618
                  %v620 = vld [vmem:[%s514 + $0xc8] sm:$0xff]
                  %621 = vst [vmem:[%s515 + $0x80] sm:$0xff] %v620
                  %v622 = vld [vmem:[%s514 + $0xd0] sm:$0xff]
                  %623 = vst [vmem:[%s515 + $0x88] sm:$0xff] %v622
                  %v624 = vld [vmem:[%s514 + $0xd8] sm:$0xff]
                  %625 = vst [vmem:[%s515 + $0x90] sm:$0xff] %v624
                  %v626 = vld [vmem:[%s514 + $0xe0] sm:$0xff]
                  %627 = vst [vmem:[%s515 + $0x98] sm:$0xff] %v626
                  %v628 = vld [vmem:[%s514 + $0xc4] sm:$0xff]
                  %629 = vst [vmem:[%s515 + $0x70] sm:$0xff] %v628
                  %v630 = vld [vmem:[%s514 + $0xcc] sm:$0xff]
                  %631 = vst [vmem:[%s515 + $0x78] sm:$0xff] %v630
                  %v632 = vld [vmem:[%s514 + $0xd4] sm:$0xff]
                  %633 = vst [vmem:[%s515 + $0x80] sm:$0xff] %v632
                  %v634 = vld [vmem:[%s514 + $0xdc] sm:$0xff]
                  %635 = vst [vmem:[%s515 + $0x88] sm:$0xff] %v634
                  %v636 = vld [vmem:[%s514 + $0xe4] sm:$0xff]
                  %637 = vst [vmem:[%s515 + $0x90] sm:$0xff] %v636
                  %v638 = vld [vmem:[%s514 + $0xec] sm:$0xff]
                  %639 = vst [vmem:[%s515 + $0x98] sm:$0xff] %v638
                  %v640 = vld [vmem:[%s514 + $0xf4] sm:$0xff]
                  %641 = vst [vmem:[%s515 + $0xa0] sm:$0xff] %v640
                  %v642 = vld [vmem:[%s514 + $0xfc] sm:$0xff]
                  %643 = vst [vmem:[%s515 + $0xa8] sm:$0xff] %v642
                  %v644 = vld [vmem:[%s514 + $0xe0] sm:$0xff]
                  %645 = vst [vmem:[%s515 + $0x80] sm:$0xff] %v644
                  %v646 = vld [vmem:[%s514 + $0xe8] sm:$0xff]
                  %647 = vst [vmem:[%s515 + $0x88] sm:$0xff] %v646
                  %v648 = vld [vmem:[%s514 + $0xf0] sm:$0xff]
                  %649 = vst [vmem:[%s515 + $0x90] sm:$0xff] %v648
                  %v650 = vld [vmem:[%s514 + $0xf8] sm:$0xff]
                  %651 = vst [vmem:[%s515 + $0x98] sm:$0xff] %v650
                  %v652 = vld [vmem:[%s514 + $0x100] sm:$0xff]
                  %653 = vst [vmem:[%s515 + $0xa0] sm:$0xff] %v652
                  %v654 = vld [vmem:[%s514 + $0x108] sm:$0xff]
                  %655 = vst [vmem:[%s515 + $0xa8] sm:$0xff] %v654
                  %v656 = vld [vmem:[%s514 + $0x110] sm:$0xff]
                  %657 = vst [vmem:[%s515 + $0xb0] sm:$0xff] %v656
                  %v658 = vld [vmem:[%s514 + $0x118] sm:$0xff]
                  %659 = vst [vmem:[%s515 + $0xb8] sm:$0xff] %v658
                  %v660 = vld [vmem:[%s514 + $0xfc] sm:$0xff]
                  %661 = vst [vmem:[%s515 + $0x90] sm:$0xff] %v660
                  %v662 = vld [vmem:[%s514 + $0x104] sm:$0xff]
                  %663 = vst [vmem:[%s515 + $0x98] sm:$0xff] %v662
                  %v664 = vld [vmem:[%s514 + $0x10c] sm:$0xff]
                  %665 = vst [vmem:[%s515 + $0xa0] sm:$0xff] %v664
                  %v666 = vld [vmem:[%s514 + $0x114] sm:$0xff]
                  %667 = vst [vmem:[%s515 + $0xa8] sm:$0xff] %v666
                  %v668 = vld [vmem:[%s514 + $0x11c] sm:$0xff]
                  %669 = vst [vmem:[%s515 + $0xb0] sm:$0xff] %v668
                  %v670 = vld [vmem:[%s514 + $0x124] sm:$0xff]
                  %671 = vst [vmem:[%s515 + $0xb8] sm:$0xff] %v670
                  %v672 = vld [vmem:[%s514 + $0x12c] sm:$0xff]
                  %673 = vst [vmem:[%s515 + $0xc0] sm:$0xff] %v672
                  %v674 = vld [vmem:[%s514 + $0x134] sm:$0xff]
                  %675 = vst [vmem:[%s515 + $0xc8] sm:$0xff] %v674
                  %v676 = vld [vmem:[%s514 + $0x118] sm:$0xff]
                  %677 = vst [vmem:[%s515 + $0xa0] sm:$0xff] %v676
                  %v678 = vld [vmem:[%s514 + $0x120] sm:$0xff]
                  %679 = vst [vmem:[%s515 + $0xa8] sm:$0xff] %v678
                  %v680 = vld [vmem:[%s514 + $0x128] sm:$0xff]
                  %681 = vst [vmem:[%s515 + $0xb0] sm:$0xff] %v680
                  %v682 = vld [vmem:[%s514 + $0x130] sm:$0xff]
                  %683 = vst [vmem:[%s515 + $0xb8] sm:$0xff] %v682
                  %v684 = vld [vmem:[%s514 + $0x138] sm:$0xff]
                  %685 = vst [vmem:[%s515 + $0xc0] sm:$0xff] %v684
                  %v686 = vld [vmem:[%s514 + $0x140] sm:$0xff]
                  %687 = vst [vmem:[%s515 + $0xc8] sm:$0xff] %v686
                  %v688 = vld [vmem:[%s514 + $0x148] sm:$0xff]
                  %689 = vst [vmem:[%s515 + $0xd0] sm:$0xff] %v688
                  %v690 = vld [vmem:[%s514 + $0x150] sm:$0xff]
                  %691 = vst [vmem:[%s515 + $0xd8] sm:$0xff] %v690
                  %v692 = vld [vmem:[%s514 + $0x134] sm:$0xff]
                  %693 = vst [vmem:[%s515 + $0xb0] sm:$0xff] %v692
                  %v694 = vld [vmem:[%s514 + $0x13c] sm:$0xff]
                  %695 = vst [vmem:[%s515 + $0xb8] sm:$0xff] %v694
                  %v696 = vld [vmem:[%s514 + $0x144] sm:$0xff]
                  %697 = vst [vmem:[%s515 + $0xc0] sm:$0xff] %v696
                  %v698 = vld [vmem:[%s514 + $0x14c] sm:$0xff]
                  %699 = vst [vmem:[%s515 + $0xc8] sm:$0xff] %v698
                  %v700 = vld [vmem:[%s514 + $0x154] sm:$0xff]
                  %701 = vst [vmem:[%s515 + $0xd0] sm:$0xff] %v700
                  %v702 = vld [vmem:[%s514 + $0x15c] sm:$0xff]
                  %703 = vst [vmem:[%s515 + $0xd8] sm:$0xff] %v702
                  %v704 = vld [vmem:[%s514 + $0x164] sm:$0xff]
                  %705 = vst [vmem:[%s515 + $0xe0] sm:$0xff] %v704
                  %v706 = vld [vmem:[%s514 + $0x16c] sm:$0xff]
                  %707 = vst [vmem:[%s515 + $0xe8] sm:$0xff] %v706
                  %v708 = vld [vmem:[%s514 + $0x150] sm:$0xff]
                  %709 = vst [vmem:[%s515 + $0xc0] sm:$0xff] %v708
                  %v710 = vld [vmem:[%s514 + $0x158] sm:$0xff]
                  %711 = vst [vmem:[%s515 + $0xc8] sm:$0xff] %v710
                  %v712 = vld [vmem:[%s514 + $0x160] sm:$0xff]
                  %713 = vst [vmem:[%s515 + $0xd0] sm:$0xff] %v712
                  %v714 = vld [vmem:[%s514 + $0x168] sm:$0xff]
                  %715 = vst [vmem:[%s515 + $0xd8] sm:$0xff] %v714
                  %v716 = vld [vmem:[%s514 + $0x170] sm:$0xff]
                  %717 = vst [vmem:[%s515 + $0xe0] sm:$0xff] %v716
                  %v718 = vld [vmem:[%s514 + $0x178] sm:$0xff]
                  %719 = vst [vmem:[%s515 + $0xe8] sm:$0xff] %v718
                  %v720 = vld [vmem:[%s514 + $0x180] sm:$0xff]
                  %721 = vst [vmem:[%s515 + $0xf0] sm:$0xff] %v720
                  %v722 = vld [vmem:[%s514 + $0x188] sm:$0xff]
                  %723 = vst [vmem:[%s515 + $0xf8] sm:$0xff] %v722
                  %v724 = vld [vmem:[%s514 + $0x16c] sm:$0xff]
                  %725 = vst [vmem:[%s515 + $0xd0] sm:$0xff] %v724
                  %v726 = vld [vmem:[%s514 + $0x174] sm:$0xff]
                  %727 = vst [vmem:[%s515 + $0xd8] sm:$0xff] %v726
                  %v728 = vld [vmem:[%s514 + $0x17c] sm:$0xff]
                  %729 = vst [vmem:[%s515 + $0xe0] sm:$0xff] %v728
                  %v730 = vld [vmem:[%s514 + $0x184] sm:$0xff]
                  %731 = vst [vmem:[%s515 + $0xe8] sm:$0xff] %v730
                  %v732 = vld [vmem:[%s514 + $0x18c] sm:$0xff]
                  %733 = vst [vmem:[%s515 + $0xf0] sm:$0xff] %v732
                  %v734 = vld [vmem:[%s514 + $0x194] sm:$0xff]
                  %735 = vst [vmem:[%s515 + $0xf8] sm:$0xff] %v734
                  %v736 = vld [vmem:[%s514 + $0x19c] sm:$0xff]
                  %737 = vst [vmem:[%s515 + $0x100] sm:$0xff] %v736
                  %v738 = vld [vmem:[%s514 + $0x1a4] sm:$0xff]
                  %739 = vst [vmem:[%s515 + $0x108] sm:$0xff] %v738
                  %s740 = sadd.s32 1, %s513
                  %p741 = scmp.ge.s32.totalorder %s740, %s504
                  %s742 = scalar_select %p741, 0, %s740
                  %s743 = smul.u32 %s742, 64
                  %s744 = smul.u32 %s742, 64
                  %s745 = scalar_lea.vmem %s142, %s743
                  %s746 = scalar_lea.vmem %s134, %s744 [#allocation2]
                $region74: #{cnn_forward.2} parent=68 // loop_footer
                  %s510 = sadd.s32 %s508, 1
                $region75: #{cnn_forward.2} parent=68 // loop_footer_branch
                  %507 = sbr.rel target = $region71
                $region76: #{cnn_forward.2} parent=68 // loop_exit
                  _
                %s747 = sshrl.u32 %s503, 3
                %s748 = sand.u32 %s503, 7
                %s749 = smul.u32 %s747, 8
                %s750 = smul.u32 128, %s749
                %s751 = sshra.s32 %s750, 4
                %s752 = scalar_lea.vmem %s142, %s751
                %s753 = smul.u32 128, %s749
                %s754 = sshra.s32 %s753, 4
                %s755 = scalar_lea.vmem %s134, %s754 [#allocation2]
                // While loop
                $region77: #{cnn_forward.2} parent=68 // loop_pre_header
                  _
                $region78: #{cnn_forward.2} parent=68 // loop_header
                  %s759 = sphi 0, %s761
                  %p760 = scmp.ge.s32.totalorder %s759, %s748
                  %s764 = sphi 0, %s797
                  %s765 = sphi %s752, %s800
                  %s766 = sphi %s755, %s801
                $region79: #{cnn_forward.2} parent=68 // loop_header_branch
                  %763 = sbr.rel (%p760) target = $region83
                $region80: #{cnn_forward.2} parent=68 // loop_body
                  %v767 = vld [vmem:[%s765] sm:$0xff]
                  %768 = vst [vmem:[%s766] sm:$0xff] %v767
                  %v769 = vld [vmem:[%s765 + $0x1c] sm:$0xff]
                  %770 = vst [vmem:[%s766 + $0x10] sm:$0xff] %v769
                  %v771 = vld [vmem:[%s765 + $0x38] sm:$0xff]
                  %772 = vst [vmem:[%s766 + $0x20] sm:$0xff] %v771
                  %v773 = vld [vmem:[%s765 + $0x54] sm:$0xff]
                  %774 = vst [vmem:[%s766 + $0x30] sm:$0xff] %v773
                  %v775 = vld [vmem:[%s765 + $0x70] sm:$0xff]
                  %776 = vst [vmem:[%s766 + $0x40] sm:$0xff] %v775
                  %v777 = vld [vmem:[%s765 + $0x8c] sm:$0xff]
                  %778 = vst [vmem:[%s766 + $0x50] sm:$0xff] %v777
                  %v779 = vld [vmem:[%s765 + $0xa8] sm:$0xff]
                  %780 = vst [vmem:[%s766 + $0x60] sm:$0xff] %v779
                  %v781 = vld [vmem:[%s765 + $0xc4] sm:$0xff]
                  %782 = vst [vmem:[%s766 + $0x70] sm:$0xff] %v781
                  %v783 = vld [vmem:[%s765 + $0xe0] sm:$0xff]
                  %784 = vst [vmem:[%s766 + $0x80] sm:$0xff] %v783
                  %v785 = vld [vmem:[%s765 + $0xfc] sm:$0xff]
                  %786 = vst [vmem:[%s766 + $0x90] sm:$0xff] %v785
                  %v787 = vld [vmem:[%s765 + $0x118] sm:$0xff]
                  %788 = vst [vmem:[%s766 + $0xa0] sm:$0xff] %v787
                  %v789 = vld [vmem:[%s765 + $0x134] sm:$0xff]
                  %790 = vst [vmem:[%s766 + $0xb0] sm:$0xff] %v789
                  %v791 = vld [vmem:[%s765 + $0x150] sm:$0xff]
                  %792 = vst [vmem:[%s766 + $0xc0] sm:$0xff] %v791
                  %v793 = vld [vmem:[%s765 + $0x16c] sm:$0xff]
                  %794 = vst [vmem:[%s766 + $0xd0] sm:$0xff] %v793
                  %s795 = sadd.s32 1, %s764
                  %p796 = scmp.ge.s32.totalorder %s795, %s748
                  %s797 = scalar_select %p796, 0, %s795
                  %s798 = smul.u32 %s797, 8
                  %s799 = smul.u32 %s797, 8
                  %s800 = scalar_lea.vmem %s752, %s798
                  %s801 = scalar_lea.vmem %s755, %s799 [#allocation2]
                $region81: #{cnn_forward.2} parent=68 // loop_footer
                  %s761 = sadd.s32 %s759, 1
                $region82: #{cnn_forward.2} parent=68 // loop_footer_branch
                  %758 = sbr.rel target = $region78
                $region83: #{cnn_forward.2} parent=68 // loop_exit
                  _
                %s802 = sshllo.u32 0, %s498
                loop: start=0, step=1, limit=1
                $region84: #{cnn_forward.2} parent=68 // loop_pre_header
                  _
                $region85: #{cnn_forward.2} parent=68 // loop_header
                  %s804 = sphi 0, %s808
                  %p805 = scmp.ge.s32.totalorder %s804, 1
                  %s809 = sphi %s500, %s500
                  %s810 = sphi %s502, %s502
                $region86: #{cnn_forward.2} parent=68 // loop_header_branch
                  %807 = sbr.rel (%p805) target = $region90
                $region87: #{cnn_forward.2} parent=68 // loop_body
                  %v811 = vld [vmem:[%s809] sm:%s802]
                  %812 = vst [vmem:[%s810] sm:%s802] %v811
                  %v813 = vld [vmem:[%s809 + $0x1c] sm:%s802]
                  %814 = vst [vmem:[%s810 + $0x10] sm:%s802] %v813
                  %v815 = vld [vmem:[%s809 + $0x38] sm:%s802]
                  %816 = vst [vmem:[%s810 + $0x20] sm:%s802] %v815
                  %v817 = vld [vmem:[%s809 + $0x54] sm:%s802]
                  %818 = vst [vmem:[%s810 + $0x30] sm:%s802] %v817
                  %v819 = vld [vmem:[%s809 + $0x70] sm:%s802]
                  %820 = vst [vmem:[%s810 + $0x40] sm:%s802] %v819
                  %v821 = vld [vmem:[%s809 + $0x8c] sm:%s802]
                  %822 = vst [vmem:[%s810 + $0x50] sm:%s802] %v821
                  %v823 = vld [vmem:[%s809 + $0xa8] sm:%s802]
                  %824 = vst [vmem:[%s810 + $0x60] sm:%s802] %v823
                  %v825 = vld [vmem:[%s809 + $0xc4] sm:%s802]
                  %826 = vst [vmem:[%s810 + $0x70] sm:%s802] %v825
                  %v827 = vld [vmem:[%s809 + $0xe0] sm:%s802]
                  %828 = vst [vmem:[%s810 + $0x80] sm:%s802] %v827
                  %v829 = vld [vmem:[%s809 + $0xfc] sm:%s802]
                  %830 = vst [vmem:[%s810 + $0x90] sm:%s802] %v829
                  %v831 = vld [vmem:[%s809 + $0x118] sm:%s802]
                  %832 = vst [vmem:[%s810 + $0xa0] sm:%s802] %v831
                  %v833 = vld [vmem:[%s809 + $0x134] sm:%s802]
                  %834 = vst [vmem:[%s810 + $0xb0] sm:%s802] %v833
                  %v835 = vld [vmem:[%s809 + $0x150] sm:%s802]
                  %836 = vst [vmem:[%s810 + $0xc0] sm:%s802] %v835
                  %v837 = vld [vmem:[%s809 + $0x16c] sm:%s802]
                  %838 = vst [vmem:[%s810 + $0xd0] sm:%s802] %v837
                $region88: #{cnn_forward.2} parent=68 // loop_footer
                  %s808 = sadd.s32 1, %s804
                $region89: #{cnn_forward.2} parent=68 // loop_footer_branch
                  %803 = sbr.rel target = $region85
                $region90: #{cnn_forward.2} parent=68 // loop_exit
                  _
              $region69: #{cnn_forward.2} parent=35 // pred_fallthru
                _
            $region36: #{cnn_forward.2} parent=31 // pred_fallthru
              _
            // Predicated region
            $region37: #{cnn_forward.2} parent=31 // pred_check
              %p151 = pneg %p147
            $region38: #{cnn_forward.2} parent=31 // pred_check_branch
              %153 = sbr.rel (%p151) target = $region40
            $region39: #{cnn_forward.2} parent=31 // pred_region
              %s154 = sshllo.u32 0, %s143
              loop: start=0, step=1, limit=1
              $region41: #{cnn_forward.2} parent=39 // loop_pre_header
                _
              $region42: #{cnn_forward.2} parent=39 // loop_header
                %s156 = sphi 0, %s160
                %p157 = scmp.ge.s32.totalorder %s156, 1
                %s161 = sphi %s142, %s142
                %s162 = sphi %s134, %s134
              $region43: #{cnn_forward.2} parent=39 // loop_header_branch
                %159 = sbr.rel (%p157) target = $region47
              $region44: #{cnn_forward.2} parent=39 // loop_body
                %v163 = vld [vmem:[%s161] sm:%s154]
                %164 = vst [vmem:[%s162] sm:%s154] %v163
                %v165 = vld [vmem:[%s161 + $0x1c] sm:%s154]
                %166 = vst [vmem:[%s162 + $0x10] sm:%s154] %v165
                %v167 = vld [vmem:[%s161 + $0x38] sm:%s154]
                %168 = vst [vmem:[%s162 + $0x20] sm:%s154] %v167
                %v169 = vld [vmem:[%s161 + $0x54] sm:%s154]
                %170 = vst [vmem:[%s162 + $0x30] sm:%s154] %v169
                %v171 = vld [vmem:[%s161 + $0x70] sm:%s154]
                %172 = vst [vmem:[%s162 + $0x40] sm:%s154] %v171
                %v173 = vld [vmem:[%s161 + $0x8c] sm:%s154]
                %174 = vst [vmem:[%s162 + $0x50] sm:%s154] %v173
                %v175 = vld [vmem:[%s161 + $0xa8] sm:%s154]
                %176 = vst [vmem:[%s162 + $0x60] sm:%s154] %v175
                %v177 = vld [vmem:[%s161 + $0xc4] sm:%s154]
                %178 = vst [vmem:[%s162 + $0x70] sm:%s154] %v177
                %v179 = vld [vmem:[%s161 + $0xe0] sm:%s154]
                %180 = vst [vmem:[%s162 + $0x80] sm:%s154] %v179
                %v181 = vld [vmem:[%s161 + $0xfc] sm:%s154]
                %182 = vst [vmem:[%s162 + $0x90] sm:%s154] %v181
                %v183 = vld [vmem:[%s161 + $0x118] sm:%s154]
                %184 = vst [vmem:[%s162 + $0xa0] sm:%s154] %v183
                %v185 = vld [vmem:[%s161 + $0x134] sm:%s154]
                %186 = vst [vmem:[%s162 + $0xb0] sm:%s154] %v185
                %v187 = vld [vmem:[%s161 + $0x150] sm:%s154]
                %188 = vst [vmem:[%s162 + $0xc0] sm:%s154] %v187
                %v189 = vld [vmem:[%s161 + $0x16c] sm:%s154]
                %190 = vst [vmem:[%s162 + $0xd0] sm:%s154] %v189
              $region45: #{cnn_forward.2} parent=39 // loop_footer
                %s160 = sadd.s32 1, %s156
              $region46: #{cnn_forward.2} parent=39 // loop_footer_branch
                %155 = sbr.rel target = $region42
              $region47: #{cnn_forward.2} parent=39 // loop_exit
                _
            $region40: #{cnn_forward.2} parent=31 // pred_fallthru
              _
          $region32: #{cnn_forward.2} parent=27 // pred_fallthru
            _
          %839 = vnop
        $region28: #{cnn_forward.2} parent=23 // pred_fallthru
          _
      $region24: #{cnn_forward.2} parent=5 // pred_fallthru
        _
      %p840 = scmp.le.s32.totalorder 1, %s9
      %p841 = scmp.lt.s32.totalorder %s9, 3
      %p842 = pnand %p840, %p841
      %p843 = pneg %p842
      // Predicated region
      $region91: #{cnn_forward.2} parent=5 // pred_check
        _
      $region92: #{cnn_forward.2} parent=5 // pred_check_branch
        %845 = sbr.rel (%p842) target = $region94
      $region93: #{cnn_forward.2} parent=5 // pred_region
        %s846 = ssub.s32 %s9, 1
        %s847 = sand.u32 %s43, 1
        %s848 = sand.u32 %s43, 1
        %s849 = smul.addr %s848, 224
        %s850 = scalar_lea.vmem [#allocation2], %s849
        // Predicated region
        $region95: #{cnn_forward.2} parent=93 // pred_check
          %p851 = pneg %p56
        $region96: #{cnn_forward.2} parent=93 // pred_check_branch
          %853 = sbr.rel (%p851) target = $region98
        $region97: #{cnn_forward.2} parent=93 // pred_region
          _
        $region98: #{cnn_forward.2} parent=93 // pred_fallthru
          _
        %p854 = pneg %p30
        %p855 = pneg %p27
        %s856 = sand.u32 %s43, 1
        %s857 = sand.u32 %s43, 1
        %s858 = smul.addr %s857, 224
        %s859 = scalar_lea.vmem [#allocation2], %s858
        %p860 = pneg %p56
        %p861 = pneg %p53
        %p862 = pneg %p77
        %p863 = pneg %p74
        %p864 = pneg %p103
        %p865 = pneg %p100
        %s866 = sand.u32 %s90, 1
        %s867 = sand.u32 %s90, 1
        %s868 = smul.addr %s867, 16
        %s869 = scalar_lea.vmem [#allocation3], %s868
        %s870 = smul.u32 4, %s14
        %s871 = ssub.s32 7, %s870
        %p872 = scmp.lt.s32.totalorder %s871, 4
        %s873 = scalar_select %p872, %s871, 4
        %s874 = smul.u32 896, %s873
        %s875 = smul.u32 4, %s14
        %s876 = ssub.s32 7, %s875
        %p877 = scmp.lt.s32.totalorder %s876, 4
        %s878 = scalar_select %p877, %s876, 4
        %s879 = smul.u32 64, %s878
        %v881 = vld [vmem:[%s0] sm:$0xf]
        %v882 = vld [vmem:[%s0 + $0x4] sm:$0xf]
        %v883 = vld [vmem:[%s0 + $0x8] sm:$0xf]
        %v884 = vld [vmem:[%s0 + $0xc] sm:$0xf]
        %v885 = vld [vmem:[%s850] sm:$0xff]
        %v886 = vld [vmem:[%s850 + $0x8] sm:$0xff]
        %v887 = vld [vmem:[%s850 + $0x10] sm:$0xff]
        %v888 = vld [vmem:[%s850 + $0x18] sm:$0xff]
        %v889 = vld [vmem:[%s850 + $0x20] sm:$0xff]
        %v890 = vld [vmem:[%s850 + $0x28] sm:$0xff]
        %v891 = vld [vmem:[%s850 + $0x30] sm:$0xff]
        %v892 = vld [vmem:[%s850 + $0x38] sm:$0xff]
        %v893 = vld [vmem:[%s850 + $0x40] sm:$0xff]
        %v894 = vld [vmem:[%s850 + $0x48] sm:$0xff]
        %v895 = vld [vmem:[%s850 + $0x50] sm:$0xff]
        %v896 = vld [vmem:[%s850 + $0x58] sm:$0xff]
        %v897 = vld [vmem:[%s850 + $0x60] sm:$0xff]
        %v898 = vld [vmem:[%s850 + $0x68] sm:$0xff]
        %v899 = vld [vmem:[%s850 + $0x70] sm:$0xff]
        %v900 = vld [vmem:[%s850 + $0x78] sm:$0xff]
        %v901 = vld [vmem:[%s850 + $0x80] sm:$0xff]
        %v902 = vld [vmem:[%s850 + $0x88] sm:$0xff]
        %v903 = vld [vmem:[%s850 + $0x90] sm:$0xff]
        %v904 = vld [vmem:[%s850 + $0x98] sm:$0xff]
        %v905 = vld [vmem:[%s850 + $0xa0] sm:$0xff]
        %v906 = vld [vmem:[%s850 + $0xa8] sm:$0xff]
        %v907 = vld [vmem:[%s850 + $0xb0] sm:$0xff]
        %v908 = vld [vmem:[%s850 + $0xb8] sm:$0xff]
        %v909 = vld [vmem:[%s850 + $0xc0] sm:$0xff]
        %v910 = vld [vmem:[%s850 + $0xc8] sm:$0xff]
        %v911 = vld [vmem:[%s850 + $0xd0] sm:$0x33]
        %v912 = vld [vmem:[%s850 + $0xd8] sm:$0x33]
        %v913 = vld [vmem:[%s2] sm:$0xff]
        %v914 = vld [vmem:[%s2 + $0x8] sm:$0xff]
        %v915 = vld [vmem:[%s2 + $0x10] sm:$0xff]
        %v916 = vld [vmem:[%s2 + $0x18] sm:$0xff]
        %918 = vset.pattern.permute.xlu0 0
        %919 = vperm.xlu0 %918, %v913
        %v920 = vpop.permute.xlu0 %919
        %923 = vset.pattern.permute.xlu0 0
        %924 = vperm.xlu0 %923, %v914
        %v925 = vpop.permute.xlu0 %924
        %928 = vset.pattern.permute.xlu0 0
        %929 = vperm.xlu0 %928, %v915
        %v930 = vpop.permute.xlu0 %929
        %933 = vset.pattern.permute.xlu0 0
        %934 = vperm.xlu0 %933, %v916
        %v935 = vpop.permute.xlu0 %934
        %v941 = vunpack.c.l.b16 %v881
        %v942 = vunpack.c.l.b16 %v882
        %v943 = vunpack.c.l.b16 %v883
        %v944 = vunpack.c.l.b16 %v884
        %v945 = vpack.c.b16 %v942, %v941
        %v946 = vpack.c.b16 %v944, %v943
        %v975 = vunpack.c.l.b16 %v885
        %v976 = vunpack.c.h.b16 %v885
        %v977 = vunpack.c.l.b16 %v886
        %v978 = vunpack.c.h.b16 %v886
        %v979 = vunpack.c.l.b16 %v887
        %v980 = vunpack.c.h.b16 %v887
        %v981 = vunpack.c.l.b16 %v888
        %v982 = vunpack.c.h.b16 %v888
        %v983 = vunpack.c.l.b16 %v889
        %v984 = vunpack.c.h.b16 %v889
        %v985 = vunpack.c.l.b16 %v890
        %v986 = vunpack.c.h.b16 %v890
        %v987 = vunpack.c.l.b16 %v891
        %v988 = vunpack.c.h.b16 %v891
        %v989 = vunpack.c.l.b16 %v892
        %v990 = vunpack.c.h.b16 %v892
        %v991 = vunpack.c.l.b16 %v893
        %v992 = vunpack.c.h.b16 %v893
        %v993 = vunpack.c.l.b16 %v894
        %v994 = vunpack.c.h.b16 %v894
        %v995 = vunpack.c.l.b16 %v895
        %v996 = vunpack.c.h.b16 %v895
        %v997 = vunpack.c.l.b16 %v896
        %v998 = vunpack.c.h.b16 %v896
        %v999 = vunpack.c.l.b16 %v897
        %v1000 = vunpack.c.h.b16 %v897
        %v1001 = vunpack.c.l.b16 %v898
        %v1002 = vunpack.c.h.b16 %v898
        %v1003 = vunpack.c.l.b16 %v899
        %v1004 = vunpack.c.h.b16 %v899
        %v1005 = vunpack.c.l.b16 %v900
        %v1006 = vunpack.c.h.b16 %v900
        %v1007 = vunpack.c.l.b16 %v901
        %v1008 = vunpack.c.h.b16 %v901
        %v1009 = vunpack.c.l.b16 %v902
        %v1010 = vunpack.c.h.b16 %v902
        %v1011 = vunpack.c.l.b16 %v903
        %v1012 = vunpack.c.h.b16 %v903
        %v1013 = vunpack.c.l.b16 %v904
        %v1014 = vunpack.c.h.b16 %v904
        %v1015 = vunpack.c.l.b16 %v905
        %v1016 = vunpack.c.h.b16 %v905
        %v1017 = vunpack.c.l.b16 %v906
        %v1018 = vunpack.c.h.b16 %v906
        %v1019 = vunpack.c.l.b16 %v907
        %v1020 = vunpack.c.h.b16 %v907
        %v1021 = vunpack.c.l.b16 %v908
        %v1022 = vunpack.c.h.b16 %v908
        %v1023 = vunpack.c.l.b16 %v909
        %v1024 = vunpack.c.h.b16 %v909
        %v1025 = vunpack.c.l.b16 %v910
        %v1026 = vunpack.c.h.b16 %v910
        %v1027 = vunpack.c.l.b16 %v911
        %v1028 = vunpack.c.h.b16 %v911
        %v1029 = vunpack.c.l.b16 %v912
        %v1030 = vunpack.c.h.b16 %v912
        %v1031 = vpack.c.b16 %v979, %v975
        %v1032 = vpack.c.b16 %v980, %v976
        %v1033 = vpack.c.b16 %v981, %v977
        %v1034 = vpack.c.b16 %v982, %v978
        %v1035 = vpack.c.b16 %v987, %v983
        %v1036 = vpack.c.b16 %v988, %v984
        %v1037 = vpack.c.b16 %v989, %v985
        %v1038 = vpack.c.b16 %v990, %v986
        %v1039 = vpack.c.b16 %v995, %v991
        %v1040 = vpack.c.b16 %v996, %v992
        %v1041 = vpack.c.b16 %v997, %v993
        %v1042 = vpack.c.b16 %v998, %v994
        %v1043 = vpack.c.b16 %v1003, %v999
        %v1044 = vpack.c.b16 %v1004, %v1000
        %v1045 = vpack.c.b16 %v1005, %v1001
        %v1046 = vpack.c.b16 %v1006, %v1002
        %v1047 = vpack.c.b16 %v1011, %v1007
        %v1048 = vpack.c.b16 %v1012, %v1008
        %v1049 = vpack.c.b16 %v1013, %v1009
        %v1050 = vpack.c.b16 %v1014, %v1010
        %v1051 = vpack.c.b16 %v1019, %v1015
        %v1052 = vpack.c.b16 %v1020, %v1016
        %v1053 = vpack.c.b16 %v1021, %v1017
        %v1054 = vpack.c.b16 %v1022, %v1018
        %v1055 = vpack.c.b16 %v1027, %v1023
        %v1056 = vpack.c.b16 %v1028, %v1024
        %v1057 = vpack.c.b16 %v1029, %v1025
        %v1058 = vpack.c.b16 %v1030, %v1026
        %vm1083 = vcmask 883712
        %v1085 = vsel %vm1083, %v945, 0
        %v1088 = vsel %vm1083, %v946, 0
        %vm1090 = vcmask 1045504
        %v1092 = vsel %vm1090, %v1055, 0
        %v1095 = vsel %vm1090, %v1056, 0
        %v1098 = vsel %vm1090, %v1057, 0
        %v1101 = vsel %vm1090, %v1058, 0
        %1103 = vmatprep.subr.bf16.mxu0 %v1032
        %1104 = vmatpush1.bf16.msra.mxu0 %v1031
        %1105 = vmatprep.subr.bf16.mxu0 %v1036
        %1106 = vmatpush1.bf16.msra.mxu0 %v1035
        %1107 = vmatprep.subr.bf16.mxu0 %v1040
        %1108 = vmatpush1.bf16.msra.mxu0 %v1039
        %1109 = vmatprep.subr.bf16.mxu0 %v1044
        %1110 = vmatpush1.bf16.msra.mxu0 %v1043
        %1111 = vmatprep.subr.bf16.mxu0 %v1048
        %1112 = vmatpush1.bf16.msra.mxu0 %v1047
        %1113 = vmatprep.subr.bf16.mxu0 %v1052
        %1114 = vmatpush1.bf16.msra.mxu0 %v1051
        %1115 = vmatprep.subr.bf16.mxu0 %v1095
        %1116 = vmatpush1.bf16.msra.mxu0 %v1092
        %1117 = vmatprep.subr.bf16.mxu0 0
        %1118 = vmatpush1.bf16.msra.mxu0 0
        %1119 = vmatprep.subr.bf16.mxu0 0
        %1120 = vmatpush1.bf16.msra.mxu0 0
        %1121 = vmatprep.subr.bf16.mxu0 0
        %1122 = vmatpush1.bf16.msra.mxu0 0
        %1123 = vmatprep.subr.bf16.mxu0 0
        %1124 = vmatpush1.bf16.msra.mxu0 0
        %1125 = vmatprep.subr.bf16.mxu0 0
        %1126 = vmatpush1.bf16.msra.mxu0 0
        %1127 = vmatprep.subr.bf16.mxu0 0
        %1128 = vmatpush1.bf16.msra.mxu0 0
        %1129 = vmatprep.subr.bf16.mxu0 0
        %1130 = vmatpush1.bf16.msra.mxu0 0
        %1131 = vmatprep.subr.bf16.mxu0 0
        %1132 = vmatpush1.bf16.msra.mxu0 0
        %1133 = vmatprep.subr.bf16.mxu0 0
        %1134 = vmatpush1.bf16.msra.mxu0 0
        %1135 = vmatprep.mubr.bf16.mxu0 0
        %1136 = vmatmul.mubr.bf16.gmra.mrb[0].mxu0 %v1085
        %v1137 = vpop.f32.mrb[0].mxu0
        %v1138 = vadd.f32 %v920, %v1137
        %v1139 = vpop.f32.mrb[0].mxu0
        %v1140 = vadd.f32 %v920, %v1139
        %v1141 = vpop.f32.mrb[0].mxu0
        %v1142 = vadd.f32 %v925, %v1141
        %v1143 = vpop.f32.mrb[0].mxu0
        %v1144 = vadd.f32 %v925, %v1143
        %1145 = vmatprep.mubr.bf16.mxu0 0
        %1146 = vmatmul.mubr.bf16.gmra.mrb[0].mxu0 %v1088
        %v1147 = vpop.f32.mrb[0].mxu0
        %v1148 = vadd.f32 %v930, %v1147
        %v1149 = vpop.f32.mrb[0].mxu0
        %v1150 = vadd.f32 %v930, %v1149
        %v1151 = vpop.f32.mrb[0].mxu0
        %v1152 = vadd.f32 %v935, %v1151
        %v1153 = vpop.f32.mrb[0].mxu0
        %v1154 = vadd.f32 %v935, %v1153
        %1155 = vdwg.mxu0
        %1156 = vmatprep.subr.bf16.mxu0 %v1034
        %1157 = vmatpush1.bf16.msra.mxu0 %v1033
        %1158 = vmatprep.subr.bf16.mxu0 %v1038
        %1159 = vmatpush1.bf16.msra.mxu0 %v1037
        %1160 = vmatprep.subr.bf16.mxu0 %v1042
        %1161 = vmatpush1.bf16.msra.mxu0 %v1041
        %1162 = vmatprep.subr.bf16.mxu0 %v1046
        %1163 = vmatpush1.bf16.msra.mxu0 %v1045
        %1164 = vmatprep.subr.bf16.mxu0 %v1050
        %1165 = vmatpush1.bf16.msra.mxu0 %v1049
        %1166 = vmatprep.subr.bf16.mxu0 %v1054
        %1167 = vmatpush1.bf16.msra.mxu0 %v1053
        %1168 = vmatprep.subr.bf16.mxu0 %v1101
        %1169 = vmatpush1.bf16.msra.mxu0 %v1098
        %1170 = vmatprep.subr.bf16.mxu0 0
        %1171 = vmatpush1.bf16.msra.mxu0 0
        %1172 = vmatprep.subr.bf16.mxu0 0
        %1173 = vmatpush1.bf16.msra.mxu0 0
        %1174 = vmatprep.subr.bf16.mxu0 0
        %1175 = vmatpush1.bf16.msra.mxu0 0
        %1176 = vmatprep.subr.bf16.mxu0 0
        %1177 = vmatpush1.bf16.msra.mxu0 0
        %1178 = vmatprep.subr.bf16.mxu0 0
        %1179 = vmatpush1.bf16.msra.mxu0 0
        %1180 = vmatprep.subr.bf16.mxu0 0
        %1181 = vmatpush1.bf16.msra.mxu0 0
        %1182 = vmatprep.subr.bf16.mxu0 0
        %1183 = vmatpush1.bf16.msra.mxu0 0
        %1184 = vmatprep.subr.bf16.mxu0 0
        %1185 = vmatpush1.bf16.msra.mxu0 0
        %1186 = vmatprep.subr.bf16.mxu0 0
        %1187 = vmatpush1.bf16.msra.mxu0 0
        %1188 = vmatprep.mubr.bf16.mxu0 0
        %1189 = vmatmul.mubr.bf16.gmra.mrb[0].mxu0 %v1085
        %v1190 = vpop.f32.mrb[0].mxu0
        %v1191 = vadd.f32 %v920, %v1190
        %v1192 = vpop.f32.mrb[0].mxu0
        %v1193 = vadd.f32 %v920, %v1192
        %v1194 = vpop.f32.mrb[0].mxu0
        %v1195 = vadd.f32 %v925, %v1194
        %v1196 = vpop.f32.mrb[0].mxu0
        %v1197 = vadd.f32 %v925, %v1196
        %1198 = vmatprep.mubr.bf16.mxu0 0
        %1199 = vmatmul.mubr.bf16.gmra.mrb[0].mxu0 %v1088
        %v1200 = vpop.f32.mrb[0].mxu0
        %v1201 = vadd.f32 %v930, %v1200
        %v1202 = vpop.f32.mrb[0].mxu0
        %v1203 = vadd.f32 %v930, %v1202
        %v1204 = vpop.f32.mrb[0].mxu0
        %v1205 = vadd.f32 %v935, %v1204
        %v1206 = vpop.f32.mrb[0].mxu0
        %v1207 = vadd.f32 %v935, %v1206
        %1208 = vdwg.mxu0
        %v1209 = vtanh.pop %v1138
        %v1210 = vtanh.pop %v1140
        %v1211 = vtanh.pop %v1191
        %v1212 = vtanh.pop %v1193
        %v1213 = vtanh.pop %v1142
        %v1214 = vtanh.pop %v1144
        %v1215 = vtanh.pop %v1195
        %v1216 = vtanh.pop %v1197
        %v1217 = vtanh.pop %v1148
        %v1218 = vtanh.pop %v1150
        %v1219 = vtanh.pop %v1201
        %v1220 = vtanh.pop %v1203
        %v1221 = vtanh.pop %v1152
        %v1222 = vtanh.pop %v1154
        %v1223 = vtanh.pop %v1205
        %v1224 = vtanh.pop %v1207
        %v1225 = vadd.f32 %v1209, %v1213
        %v1226 = vadd.f32 %v1210, %v1214
        %v1227 = vadd.f32 %v1211, %v1215
        %v1228 = vadd.f32 %v1212, %v1216
        %v1229 = vadd.f32 %v1225, %v1217
        %v1230 = vadd.f32 %v1226, %v1218
        %v1231 = vadd.f32 %v1227, %v1219
        %v1232 = vadd.f32 %v1228, %v1220
        %v1233 = vadd.f32 %v1229, %v1221
        %v1234 = vadd.f32 %v1230, %v1222
        %v1235 = vadd.f32 %v1231, %v1223
        %v1236 = vadd.f32 %v1232, %v1224
        %v1237 = vmul.f32 %v1233, 0.25
        %v1238 = vmul.f32 %v1234, 0.25
        %v1239 = vmul.f32 %v1235, 0.25
        %v1240 = vmul.f32 %v1236, 0.25
        %v1241 = vpack.c.bf16 %v1237, %v1237
        %v1242 = vpack.c.bf16 %v1238, %v1238
        %v1243 = vpack.c.bf16 %v1239, %v1239
        %v1244 = vpack.c.bf16 %v1240, %v1240
        %v1249 = vunpack.c.l.b16 %v1241
        %v1250 = vunpack.c.l.b16 %v1242
        %v1251 = vunpack.c.l.b16 %v1243
        %v1252 = vunpack.c.l.b16 %v1244
        %v1253 = vpack.c.b16 %v1250, %v1249
        %v1254 = vpack.c.b16 %v1252, %v1251
        %1257 = vst [vmem:[%s869] sm:$0xff] %v1253
        %1258 = vst [vmem:[%s869 + $0x8] sm:$0xff] %v1254
        %s1259 = sand.u32 %s90, 1
        %s1260 = sand.u32 %s90, 1
        %s1261 = smul.addr %s1260, 16
        %s1262 = scalar_lea.vmem [#allocation3], %s1261
        // Predicated region
        $region99: #{cnn_forward.2} parent=93 // pred_check
          %p1263 = pneg %p100
        $region100: #{cnn_forward.2} parent=93 // pred_check_branch
          %1265 = sbr.rel (%p1263) target = $region102
        $region101: #{cnn_forward.2} parent=93 // pred_region
          %s1266 = smul.u32 4, %s14
          %s1267 = ssub.s32 7, %s1266
          %p1268 = scmp.lt.s32.totalorder %s1267, 4
          %s1269 = scalar_select %p1268, %s1267, 4
          %s1270 = smul.u32 64, %s1269
          %p1271 = scmp.ne.s32.totalorder 0, %s1270
          %s1272 = smul.addr %s1266, 4
          %s1273 = scalar_lea.vmem %s3, %s1272
          %s1274 = smul.u32 %s1269, 4
          // Predicated region
          $region103: #{cnn_forward.2} parent=101 // pred_check
            %p1275 = pneg %p1271
          $region104: #{cnn_forward.2} parent=101 // pred_check_branch
            %1277 = sbr.rel (%p1275) target = $region106
          $region105: #{cnn_forward.2} parent=101 // pred_region
            %p1278 = scmp.lt.u32.totalorder %s1274, 8
            %p1279 = pneg %p1278
            // Predicated region
            $region107: #{cnn_forward.2} parent=105 // pred_check
              _
            $region108: #{cnn_forward.2} parent=105 // pred_check_branch
              %1281 = sbr.rel (%p1278) target = $region110
            $region109: #{cnn_forward.2} parent=105 // pred_region
              %s1296 = sand.u32 %s1274, 7
              %p1297 = scmp.eq.s32.totalorder %s1296, 0
              // Predicated region
              $region122: #{cnn_forward.2} parent=109 // pred_check
                %p1298 = pneg %p1297
              $region123: #{cnn_forward.2} parent=109 // pred_check_branch
                %1300 = sbr.rel (%p1298) target = $region125
              $region124: #{cnn_forward.2} parent=109 // pred_region
                %s1301 = sshrl.u32 %s1274, 3
                %s1302 = sshrl.u32 %s1301, 6
                // While loop
                $region126: #{cnn_forward.2} parent=124 // loop_pre_header
                  _
                $region127: #{cnn_forward.2} parent=124 // loop_header
                  %s1306 = sphi 0, %s1308
                  %p1307 = scmp.ge.s32.totalorder %s1306, %s1302
                  %s1311 = sphi 0, %s1444
                  %s1312 = sphi %s1262, %s1447
                  %s1313 = sphi %s1273, %s1448
                $region128: #{cnn_forward.2} parent=124 // loop_header_branch
                  %1310 = sbr.rel (%p1307) target = $region132
                $region129: #{cnn_forward.2} parent=124 // loop_body
                  %v1314 = vld [vmem:[%s1312] sm:$0xff]
                  %1315 = vst [vmem:[%s1313] sm:$0xff] %v1314
                  %v1316 = vld [vmem:[%s1312 + $0x8] sm:$0xff]
                  %1317 = vst [vmem:[%s1313 + $0x8] sm:$0xff] %v1316
                  %v1318 = vld [vmem:[%s1312 + $0x10] sm:$0xff]
                  %1319 = vst [vmem:[%s1313 + $0x10] sm:$0xff] %v1318
                  %v1320 = vld [vmem:[%s1312 + $0x18] sm:$0xff]
                  %1321 = vst [vmem:[%s1313 + $0x18] sm:$0xff] %v1320
                  %v1322 = vld [vmem:[%s1312 + $0x20] sm:$0xff]
                  %1323 = vst [vmem:[%s1313 + $0x20] sm:$0xff] %v1322
                  %v1324 = vld [vmem:[%s1312 + $0x28] sm:$0xff]
                  %1325 = vst [vmem:[%s1313 + $0x28] sm:$0xff] %v1324
                  %v1326 = vld [vmem:[%s1312 + $0x30] sm:$0xff]
                  %1327 = vst [vmem:[%s1313 + $0x30] sm:$0xff] %v1326
                  %v1328 = vld [vmem:[%s1312 + $0x38] sm:$0xff]
                  %1329 = vst [vmem:[%s1313 + $0x38] sm:$0xff] %v1328
                  %v1330 = vld [vmem:[%s1312 + $0x40] sm:$0xff]
                  %1331 = vst [vmem:[%s1313 + $0x40] sm:$0xff] %v1330
                  %v1332 = vld [vmem:[%s1312 + $0x48] sm:$0xff]
                  %1333 = vst [vmem:[%s1313 + $0x48] sm:$0xff] %v1332
                  %v1334 = vld [vmem:[%s1312 + $0x50] sm:$0xff]
                  %1335 = vst [vmem:[%s1313 + $0x50] sm:$0xff] %v1334
                  %v1336 = vld [vmem:[%s1312 + $0x58] sm:$0xff]
                  %1337 = vst [vmem:[%s1313 + $0x58] sm:$0xff] %v1336
                  %v1338 = vld [vmem:[%s1312 + $0x60] sm:$0xff]
                  %1339 = vst [vmem:[%s1313 + $0x60] sm:$0xff] %v1338
                  %v1340 = vld [vmem:[%s1312 + $0x68] sm:$0xff]
                  %1341 = vst [vmem:[%s1313 + $0x68] sm:$0xff] %v1340
                  %v1342 = vld [vmem:[%s1312 + $0x70] sm:$0xff]
                  %1343 = vst [vmem:[%s1313 + $0x70] sm:$0xff] %v1342
                  %v1344 = vld [vmem:[%s1312 + $0x78] sm:$0xff]
                  %1345 = vst [vmem:[%s1313 + $0x78] sm:$0xff] %v1344
                  %v1346 = vld [vmem:[%s1312 + $0x80] sm:$0xff]
                  %1347 = vst [vmem:[%s1313 + $0x80] sm:$0xff] %v1346
                  %v1348 = vld [vmem:[%s1312 + $0x88] sm:$0xff]
                  %1349 = vst [vmem:[%s1313 + $0x88] sm:$0xff] %v1348
                  %v1350 = vld [vmem:[%s1312 + $0x90] sm:$0xff]
                  %1351 = vst [vmem:[%s1313 + $0x90] sm:$0xff] %v1350
                  %v1352 = vld [vmem:[%s1312 + $0x98] sm:$0xff]
                  %1353 = vst [vmem:[%s1313 + $0x98] sm:$0xff] %v1352
                  %v1354 = vld [vmem:[%s1312 + $0xa0] sm:$0xff]
                  %1355 = vst [vmem:[%s1313 + $0xa0] sm:$0xff] %v1354
                  %v1356 = vld [vmem:[%s1312 + $0xa8] sm:$0xff]
                  %1357 = vst [vmem:[%s1313 + $0xa8] sm:$0xff] %v1356
                  %v1358 = vld [vmem:[%s1312 + $0xb0] sm:$0xff]
                  %1359 = vst [vmem:[%s1313 + $0xb0] sm:$0xff] %v1358
                  %v1360 = vld [vmem:[%s1312 + $0xb8] sm:$0xff]
                  %1361 = vst [vmem:[%s1313 + $0xb8] sm:$0xff] %v1360
                  %v1362 = vld [vmem:[%s1312 + $0xc0] sm:$0xff]
                  %1363 = vst [vmem:[%s1313 + $0xc0] sm:$0xff] %v1362
                  %v1364 = vld [vmem:[%s1312 + $0xc8] sm:$0xff]
                  %1365 = vst [vmem:[%s1313 + $0xc8] sm:$0xff] %v1364
                  %v1366 = vld [vmem:[%s1312 + $0xd0] sm:$0xff]
                  %1367 = vst [vmem:[%s1313 + $0xd0] sm:$0xff] %v1366
                  %v1368 = vld [vmem:[%s1312 + $0xd8] sm:$0xff]
                  %1369 = vst [vmem:[%s1313 + $0xd8] sm:$0xff] %v1368
                  %v1370 = vld [vmem:[%s1312 + $0xe0] sm:$0xff]
                  %1371 = vst [vmem:[%s1313 + $0xe0] sm:$0xff] %v1370
                  %v1372 = vld [vmem:[%s1312 + $0xe8] sm:$0xff]
                  %1373 = vst [vmem:[%s1313 + $0xe8] sm:$0xff] %v1372
                  %v1374 = vld [vmem:[%s1312 + $0xf0] sm:$0xff]
                  %1375 = vst [vmem:[%s1313 + $0xf0] sm:$0xff] %v1374
                  %v1376 = vld [vmem:[%s1312 + $0xf8] sm:$0xff]
                  %1377 = vst [vmem:[%s1313 + $0xf8] sm:$0xff] %v1376
                  %v1378 = vld [vmem:[%s1312 + $0x100] sm:$0xff]
                  %1379 = vst [vmem:[%s1313 + $0x100] sm:$0xff] %v1378
                  %v1380 = vld [vmem:[%s1312 + $0x108] sm:$0xff]
                  %1381 = vst [vmem:[%s1313 + $0x108] sm:$0xff] %v1380
                  %v1382 = vld [vmem:[%s1312 + $0x110] sm:$0xff]
                  %1383 = vst [vmem:[%s1313 + $0x110] sm:$0xff] %v1382
                  %v1384 = vld [vmem:[%s1312 + $0x118] sm:$0xff]
                  %1385 = vst [vmem:[%s1313 + $0x118] sm:$0xff] %v1384
                  %v1386 = vld [vmem:[%s1312 + $0x120] sm:$0xff]
                  %1387 = vst [vmem:[%s1313 + $0x120] sm:$0xff] %v1386
                  %v1388 = vld [vmem:[%s1312 + $0x128] sm:$0xff]
                  %1389 = vst [vmem:[%s1313 + $0x128] sm:$0xff] %v1388
                  %v1390 = vld [vmem:[%s1312 + $0x130] sm:$0xff]
                  %1391 = vst [vmem:[%s1313 + $0x130] sm:$0xff] %v1390
                  %v1392 = vld [vmem:[%s1312 + $0x138] sm:$0xff]
                  %1393 = vst [vmem:[%s1313 + $0x138] sm:$0xff] %v1392
                  %v1394 = vld [vmem:[%s1312 + $0x140] sm:$0xff]
                  %1395 = vst [vmem:[%s1313 + $0x140] sm:$0xff] %v1394
                  %v1396 = vld [vmem:[%s1312 + $0x148] sm:$0xff]
                  %1397 = vst [vmem:[%s1313 + $0x148] sm:$0xff] %v1396
                  %v1398 = vld [vmem:[%s1312 + $0x150] sm:$0xff]
                  %1399 = vst [vmem:[%s1313 + $0x150] sm:$0xff] %v1398
                  %v1400 = vld [vmem:[%s1312 + $0x158] sm:$0xff]
                  %1401 = vst [vmem:[%s1313 + $0x158] sm:$0xff] %v1400
                  %v1402 = vld [vmem:[%s1312 + $0x160] sm:$0xff]
                  %1403 = vst [vmem:[%s1313 + $0x160] sm:$0xff] %v1402
                  %v1404 = vld [vmem:[%s1312 + $0x168] sm:$0xff]
                  %1405 = vst [vmem:[%s1313 + $0x168] sm:$0xff] %v1404
                  %v1406 = vld [vmem:[%s1312 + $0x170] sm:$0xff]
                  %1407 = vst [vmem:[%s1313 + $0x170] sm:$0xff] %v1406
                  %v1408 = vld [vmem:[%s1312 + $0x178] sm:$0xff]
                  %1409 = vst [vmem:[%s1313 + $0x178] sm:$0xff] %v1408
                  %v1410 = vld [vmem:[%s1312 + $0x180] sm:$0xff]
                  %1411 = vst [vmem:[%s1313 + $0x180] sm:$0xff] %v1410
                  %v1412 = vld [vmem:[%s1312 + $0x188] sm:$0xff]
                  %1413 = vst [vmem:[%s1313 + $0x188] sm:$0xff] %v1412
                  %v1414 = vld [vmem:[%s1312 + $0x190] sm:$0xff]
                  %1415 = vst [vmem:[%s1313 + $0x190] sm:$0xff] %v1414
                  %v1416 = vld [vmem:[%s1312 + $0x198] sm:$0xff]
                  %1417 = vst [vmem:[%s1313 + $0x198] sm:$0xff] %v1416
                  %v1418 = vld [vmem:[%s1312 + $0x1a0] sm:$0xff]
                  %1419 = vst [vmem:[%s1313 + $0x1a0] sm:$0xff] %v1418
                  %v1420 = vld [vmem:[%s1312 + $0x1a8] sm:$0xff]
                  %1421 = vst [vmem:[%s1313 + $0x1a8] sm:$0xff] %v1420
                  %v1422 = vld [vmem:[%s1312 + $0x1b0] sm:$0xff]
                  %1423 = vst [vmem:[%s1313 + $0x1b0] sm:$0xff] %v1422
                  %v1424 = vld [vmem:[%s1312 + $0x1b8] sm:$0xff]
                  %1425 = vst [vmem:[%s1313 + $0x1b8] sm:$0xff] %v1424
                  %v1426 = vld [vmem:[%s1312 + $0x1c0] sm:$0xff]
                  %1427 = vst [vmem:[%s1313 + $0x1c0] sm:$0xff] %v1426
                  %v1428 = vld [vmem:[%s1312 + $0x1c8] sm:$0xff]
                  %1429 = vst [vmem:[%s1313 + $0x1c8] sm:$0xff] %v1428
                  %v1430 = vld [vmem:[%s1312 + $0x1d0] sm:$0xff]
                  %1431 = vst [vmem:[%s1313 + $0x1d0] sm:$0xff] %v1430
                  %v1432 = vld [vmem:[%s1312 + $0x1d8] sm:$0xff]
                  %1433 = vst [vmem:[%s1313 + $0x1d8] sm:$0xff] %v1432
                  %v1434 = vld [vmem:[%s1312 + $0x1e0] sm:$0xff]
                  %1435 = vst [vmem:[%s1313 + $0x1e0] sm:$0xff] %v1434
                  %v1436 = vld [vmem:[%s1312 + $0x1e8] sm:$0xff]
                  %1437 = vst [vmem:[%s1313 + $0x1e8] sm:$0xff] %v1436
                  %v1438 = vld [vmem:[%s1312 + $0x1f0] sm:$0xff]
                  %1439 = vst [vmem:[%s1313 + $0x1f0] sm:$0xff] %v1438
                  %v1440 = vld [vmem:[%s1312 + $0x1f8] sm:$0xff]
                  %1441 = vst [vmem:[%s1313 + $0x1f8] sm:$0xff] %v1440
                  %s1442 = sadd.s32 1, %s1311
                  %p1443 = scmp.ge.s32.totalorder %s1442, %s1302
                  %s1444 = scalar_select %p1443, 0, %s1442
                  %s1445 = smul.u32 %s1444, 512
                  %s1446 = smul.u32 %s1444, 512
                  %s1447 = scalar_lea.vmem %s1262, %s1445 [#allocation3]
                  %s1448 = scalar_lea.vmem %s1273, %s1446
                $region130: #{cnn_forward.2} parent=124 // loop_footer
                  %s1308 = sadd.s32 %s1306, 1
                $region131: #{cnn_forward.2} parent=124 // loop_footer_branch
                  %1305 = sbr.rel target = $region127
                $region132: #{cnn_forward.2} parent=124 // loop_exit
                  _
                %s1449 = sshrl.u32 %s1301, 6
                %s1450 = sand.u32 %s1301, 63
                %s1451 = smul.u32 %s1449, 64
                %s1452 = smul.u32 128, %s1451
                %s1453 = sshra.s32 %s1452, 4
                %s1454 = scalar_lea.vmem %s1262, %s1453 [#allocation3]
                %s1455 = smul.u32 128, %s1451
                %s1456 = sshra.s32 %s1455, 4
                %s1457 = scalar_lea.vmem %s1273, %s1456
                // While loop
                $region133: #{cnn_forward.2} parent=124 // loop_pre_header
                  _
                $region134: #{cnn_forward.2} parent=124 // loop_header
                  %s1461 = sphi 0, %s1463
                  %p1462 = scmp.ge.s32.totalorder %s1461, %s1450
                  %s1466 = sphi 0, %s1473
                  %s1467 = sphi %s1454, %s1476
                  %s1468 = sphi %s1457, %s1477
                $region135: #{cnn_forward.2} parent=124 // loop_header_branch
                  %1465 = sbr.rel (%p1462) target = $region139
                $region136: #{cnn_forward.2} parent=124 // loop_body
                  %v1469 = vld [vmem:[%s1467] sm:$0xff]
                  %1470 = vst [vmem:[%s1468] sm:$0xff] %v1469
                  %s1471 = sadd.s32 1, %s1466
                  %p1472 = scmp.ge.s32.totalorder %s1471, %s1450
                  %s1473 = scalar_select %p1472, 0, %s1471
                  %s1474 = smul.u32 %s1473, 8
                  %s1475 = smul.u32 %s1473, 8
                  %s1476 = scalar_lea.vmem %s1454, %s1474 [#allocation3]
                  %s1477 = scalar_lea.vmem %s1457, %s1475
                $region137: #{cnn_forward.2} parent=124 // loop_footer
                  %s1463 = sadd.s32 %s1461, 1
                $region138: #{cnn_forward.2} parent=124 // loop_footer_branch
                  %1460 = sbr.rel target = $region134
                $region139: #{cnn_forward.2} parent=124 // loop_exit
                  _
              $region125: #{cnn_forward.2} parent=109 // pred_fallthru
                _
              %p1478 = pneg %p1297
              // Predicated region
              $region140: #{cnn_forward.2} parent=109 // pred_check
                _
              $region141: #{cnn_forward.2} parent=109 // pred_check_branch
                %1480 = sbr.rel (%p1297) target = $region143
              $region142: #{cnn_forward.2} parent=109 // pred_region
                %s1481 = sand.u32 %s1274, 7
                %s1482 = ssub.s32 %s1274, %s1481
                %s1483 = scalar_lea.vmem %s1262, %s1482 [#allocation3]
                %s1484 = ssub.s32 %s1274, %s1481
                %s1485 = scalar_lea.vmem %s1273, %s1484
                %s1486 = sshrl.u32 %s1274, 3
                %s1487 = sshrl.u32 %s1486, 6
                // While loop
                $region144: #{cnn_forward.2} parent=142 // loop_pre_header
                  _
                $region145: #{cnn_forward.2} parent=142 // loop_header
                  %s1491 = sphi 0, %s1493
                  %p1492 = scmp.ge.s32.totalorder %s1491, %s1487
                  %s1496 = sphi 0, %s1629
                  %s1497 = sphi %s1262, %s1632
                  %s1498 = sphi %s1273, %s1633
                $region146: #{cnn_forward.2} parent=142 // loop_header_branch
                  %1495 = sbr.rel (%p1492) target = $region150
                $region147: #{cnn_forward.2} parent=142 // loop_body
                  %v1499 = vld [vmem:[%s1497] sm:$0xff]
                  %1500 = vst [vmem:[%s1498] sm:$0xff] %v1499
                  %v1501 = vld [vmem:[%s1497 + $0x8] sm:$0xff]
                  %1502 = vst [vmem:[%s1498 + $0x8] sm:$0xff] %v1501
                  %v1503 = vld [vmem:[%s1497 + $0x10] sm:$0xff]
                  %1504 = vst [vmem:[%s1498 + $0x10] sm:$0xff] %v1503
                  %v1505 = vld [vmem:[%s1497 + $0x18] sm:$0xff]
                  %1506 = vst [vmem:[%s1498 + $0x18] sm:$0xff] %v1505
                  %v1507 = vld [vmem:[%s1497 + $0x20] sm:$0xff]
                  %1508 = vst [vmem:[%s1498 + $0x20] sm:$0xff] %v1507
                  %v1509 = vld [vmem:[%s1497 + $0x28] sm:$0xff]
                  %1510 = vst [vmem:[%s1498 + $0x28] sm:$0xff] %v1509
                  %v1511 = vld [vmem:[%s1497 + $0x30] sm:$0xff]
                  %1512 = vst [vmem:[%s1498 + $0x30] sm:$0xff] %v1511
                  %v1513 = vld [vmem:[%s1497 + $0x38] sm:$0xff]
                  %1514 = vst [vmem:[%s1498 + $0x38] sm:$0xff] %v1513
                  %v1515 = vld [vmem:[%s1497 + $0x40] sm:$0xff]
                  %1516 = vst [vmem:[%s1498 + $0x40] sm:$0xff] %v1515
                  %v1517 = vld [vmem:[%s1497 + $0x48] sm:$0xff]
                  %1518 = vst [vmem:[%s1498 + $0x48] sm:$0xff] %v1517
                  %v1519 = vld [vmem:[%s1497 + $0x50] sm:$0xff]
                  %1520 = vst [vmem:[%s1498 + $0x50] sm:$0xff] %v1519
                  %v1521 = vld [vmem:[%s1497 + $0x58] sm:$0xff]
                  %1522 = vst [vmem:[%s1498 + $0x58] sm:$0xff] %v1521
                  %v1523 = vld [vmem:[%s1497 + $0x60] sm:$0xff]
                  %1524 = vst [vmem:[%s1498 + $0x60] sm:$0xff] %v1523
                  %v1525 = vld [vmem:[%s1497 + $0x68] sm:$0xff]
                  %1526 = vst [vmem:[%s1498 + $0x68] sm:$0xff] %v1525
                  %v1527 = vld [vmem:[%s1497 + $0x70] sm:$0xff]
                  %1528 = vst [vmem:[%s1498 + $0x70] sm:$0xff] %v1527
                  %v1529 = vld [vmem:[%s1497 + $0x78] sm:$0xff]
                  %1530 = vst [vmem:[%s1498 + $0x78] sm:$0xff] %v1529
                  %v1531 = vld [vmem:[%s1497 + $0x80] sm:$0xff]
                  %1532 = vst [vmem:[%s1498 + $0x80] sm:$0xff] %v1531
                  %v1533 = vld [vmem:[%s1497 + $0x88] sm:$0xff]
                  %1534 = vst [vmem:[%s1498 + $0x88] sm:$0xff] %v1533
                  %v1535 = vld [vmem:[%s1497 + $0x90] sm:$0xff]
                  %1536 = vst [vmem:[%s1498 + $0x90] sm:$0xff] %v1535
                  %v1537 = vld [vmem:[%s1497 + $0x98] sm:$0xff]
                  %1538 = vst [vmem:[%s1498 + $0x98] sm:$0xff] %v1537
                  %v1539 = vld [vmem:[%s1497 + $0xa0] sm:$0xff]
                  %1540 = vst [vmem:[%s1498 + $0xa0] sm:$0xff] %v1539
                  %v1541 = vld [vmem:[%s1497 + $0xa8] sm:$0xff]
                  %1542 = vst [vmem:[%s1498 + $0xa8] sm:$0xff] %v1541
                  %v1543 = vld [vmem:[%s1497 + $0xb0] sm:$0xff]
                  %1544 = vst [vmem:[%s1498 + $0xb0] sm:$0xff] %v1543
                  %v1545 = vld [vmem:[%s1497 + $0xb8] sm:$0xff]
                  %1546 = vst [vmem:[%s1498 + $0xb8] sm:$0xff] %v1545
                  %v1547 = vld [vmem:[%s1497 + $0xc0] sm:$0xff]
                  %1548 = vst [vmem:[%s1498 + $0xc0] sm:$0xff] %v1547
                  %v1549 = vld [vmem:[%s1497 + $0xc8] sm:$0xff]
                  %1550 = vst [vmem:[%s1498 + $0xc8] sm:$0xff] %v1549
                  %v1551 = vld [vmem:[%s1497 + $0xd0] sm:$0xff]
                  %1552 = vst [vmem:[%s1498 + $0xd0] sm:$0xff] %v1551
                  %v1553 = vld [vmem:[%s1497 + $0xd8] sm:$0xff]
                  %1554 = vst [vmem:[%s1498 + $0xd8] sm:$0xff] %v1553
                  %v1555 = vld [vmem:[%s1497 + $0xe0] sm:$0xff]
                  %1556 = vst [vmem:[%s1498 + $0xe0] sm:$0xff] %v1555
                  %v1557 = vld [vmem:[%s1497 + $0xe8] sm:$0xff]
                  %1558 = vst [vmem:[%s1498 + $0xe8] sm:$0xff] %v1557
                  %v1559 = vld [vmem:[%s1497 + $0xf0] sm:$0xff]
                  %1560 = vst [vmem:[%s1498 + $0xf0] sm:$0xff] %v1559
                  %v1561 = vld [vmem:[%s1497 + $0xf8] sm:$0xff]
                  %1562 = vst [vmem:[%s1498 + $0xf8] sm:$0xff] %v1561
                  %v1563 = vld [vmem:[%s1497 + $0x100] sm:$0xff]
                  %1564 = vst [vmem:[%s1498 + $0x100] sm:$0xff] %v1563
                  %v1565 = vld [vmem:[%s1497 + $0x108] sm:$0xff]
                  %1566 = vst [vmem:[%s1498 + $0x108] sm:$0xff] %v1565
                  %v1567 = vld [vmem:[%s1497 + $0x110] sm:$0xff]
                  %1568 = vst [vmem:[%s1498 + $0x110] sm:$0xff] %v1567
                  %v1569 = vld [vmem:[%s1497 + $0x118] sm:$0xff]
                  %1570 = vst [vmem:[%s1498 + $0x118] sm:$0xff] %v1569
                  %v1571 = vld [vmem:[%s1497 + $0x120] sm:$0xff]
                  %1572 = vst [vmem:[%s1498 + $0x120] sm:$0xff] %v1571
                  %v1573 = vld [vmem:[%s1497 + $0x128] sm:$0xff]
                  %1574 = vst [vmem:[%s1498 + $0x128] sm:$0xff] %v1573
                  %v1575 = vld [vmem:[%s1497 + $0x130] sm:$0xff]
                  %1576 = vst [vmem:[%s1498 + $0x130] sm:$0xff] %v1575
                  %v1577 = vld [vmem:[%s1497 + $0x138] sm:$0xff]
                  %1578 = vst [vmem:[%s1498 + $0x138] sm:$0xff] %v1577
                  %v1579 = vld [vmem:[%s1497 + $0x140] sm:$0xff]
                  %1580 = vst [vmem:[%s1498 + $0x140] sm:$0xff] %v1579
                  %v1581 = vld [vmem:[%s1497 + $0x148] sm:$0xff]
                  %1582 = vst [vmem:[%s1498 + $0x148] sm:$0xff] %v1581
                  %v1583 = vld [vmem:[%s1497 + $0x150] sm:$0xff]
                  %1584 = vst [vmem:[%s1498 + $0x150] sm:$0xff] %v1583
                  %v1585 = vld [vmem:[%s1497 + $0x158] sm:$0xff]
                  %1586 = vst [vmem:[%s1498 + $0x158] sm:$0xff] %v1585
                  %v1587 = vld [vmem:[%s1497 + $0x160] sm:$0xff]
                  %1588 = vst [vmem:[%s1498 + $0x160] sm:$0xff] %v1587
                  %v1589 = vld [vmem:[%s1497 + $0x168] sm:$0xff]
                  %1590 = vst [vmem:[%s1498 + $0x168] sm:$0xff] %v1589
                  %v1591 = vld [vmem:[%s1497 + $0x170] sm:$0xff]
                  %1592 = vst [vmem:[%s1498 + $0x170] sm:$0xff] %v1591
                  %v1593 = vld [vmem:[%s1497 + $0x178] sm:$0xff]
                  %1594 = vst [vmem:[%s1498 + $0x178] sm:$0xff] %v1593
                  %v1595 = vld [vmem:[%s1497 + $0x180] sm:$0xff]
                  %1596 = vst [vmem:[%s1498 + $0x180] sm:$0xff] %v1595
                  %v1597 = vld [vmem:[%s1497 + $0x188] sm:$0xff]
                  %1598 = vst [vmem:[%s1498 + $0x188] sm:$0xff] %v1597
                  %v1599 = vld [vmem:[%s1497 + $0x190] sm:$0xff]
                  %1600 = vst [vmem:[%s1498 + $0x190] sm:$0xff] %v1599
                  %v1601 = vld [vmem:[%s1497 + $0x198] sm:$0xff]
                  %1602 = vst [vmem:[%s1498 + $0x198] sm:$0xff] %v1601
                  %v1603 = vld [vmem:[%s1497 + $0x1a0] sm:$0xff]
                  %1604 = vst [vmem:[%s1498 + $0x1a0] sm:$0xff] %v1603
                  %v1605 = vld [vmem:[%s1497 + $0x1a8] sm:$0xff]
                  %1606 = vst [vmem:[%s1498 + $0x1a8] sm:$0xff] %v1605
                  %v1607 = vld [vmem:[%s1497 + $0x1b0] sm:$0xff]
                  %1608 = vst [vmem:[%s1498 + $0x1b0] sm:$0xff] %v1607
                  %v1609 = vld [vmem:[%s1497 + $0x1b8] sm:$0xff]
                  %1610 = vst [vmem:[%s1498 + $0x1b8] sm:$0xff] %v1609
                  %v1611 = vld [vmem:[%s1497 + $0x1c0] sm:$0xff]
                  %1612 = vst [vmem:[%s1498 + $0x1c0] sm:$0xff] %v1611
                  %v1613 = vld [vmem:[%s1497 + $0x1c8] sm:$0xff]
                  %1614 = vst [vmem:[%s1498 + $0x1c8] sm:$0xff] %v1613
                  %v1615 = vld [vmem:[%s1497 + $0x1d0] sm:$0xff]
                  %1616 = vst [vmem:[%s1498 + $0x1d0] sm:$0xff] %v1615
                  %v1617 = vld [vmem:[%s1497 + $0x1d8] sm:$0xff]
                  %1618 = vst [vmem:[%s1498 + $0x1d8] sm:$0xff] %v1617
                  %v1619 = vld [vmem:[%s1497 + $0x1e0] sm:$0xff]
                  %1620 = vst [vmem:[%s1498 + $0x1e0] sm:$0xff] %v1619
                  %v1621 = vld [vmem:[%s1497 + $0x1e8] sm:$0xff]
                  %1622 = vst [vmem:[%s1498 + $0x1e8] sm:$0xff] %v1621
                  %v1623 = vld [vmem:[%s1497 + $0x1f0] sm:$0xff]
                  %1624 = vst [vmem:[%s1498 + $0x1f0] sm:$0xff] %v1623
                  %v1625 = vld [vmem:[%s1497 + $0x1f8] sm:$0xff]
                  %1626 = vst [vmem:[%s1498 + $0x1f8] sm:$0xff] %v1625
                  %s1627 = sadd.s32 1, %s1496
                  %p1628 = scmp.ge.s32.totalorder %s1627, %s1487
                  %s1629 = scalar_select %p1628, 0, %s1627
                  %s1630 = smul.u32 %s1629, 512
                  %s1631 = smul.u32 %s1629, 512
                  %s1632 = scalar_lea.vmem %s1262, %s1630 [#allocation3]
                  %s1633 = scalar_lea.vmem %s1273, %s1631
                $region148: #{cnn_forward.2} parent=142 // loop_footer
                  %s1493 = sadd.s32 %s1491, 1
                $region149: #{cnn_forward.2} parent=142 // loop_footer_branch
                  %1490 = sbr.rel target = $region145
                $region150: #{cnn_forward.2} parent=142 // loop_exit
                  _
                %s1634 = sshrl.u32 %s1486, 6
                %s1635 = sand.u32 %s1486, 63
                %s1636 = smul.u32 %s1634, 64
                %s1637 = smul.u32 128, %s1636
                %s1638 = sshra.s32 %s1637, 4
                %s1639 = scalar_lea.vmem %s1262, %s1638 [#allocation3]
                %s1640 = smul.u32 128, %s1636
                %s1641 = sshra.s32 %s1640, 4
                %s1642 = scalar_lea.vmem %s1273, %s1641
                // While loop
                $region151: #{cnn_forward.2} parent=142 // loop_pre_header
                  _
                $region152: #{cnn_forward.2} parent=142 // loop_header
                  %s1646 = sphi 0, %s1648
                  %p1647 = scmp.ge.s32.totalorder %s1646, %s1635
                  %s1651 = sphi 0, %s1658
                  %s1652 = sphi %s1639, %s1661
                  %s1653 = sphi %s1642, %s1662
                $region153: #{cnn_forward.2} parent=142 // loop_header_branch
                  %1650 = sbr.rel (%p1647) target = $region157
                $region154: #{cnn_forward.2} parent=142 // loop_body
                  %v1654 = vld [vmem:[%s1652] sm:$0xff]
                  %1655 = vst [vmem:[%s1653] sm:$0xff] %v1654
                  %s1656 = sadd.s32 1, %s1651
                  %p1657 = scmp.ge.s32.totalorder %s1656, %s1635
                  %s1658 = scalar_select %p1657, 0, %s1656
                  %s1659 = smul.u32 %s1658, 8
                  %s1660 = smul.u32 %s1658, 8
                  %s1661 = scalar_lea.vmem %s1639, %s1659 [#allocation3]
                  %s1662 = scalar_lea.vmem %s1642, %s1660
                $region155: #{cnn_forward.2} parent=142 // loop_footer
                  %s1648 = sadd.s32 %s1646, 1
                $region156: #{cnn_forward.2} parent=142 // loop_footer_branch
                  %1645 = sbr.rel target = $region152
                $region157: #{cnn_forward.2} parent=142 // loop_exit
                  _
                %s1663 = sshllo.u32 0, %s1481
                loop: start=0, step=1, limit=1
                $region158: #{cnn_forward.2} parent=142 // loop_pre_header
                  _
                $region159: #{cnn_forward.2} parent=142 // loop_header
                  %s1665 = sphi 0, %s1669
                  %p1666 = scmp.ge.s32.totalorder %s1665, 1
                  %s1670 = sphi %s1483, %s1483
                  %s1671 = sphi %s1485, %s1485
                $region160: #{cnn_forward.2} parent=142 // loop_header_branch
                  %1668 = sbr.rel (%p1666) target = $region164
                $region161: #{cnn_forward.2} parent=142 // loop_body
                  %v1672 = vld [vmem:[%s1670] sm:%s1663]
                  %1673 = vst [vmem:[%s1671] sm:%s1663] %v1672
                $region162: #{cnn_forward.2} parent=142 // loop_footer
                  %s1669 = sadd.s32 1, %s1665
                $region163: #{cnn_forward.2} parent=142 // loop_footer_branch
                  %1664 = sbr.rel target = $region159
                $region164: #{cnn_forward.2} parent=142 // loop_exit
                  _
              $region143: #{cnn_forward.2} parent=109 // pred_fallthru
                _
            $region110: #{cnn_forward.2} parent=105 // pred_fallthru
              _
            // Predicated region
            $region111: #{cnn_forward.2} parent=105 // pred_check
              %p1282 = pneg %p1278
            $region112: #{cnn_forward.2} parent=105 // pred_check_branch
              %1284 = sbr.rel (%p1282) target = $region114
            $region113: #{cnn_forward.2} parent=105 // pred_region
              %s1285 = sshllo.u32 0, %s1274
              loop: start=0, step=1, limit=1
              $region115: #{cnn_forward.2} parent=113 // loop_pre_header
                _
              $region116: #{cnn_forward.2} parent=113 // loop_header
                %s1287 = sphi 0, %s1291
                %p1288 = scmp.ge.s32.totalorder %s1287, 1
                %s1292 = sphi %s1262, %s1262
                %s1293 = sphi %s1273, %s1273
              $region117: #{cnn_forward.2} parent=113 // loop_header_branch
                %1290 = sbr.rel (%p1288) target = $region121
              $region118: #{cnn_forward.2} parent=113 // loop_body
                %v1294 = vld [vmem:[%s1292] sm:%s1285]
                %1295 = vst [vmem:[%s1293] sm:%s1285] %v1294
              $region119: #{cnn_forward.2} parent=113 // loop_footer
                %s1291 = sadd.s32 1, %s1287
              $region120: #{cnn_forward.2} parent=113 // loop_footer_branch
                %1286 = sbr.rel target = $region116
              $region121: #{cnn_forward.2} parent=113 // loop_exit
                _
            $region114: #{cnn_forward.2} parent=105 // pred_fallthru
              _
          $region106: #{cnn_forward.2} parent=101 // pred_fallthru
            _
          %1674 = vnop
        $region102: #{cnn_forward.2} parent=93 // pred_fallthru
          _
      $region94: #{cnn_forward.2} parent=5 // pred_fallthru
        _
      %p1675 = scmp.le.s32.totalorder 2, %s9
      // Predicated region
      $region165: #{cnn_forward.2} parent=5 // pred_check
        %p1676 = pneg %p1675
      $region166: #{cnn_forward.2} parent=5 // pred_check_branch
        %1678 = sbr.rel (%p1676) target = $region168
      $region167: #{cnn_forward.2} parent=5 // pred_region
        %s1679 = ssub.s32 %s9, 2
        // Predicated region
        $region169: #{cnn_forward.2} parent=167 // pred_check
          %p1680 = pneg %p106
        $region170: #{cnn_forward.2} parent=167 // pred_check_branch
          %1682 = sbr.rel (%p1680) target = $region172
        $region171: #{cnn_forward.2} parent=167 // pred_region
          %s1683 = sand.u32 %s91, 1
          %s1684 = sand.u32 %s91, 1
          %s1685 = smul.addr %s1684, 16
          %s1686 = scalar_lea.vmem [#allocation3], %s1685
        $region172: #{cnn_forward.2} parent=167 // pred_fallthru
          _
      $region168: #{cnn_forward.2} parent=5 // pred_fallthru
        _
    $region6: #{cnn_forward.2} parent=1 // loop_footer
      %s13 = sadd.s32 1, %s9
    $region7: #{cnn_forward.2} parent=1 // loop_footer_branch
      %8 = sbr.rel target = $region3
    $region8: #{cnn_forward.2} parent=1 // loop_exit
      _

// kernel: cnn_forward.3
$region0: #{cnn_forward.3}
  #allocation0 [shape = 'u32[]', space=smem, size = 0x4, offset = 0x4, fixed_abs, tag = 'smem constant byte address 0x4 - core index']
  #allocation1 [shape = 'u32[144,128]{1,0:T(1,128)}', space=vmem, size = 0x12000, scoped, tag = 'internal scratch']
  #allocation2 [shape = 'f32[1,1]{1,0:T(1,128)S(1)}', space=vmem, size = 0x200, scoped, tag = 'scoped memory for cnn_forward.3']
  %s0 = inlined_call_operand.vmem [shape: bf16[32,216], index: 0, kind: input, shape index: {}]
  %s1 = inlined_call_operand.vmem [shape: bf16[4,216,16], index: 1, kind: input, shape index: {}]
  %s2 = inlined_call_operand.vmem [shape: f32[4,1,16], index: 2, kind: input, shape index: {}]
  %s3 = inlined_call_operand.vmem [shape: f32[16,16,120], index: 3, kind: input, shape index: {}]
  %s4 = inlined_call_operand.vmem [shape: f32[1,120], index: 4, kind: input, shape index: {}]
  %s5 = inlined_call_operand.vmem [shape: f32[120,84], index: 5, kind: input, shape index: {}]
  %s6 = inlined_call_operand.vmem [shape: f32[1,84], index: 6, kind: input, shape index: {}]
  %s7 = inlined_call_operand.vmem [shape: f32[84,1], index: 7, kind: input, shape index: {}]
  %s8 = inlined_call_operand.<no memory space> [shape: f32[1,1], index: 8, kind: input, shape index: {}]
  %s9 = inlined_call_operand.vmem [shape: f32[2,1], index: 9, kind: output, shape index: {}]
  %s10 = sld [smem:[#allocation0]]
  $region46: #{cnn_forward.3} parent=0
    _
  %s12 = ssub.s32 1, %s10
  %s13 = scalar_select 0, %s12, %s10
  %v14 = vstv %s8
  %15 = vst [vmem:[#allocation2] sm:$0x1] %v14
  // Predicated region
  $region2: #{cnn_forward.3} parent=0 // pred_check
    _
  $region3: #{cnn_forward.3} parent=0 // pred_check_branch
    %17 = sbr.rel (0) target = $region5
  $region4: #{cnn_forward.3} parent=0 // pred_region
    _
  $region5: #{cnn_forward.3} parent=0 // pred_fallthru
    _
  // Predicated region
  $region6: #{cnn_forward.3} parent=0 // pred_check
    _
  $region7: #{cnn_forward.3} parent=0 // pred_check_branch
    %19 = sbr.rel (0) target = $region9
  $region8: #{cnn_forward.3} parent=0 // pred_region
    _
  $region9: #{cnn_forward.3} parent=0 // pred_fallthru
    _
  // Predicated region
  $region10: #{cnn_forward.3} parent=0 // pred_check
    _
  $region11: #{cnn_forward.3} parent=0 // pred_check_branch
    %21 = sbr.rel (0) target = $region13
  $region12: #{cnn_forward.3} parent=0 // pred_region
    _
  $region13: #{cnn_forward.3} parent=0 // pred_fallthru
    _
  // Predicated region
  $region14: #{cnn_forward.3} parent=0 // pred_check
    _
  $region15: #{cnn_forward.3} parent=0 // pred_check_branch
    %23 = sbr.rel (0) target = $region17
  $region16: #{cnn_forward.3} parent=0 // pred_region
    _
  $region17: #{cnn_forward.3} parent=0 // pred_fallthru
    _
  // Predicated region
  $region18: #{cnn_forward.3} parent=0 // pred_check
    _
  $region19: #{cnn_forward.3} parent=0 // pred_check_branch
    %25 = sbr.rel (0) target = $region21
  $region20: #{cnn_forward.3} parent=0 // pred_region
    _
  $region21: #{cnn_forward.3} parent=0 // pred_fallthru
    _
  // Predicated region
  $region22: #{cnn_forward.3} parent=0 // pred_check
    _
  $region23: #{cnn_forward.3} parent=0 // pred_check_branch
    %27 = sbr.rel (0) target = $region25
  $region24: #{cnn_forward.3} parent=0 // pred_region
    _
  $region25: #{cnn_forward.3} parent=0 // pred_fallthru
    _
  // Predicated region
  $region26: #{cnn_forward.3} parent=0 // pred_check
    _
  $region27: #{cnn_forward.3} parent=0 // pred_check_branch
    %29 = sbr.rel (0) target = $region29
  $region28: #{cnn_forward.3} parent=0 // pred_region
    _
  $region29: #{cnn_forward.3} parent=0 // pred_fallthru
    _
  // Predicated region
  $region30: #{cnn_forward.3} parent=0 // pred_check
    _
  $region31: #{cnn_forward.3} parent=0 // pred_check_branch
    %31 = sbr.rel (0) target = $region33
  $region32: #{cnn_forward.3} parent=0 // pred_region
    _
  $region33: #{cnn_forward.3} parent=0 // pred_fallthru
    _
  // Predicated region
  $region34: #{cnn_forward.3} parent=0 // pred_check
    _
  $region35: #{cnn_forward.3} parent=0 // pred_check_branch
    %33 = sbr.rel (0) target = $region37
  $region36: #{cnn_forward.3} parent=0 // pred_region
    _
  $region37: #{cnn_forward.3} parent=0 // pred_fallthru
    _
  %v35 = vld [vmem:[%s0] sm:$0xff]
  %v36 = vld [vmem:[%s0 + $0x8] sm:$0xff]
  %v37 = vld [vmem:[%s0 + $0x10] sm:$0xff]
  %v38 = vld [vmem:[%s0 + $0x18] sm:$0xff]
  %v39 = vld [vmem:[%s1] sm:$0xf]
  %v40 = vld [vmem:[%s1 + $0x4] sm:$0xf]
  %v41 = vld [vmem:[%s1 + $0x8] sm:$0xf]
  %v42 = vld [vmem:[%s1 + $0xc] sm:$0xf]
  %v43 = vld [vmem:[%s1 + $0x10] sm:$0xf]
  %v44 = vld [vmem:[%s1 + $0x14] sm:$0xf]
  %v45 = vld [vmem:[%s1 + $0x18] sm:$0xf]
  %v46 = vld [vmem:[%s1 + $0x1c] sm:$0xf]
  %v47 = vld [vmem:[%s1 + $0x20] sm:$0xf]
  %v48 = vld [vmem:[%s1 + $0x24] sm:$0xf]
  %v49 = vld [vmem:[%s1 + $0x28] sm:$0xf]
  %v50 = vld [vmem:[%s1 + $0x2c] sm:$0xf]
  %v51 = vld [vmem:[%s1 + $0x30] sm:$0xf]
  %v52 = vld [vmem:[%s1 + $0x34] sm:$0xf]
  %v53 = vld [vmem:[%s1 + $0x38] sm:$0xf]
  %v54 = vld [vmem:[%s1 + $0x3c] sm:$0xf]
  %v55 = vld [vmem:[%s1 + $0x40] sm:$0xf]
  %v56 = vld [vmem:[%s1 + $0x44] sm:$0xf]
  %v57 = vld [vmem:[%s1 + $0x48] sm:$0xf]
  %v58 = vld [vmem:[%s1 + $0x4c] sm:$0xf]
  %v59 = vld [vmem:[%s1 + $0x50] sm:$0xf]
  %v60 = vld [vmem:[%s1 + $0x54] sm:$0xf]
  %v61 = vld [vmem:[%s1 + $0x58] sm:$0xf]
  %v62 = vld [vmem:[%s1 + $0x5c] sm:$0xf]
  %v63 = vld [vmem:[%s1 + $0x60] sm:$0xf]
  %v64 = vld [vmem:[%s1 + $0x64] sm:$0xf]
  %v65 = vld [vmem:[%s1 + $0x68] sm:$0xf]
  %v66 = vld [vmem:[%s2] sm:$0x1]
  %v68 = vlaneseq
  %v69 = vshrl.u32 %v68, 7
  %v70 = vsub.s32 0, %v69
  %v71 = vrot.slane %v66, %v70
  %v77 = vunpack.c.l.b16 %v35
  %v78 = vunpack.c.h.b16 %v35
  %v79 = vunpack.c.l.b16 %v36
  %v80 = vunpack.c.h.b16 %v36
  %v81 = vunpack.c.l.b16 %v37
  %v82 = vunpack.c.h.b16 %v37
  %v83 = vunpack.c.l.b16 %v38
  %v84 = vunpack.c.h.b16 %v38
  %v85 = vpack.c.b16 %v79, %v77
  %v86 = vpack.c.b16 %v80, %v78
  %v87 = vpack.c.b16 %v83, %v81
  %v88 = vpack.c.b16 %v84, %v82
  %v118 = vunpack.c.l.b16 %v39
  %v119 = vunpack.c.l.b16 %v40
  %v120 = vunpack.c.l.b16 %v41
  %v121 = vunpack.c.l.b16 %v42
  %v122 = vunpack.c.l.b16 %v43
  %v123 = vunpack.c.l.b16 %v44
  %v124 = vunpack.c.l.b16 %v45
  %v125 = vunpack.c.l.b16 %v46
  %v126 = vunpack.c.l.b16 %v47
  %v127 = vunpack.c.l.b16 %v48
  %v128 = vunpack.c.l.b16 %v49
  %v129 = vunpack.c.l.b16 %v50
  %v130 = vunpack.c.l.b16 %v51
  %v131 = vunpack.c.l.b16 %v52
  %v132 = vunpack.c.l.b16 %v53
  %v133 = vunpack.c.l.b16 %v54
  %v134 = vunpack.c.l.b16 %v55
  %v135 = vunpack.c.l.b16 %v56
  %v136 = vunpack.c.l.b16 %v57
  %v137 = vunpack.c.l.b16 %v58
  %v138 = vunpack.c.l.b16 %v59
  %v139 = vunpack.c.l.b16 %v60
  %v140 = vunpack.c.l.b16 %v61
  %v141 = vunpack.c.l.b16 %v62
  %v142 = vunpack.c.l.b16 %v63
  %v143 = vunpack.c.l.b16 %v64
  %v144 = vunpack.c.l.b16 %v65
  %v145 = vpack.c.b16 %v119, %v118
  %v146 = vpack.c.b16 %v121, %v120
  %v147 = vpack.c.b16 %v123, %v122
  %v148 = vpack.c.b16 %v125, %v124
  %v149 = vpack.c.b16 %v127, %v126
  %v150 = vpack.c.b16 %v129, %v128
  %v151 = vpack.c.b16 %v131, %v130
  %v152 = vpack.c.b16 %v133, %v132
  %v153 = vpack.c.b16 %v135, %v134
  %v154 = vpack.c.b16 %v137, %v136
  %v155 = vpack.c.b16 %v139, %v138
  %v156 = vpack.c.b16 %v141, %v140
  %v157 = vpack.c.b16 %v143, %v142
  %v158 = vpack.c.b16 %v144, %v144
  %vm172 = vcmask 719872
  %v174 = vsel %vm172, %v86, 0
  %v177 = vsel %vm172, %v88, 0
  %vm179 = vcmask 1043456
  %v181 = vsel %vm179, %v158, 0
  %183 = vmatprep.subr.bf16.mxu0 0
  %184 = vmatpush1.bf16.msra.mxu0 %v145
  %185 = vmatprep.subr.bf16.mxu0 0
  %186 = vmatpush1.bf16.msra.mxu0 %v146
  %187 = vmatprep.subr.bf16.mxu0 0
  %188 = vmatpush1.bf16.msra.mxu0 %v147
  %189 = vmatprep.subr.bf16.mxu0 0
  %190 = vmatpush1.bf16.msra.mxu0 %v148
  %191 = vmatprep.subr.bf16.mxu0 0
  %192 = vmatpush1.bf16.msra.mxu0 %v149
  %193 = vmatprep.subr.bf16.mxu0 0
  %194 = vmatpush1.bf16.msra.mxu0 %v150
  %195 = vmatprep.subr.bf16.mxu0 0
  %196 = vmatpush1.bf16.msra.mxu0 %v151
  %197 = vmatprep.subr.bf16.mxu0 0
  %198 = vmatpush1.bf16.msra.mxu0 %v152
  %199 = vmatprep.subr.bf16.mxu0 0
  %200 = vmatpush1.bf16.msra.mxu0 %v153
  %201 = vmatprep.subr.bf16.mxu0 0
  %202 = vmatpush1.bf16.msra.mxu0 %v154
  %203 = vmatprep.subr.bf16.mxu0 0
  %204 = vmatpush1.bf16.msra.mxu0 %v155
  %205 = vmatprep.subr.bf16.mxu0 0
  %206 = vmatpush1.bf16.msra.mxu0 %v156
  %207 = vmatprep.subr.bf16.mxu0 0
  %208 = vmatpush1.bf16.msra.mxu0 %v157
  %209 = vmatprep.subr.bf16.mxu0 0
  %210 = vmatpush1.bf16.msra.mxu0 %v181
  %211 = vmatprep.subr.bf16.mxu0 0
  %212 = vmatpush1.bf16.msra.mxu0 0
  %213 = vmatprep.subr.bf16.mxu0 0
  %214 = vmatpush1.bf16.msra.mxu0 0
  %215 = vmatprep.mubr.bf16.mxu0 %v174
  %216 = vmatmul.mubr.bf16.gmra.mrb[0].mxu0 %v85
  %v217 = vpop.f32.mrb[0].mxu0
  %v218 = vadd.f32 %v71, %v217
  %v219 = vpop.f32.mrb[0].mxu0
  %v220 = vpop.f32.mrb[0].mxu0
  %v221 = vadd.f32 %v71, %v220
  %v222 = vpop.f32.mrb[0].mxu0
  %223 = vmatprep.mubr.bf16.mxu0 %v177
  %224 = vmatmul.mubr.bf16.gmra.mrb[0].mxu0 %v87
  %v225 = vpop.f32.mrb[0].mxu0
  %v226 = vadd.f32 %v71, %v225
  %v227 = vpop.f32.mrb[0].mxu0
  %v228 = vpop.f32.mrb[0].mxu0
  %v229 = vadd.f32 %v71, %v228
  %v230 = vpop.f32.mrb[0].mxu0
  %231 = vdwg.mxu0
  %v232 = vtanh.pop %v218
  %v233 = vtanh.pop %v221
  %v234 = vtanh.pop %v226
  %v235 = vtanh.pop %v229
  %v236 = vadd.f32 %v232, 0.0
  %v237 = vadd.f32 %v233, 0.0
  %v238 = vadd.f32 %v234, 0.0
  %v239 = vadd.f32 %v235, 0.0
  %s240 = scalar_lea.vmem %s1, 108
  %v241 = vld [vmem:[%s240] sm:$0xf]
  %v242 = vld [vmem:[%s240 + $0x4] sm:$0xf]
  %v243 = vld [vmem:[%s240 + $0x8] sm:$0xf]
  %v244 = vld [vmem:[%s240 + $0xc] sm:$0xf]
  %v245 = vld [vmem:[%s240 + $0x10] sm:$0xf]
  %v246 = vld [vmem:[%s240 + $0x14] sm:$0xf]
  %v247 = vld [vmem:[%s240 + $0x18] sm:$0xf]
  %v248 = vld [vmem:[%s240 + $0x1c] sm:$0xf]
  %v249 = vld [vmem:[%s240 + $0x20] sm:$0xf]
  %v250 = vld [vmem:[%s240 + $0x24] sm:$0xf]
  %v251 = vld [vmem:[%s240 + $0x28] sm:$0xf]
  %v252 = vld [vmem:[%s240 + $0x2c] sm:$0xf]
  %v253 = vld [vmem:[%s240 + $0x30] sm:$0xf]
  %v254 = vld [vmem:[%s240 + $0x34] sm:$0xf]
  %v255 = vld [vmem:[%s240 + $0x38] sm:$0xf]
  %v256 = vld [vmem:[%s240 + $0x3c] sm:$0xf]
  %v257 = vld [vmem:[%s240 + $0x40] sm:$0xf]
  %v258 = vld [vmem:[%s240 + $0x44] sm:$0xf]
  %v259 = vld [vmem:[%s240 + $0x48] sm:$0xf]
  %v260 = vld [vmem:[%s240 + $0x4c] sm:$0xf]
  %v261 = vld [vmem:[%s240 + $0x50] sm:$0xf]
  %v262 = vld [vmem:[%s240 + $0x54] sm:$0xf]
  %v263 = vld [vmem:[%s240 + $0x58] sm:$0xf]
  %v264 = vld [vmem:[%s240 + $0x5c] sm:$0xf]
  %v265 = vld [vmem:[%s240 + $0x60] sm:$0xf]
  %v266 = vld [vmem:[%s240 + $0x64] sm:$0xf]
  %v267 = vld [vmem:[%s240 + $0x68] sm:$0xf]
  %s268 = scalar_lea.vmem %s2, 1
  %v269 = vld [vmem:[%s268] sm:$0x1]
  %v271 = vlaneseq
  %v272 = vshrl.u32 %v271, 7
  %v273 = vsub.s32 0, %v272
  %v274 = vrot.slane %v269, %v273
  %v303 = vunpack.c.l.b16 %v241
  %v304 = vunpack.c.l.b16 %v242
  %v305 = vunpack.c.l.b16 %v243
  %v306 = vunpack.c.l.b16 %v244
  %v307 = vunpack.c.l.b16 %v245
  %v308 = vunpack.c.l.b16 %v246
  %v309 = vunpack.c.l.b16 %v247
  %v310 = vunpack.c.l.b16 %v248
  %v311 = vunpack.c.l.b16 %v249
  %v312 = vunpack.c.l.b16 %v250
  %v313 = vunpack.c.l.b16 %v251
  %v314 = vunpack.c.l.b16 %v252
  %v315 = vunpack.c.l.b16 %v253
  %v316 = vunpack.c.l.b16 %v254
  %v317 = vunpack.c.l.b16 %v255
  %v318 = vunpack.c.l.b16 %v256
  %v319 = vunpack.c.l.b16 %v257
  %v320 = vunpack.c.l.b16 %v258
  %v321 = vunpack.c.l.b16 %v259
  %v322 = vunpack.c.l.b16 %v260
  %v323 = vunpack.c.l.b16 %v261
  %v324 = vunpack.c.l.b16 %v262
  %v325 = vunpack.c.l.b16 %v263
  %v326 = vunpack.c.l.b16 %v264
  %v327 = vunpack.c.l.b16 %v265
  %v328 = vunpack.c.l.b16 %v266
  %v329 = vunpack.c.l.b16 %v267
  %v330 = vpack.c.b16 %v304, %v303
  %v331 = vpack.c.b16 %v306, %v305
  %v332 = vpack.c.b16 %v308, %v307
  %v333 = vpack.c.b16 %v310, %v309
  %v334 = vpack.c.b16 %v312, %v311
  %v335 = vpack.c.b16 %v314, %v313
  %v336 = vpack.c.b16 %v316, %v315
  %v337 = vpack.c.b16 %v318, %v317
  %v338 = vpack.c.b16 %v320, %v319
  %v339 = vpack.c.b16 %v322, %v321
  %v340 = vpack.c.b16 %v324, %v323
  %v341 = vpack.c.b16 %v326, %v325
  %v342 = vpack.c.b16 %v328, %v327
  %v343 = vpack.c.b16 %v329, %v329
  %v358 = vsel %vm179, %v343, 0
  %360 = vmatprep.subr.bf16.mxu0 0
  %361 = vmatpush1.bf16.msra.mxu0 %v330
  %362 = vmatprep.subr.bf16.mxu0 0
  %363 = vmatpush1.bf16.msra.mxu0 %v331
  %364 = vmatprep.subr.bf16.mxu0 0
  %365 = vmatpush1.bf16.msra.mxu0 %v332
  %366 = vmatprep.subr.bf16.mxu0 0
  %367 = vmatpush1.bf16.msra.mxu0 %v333
  %368 = vmatprep.subr.bf16.mxu0 0
  %369 = vmatpush1.bf16.msra.mxu0 %v334
  %370 = vmatprep.subr.bf16.mxu0 0
  %371 = vmatpush1.bf16.msra.mxu0 %v335
  %372 = vmatprep.subr.bf16.mxu0 0
  %373 = vmatpush1.bf16.msra.mxu0 %v336
  %374 = vmatprep.subr.bf16.mxu0 0
  %375 = vmatpush1.bf16.msra.mxu0 %v337
  %376 = vmatprep.subr.bf16.mxu0 0
  %377 = vmatpush1.bf16.msra.mxu0 %v338
  %378 = vmatprep.subr.bf16.mxu0 0
  %379 = vmatpush1.bf16.msra.mxu0 %v339
  %380 = vmatprep.subr.bf16.mxu0 0
  %381 = vmatpush1.bf16.msra.mxu0 %v340
  %382 = vmatprep.subr.bf16.mxu0 0
  %383 = vmatpush1.bf16.msra.mxu0 %v341
  %384 = vmatprep.subr.bf16.mxu0 0
  %385 = vmatpush1.bf16.msra.mxu0 %v342
  %386 = vmatprep.subr.bf16.mxu0 0
  %387 = vmatpush1.bf16.msra.mxu0 %v358
  %388 = vmatprep.subr.bf16.mxu0 0
  %389 = vmatpush1.bf16.msra.mxu0 0
  %390 = vmatprep.subr.bf16.mxu0 0
  %391 = vmatpush1.bf16.msra.mxu0 0
  %392 = vmatprep.mubr.bf16.mxu0 %v174
  %393 = vmatmul.mubr.bf16.gmra.mrb[0].mxu0 %v85
  %v394 = vpop.f32.mrb[0].mxu0
  %v395 = vadd.f32 %v274, %v394
  %v396 = vpop.f32.mrb[0].mxu0
  %v397 = vpop.f32.mrb[0].mxu0
  %v398 = vadd.f32 %v274, %v397
  %v399 = vpop.f32.mrb[0].mxu0
  %400 = vmatprep.mubr.bf16.mxu0 %v177
  %401 = vmatmul.mubr.bf16.gmra.mrb[0].mxu0 %v87
  %v402 = vpop.f32.mrb[0].mxu0
  %v403 = vadd.f32 %v274, %v402
  %v404 = vpop.f32.mrb[0].mxu0
  %v405 = vpop.f32.mrb[0].mxu0
  %v406 = vadd.f32 %v274, %v405
  %v407 = vpop.f32.mrb[0].mxu0
  %408 = vdwg.mxu0
  %v409 = vtanh.pop %v395
  %v410 = vtanh.pop %v398
  %v411 = vtanh.pop %v403
  %v412 = vtanh.pop %v406
  %v413 = vadd.f32 %v236, %v409
  %v414 = vadd.f32 %v237, %v410
  %v415 = vadd.f32 %v238, %v411
  %v416 = vadd.f32 %v239, %v412
  %s417 = scalar_lea.vmem %s1, 216
  %v418 = vld [vmem:[%s417] sm:$0xf]
  %v419 = vld [vmem:[%s417 + $0x4] sm:$0xf]
  %v420 = vld [vmem:[%s417 + $0x8] sm:$0xf]
  %v421 = vld [vmem:[%s417 + $0xc] sm:$0xf]
  %v422 = vld [vmem:[%s417 + $0x10] sm:$0xf]
  %v423 = vld [vmem:[%s417 + $0x14] sm:$0xf]
  %v424 = vld [vmem:[%s417 + $0x18] sm:$0xf]
  %v425 = vld [vmem:[%s417 + $0x1c] sm:$0xf]
  %v426 = vld [vmem:[%s417 + $0x20] sm:$0xf]
  %v427 = vld [vmem:[%s417 + $0x24] sm:$0xf]
  %v428 = vld [vmem:[%s417 + $0x28] sm:$0xf]
  %v429 = vld [vmem:[%s417 + $0x2c] sm:$0xf]
  %v430 = vld [vmem:[%s417 + $0x30] sm:$0xf]
  %v431 = vld [vmem:[%s417 + $0x34] sm:$0xf]
  %v432 = vld [vmem:[%s417 + $0x38] sm:$0xf]
  %v433 = vld [vmem:[%s417 + $0x3c] sm:$0xf]
  %v434 = vld [vmem:[%s417 + $0x40] sm:$0xf]
  %v435 = vld [vmem:[%s417 + $0x44] sm:$0xf]
  %v436 = vld [vmem:[%s417 + $0x48] sm:$0xf]
  %v437 = vld [vmem:[%s417 + $0x4c] sm:$0xf]
  %v438 = vld [vmem:[%s417 + $0x50] sm:$0xf]
  %v439 = vld [vmem:[%s417 + $0x54] sm:$0xf]
  %v440 = vld [vmem:[%s417 + $0x58] sm:$0xf]
  %v441 = vld [vmem:[%s417 + $0x5c] sm:$0xf]
  %v442 = vld [vmem:[%s417 + $0x60] sm:$0xf]
  %v443 = vld [vmem:[%s417 + $0x64] sm:$0xf]
  %v444 = vld [vmem:[%s417 + $0x68] sm:$0xf]
  %s445 = scalar_lea.vmem %s2, 2
  %v446 = vld [vmem:[%s445] sm:$0x1]
  %v448 = vlaneseq
  %v449 = vshrl.u32 %v448, 7
  %v450 = vsub.s32 0, %v449
  %v451 = vrot.slane %v446, %v450
  %v480 = vunpack.c.l.b16 %v418
  %v481 = vunpack.c.l.b16 %v419
  %v482 = vunpack.c.l.b16 %v420
  %v483 = vunpack.c.l.b16 %v421
  %v484 = vunpack.c.l.b16 %v422
  %v485 = vunpack.c.l.b16 %v423
  %v486 = vunpack.c.l.b16 %v424
  %v487 = vunpack.c.l.b16 %v425
  %v488 = vunpack.c.l.b16 %v426
  %v489 = vunpack.c.l.b16 %v427
  %v490 = vunpack.c.l.b16 %v428
  %v491 = vunpack.c.l.b16 %v429
  %v492 = vunpack.c.l.b16 %v430
  %v493 = vunpack.c.l.b16 %v431
  %v494 = vunpack.c.l.b16 %v432
  %v495 = vunpack.c.l.b16 %v433
  %v496 = vunpack.c.l.b16 %v434
  %v497 = vunpack.c.l.b16 %v435
  %v498 = vunpack.c.l.b16 %v436
  %v499 = vunpack.c.l.b16 %v437
  %v500 = vunpack.c.l.b16 %v438
  %v501 = vunpack.c.l.b16 %v439
  %v502 = vunpack.c.l.b16 %v440
  %v503 = vunpack.c.l.b16 %v441
  %v504 = vunpack.c.l.b16 %v442
  %v505 = vunpack.c.l.b16 %v443
  %v506 = vunpack.c.l.b16 %v444
  %v507 = vpack.c.b16 %v481, %v480
  %v508 = vpack.c.b16 %v483, %v482
  %v509 = vpack.c.b16 %v485, %v484
  %v510 = vpack.c.b16 %v487, %v486
  %v511 = vpack.c.b16 %v489, %v488
  %v512 = vpack.c.b16 %v491, %v490
  %v513 = vpack.c.b16 %v493, %v492
  %v514 = vpack.c.b16 %v495, %v494
  %v515 = vpack.c.b16 %v497, %v496
  %v516 = vpack.c.b16 %v499, %v498
  %v517 = vpack.c.b16 %v501, %v500
  %v518 = vpack.c.b16 %v503, %v502
  %v519 = vpack.c.b16 %v505, %v504
  %v520 = vpack.c.b16 %v506, %v506
  %v535 = vsel %vm179, %v520, 0
  %537 = vmatprep.subr.bf16.mxu0 0
  %538 = vmatpush1.bf16.msra.mxu0 %v507
  %539 = vmatprep.subr.bf16.mxu0 0
  %540 = vmatpush1.bf16.msra.mxu0 %v508
  %541 = vmatprep.subr.bf16.mxu0 0
  %542 = vmatpush1.bf16.msra.mxu0 %v509
  %543 = vmatprep.subr.bf16.mxu0 0
  %544 = vmatpush1.bf16.msra.mxu0 %v510
  %545 = vmatprep.subr.bf16.mxu0 0
  %546 = vmatpush1.bf16.msra.mxu0 %v511
  %547 = vmatprep.subr.bf16.mxu0 0
  %548 = vmatpush1.bf16.msra.mxu0 %v512
  %549 = vmatprep.subr.bf16.mxu0 0
  %550 = vmatpush1.bf16.msra.mxu0 %v513
  %551 = vmatprep.subr.bf16.mxu0 0
  %552 = vmatpush1.bf16.msra.mxu0 %v514
  %553 = vmatprep.subr.bf16.mxu0 0
  %554 = vmatpush1.bf16.msra.mxu0 %v515
  %555 = vmatprep.subr.bf16.mxu0 0
  %556 = vmatpush1.bf16.msra.mxu0 %v516
  %557 = vmatprep.subr.bf16.mxu0 0
  %558 = vmatpush1.bf16.msra.mxu0 %v517
  %559 = vmatprep.subr.bf16.mxu0 0
  %560 = vmatpush1.bf16.msra.mxu0 %v518
  %561 = vmatprep.subr.bf16.mxu0 0
  %562 = vmatpush1.bf16.msra.mxu0 %v519
  %563 = vmatprep.subr.bf16.mxu0 0
  %564 = vmatpush1.bf16.msra.mxu0 %v535
  %565 = vmatprep.subr.bf16.mxu0 0
  %566 = vmatpush1.bf16.msra.mxu0 0
  %567 = vmatprep.subr.bf16.mxu0 0
  %568 = vmatpush1.bf16.msra.mxu0 0
  %569 = vmatprep.mubr.bf16.mxu0 %v174
  %570 = vmatmul.mubr.bf16.gmra.mrb[0].mxu0 %v85
  %v571 = vpop.f32.mrb[0].mxu0
  %v572 = vadd.f32 %v451, %v571
  %v573 = vpop.f32.mrb[0].mxu0
  %v574 = vpop.f32.mrb[0].mxu0
  %v575 = vadd.f32 %v451, %v574
  %v576 = vpop.f32.mrb[0].mxu0
  %577 = vmatprep.mubr.bf16.mxu0 %v177
  %578 = vmatmul.mubr.bf16.gmra.mrb[0].mxu0 %v87
  %v579 = vpop.f32.mrb[0].mxu0
  %v580 = vadd.f32 %v451, %v579
  %v581 = vpop.f32.mrb[0].mxu0
  %v582 = vpop.f32.mrb[0].mxu0
  %v583 = vadd.f32 %v451, %v582
  %v584 = vpop.f32.mrb[0].mxu0
  %585 = vdwg.mxu0
  %v586 = vtanh.pop %v572
  %v587 = vtanh.pop %v575
  %v588 = vtanh.pop %v580
  %v589 = vtanh.pop %v583
  %v590 = vadd.f32 %v413, %v586
  %v591 = vadd.f32 %v414, %v587
  %v592 = vadd.f32 %v415, %v588
  %v593 = vadd.f32 %v416, %v589
  %s594 = scalar_lea.vmem %s1, 324
  %v595 = vld [vmem:[%s594] sm:$0xf]
  %v596 = vld [vmem:[%s594 + $0x4] sm:$0xf]
  %v597 = vld [vmem:[%s594 + $0x8] sm:$0xf]
  %v598 = vld [vmem:[%s594 + $0xc] sm:$0xf]
  %v599 = vld [vmem:[%s594 + $0x10] sm:$0xf]
  %v600 = vld [vmem:[%s594 + $0x14] sm:$0xf]
  %v601 = vld [vmem:[%s594 + $0x18] sm:$0xf]
  %v602 = vld [vmem:[%s594 + $0x1c] sm:$0xf]
  %v603 = vld [vmem:[%s594 + $0x20] sm:$0xf]
  %v604 = vld [vmem:[%s594 + $0x24] sm:$0xf]
  %v605 = vld [vmem:[%s594 + $0x28] sm:$0xf]
  %v606 = vld [vmem:[%s594 + $0x2c] sm:$0xf]
  %v607 = vld [vmem:[%s594 + $0x30] sm:$0xf]
  %v608 = vld [vmem:[%s594 + $0x34] sm:$0xf]
  %v609 = vld [vmem:[%s594 + $0x38] sm:$0xf]
  %v610 = vld [vmem:[%s594 + $0x3c] sm:$0xf]
  %v611 = vld [vmem:[%s594 + $0x40] sm:$0xf]
  %v612 = vld [vmem:[%s594 + $0x44] sm:$0xf]
  %v613 = vld [vmem:[%s594 + $0x48] sm:$0xf]
  %v614 = vld [vmem:[%s594 + $0x4c] sm:$0xf]
  %v615 = vld [vmem:[%s594 + $0x50] sm:$0xf]
  %v616 = vld [vmem:[%s594 + $0x54] sm:$0xf]
  %v617 = vld [vmem:[%s594 + $0x58] sm:$0xf]
  %v618 = vld [vmem:[%s594 + $0x5c] sm:$0xf]
  %v619 = vld [vmem:[%s594 + $0x60] sm:$0xf]
  %v620 = vld [vmem:[%s594 + $0x64] sm:$0xf]
  %v621 = vld [vmem:[%s594 + $0x68] sm:$0xf]
  %s622 = scalar_lea.vmem %s2, 3
  %v623 = vld [vmem:[%s622] sm:$0x1]
  %v625 = vlaneseq
  %v626 = vshrl.u32 %v625, 7
  %v627 = vsub.s32 0, %v626
  %v628 = vrot.slane %v623, %v627
  %v657 = vunpack.c.l.b16 %v595
  %v658 = vunpack.c.l.b16 %v596
  %v659 = vunpack.c.l.b16 %v597
  %v660 = vunpack.c.l.b16 %v598
  %v661 = vunpack.c.l.b16 %v599
  %v662 = vunpack.c.l.b16 %v600
  %v663 = vunpack.c.l.b16 %v601
  %v664 = vunpack.c.l.b16 %v602
  %v665 = vunpack.c.l.b16 %v603
  %v666 = vunpack.c.l.b16 %v604
  %v667 = vunpack.c.l.b16 %v605
  %v668 = vunpack.c.l.b16 %v606
  %v669 = vunpack.c.l.b16 %v607
  %v670 = vunpack.c.l.b16 %v608
  %v671 = vunpack.c.l.b16 %v609
  %v672 = vunpack.c.l.b16 %v610
  %v673 = vunpack.c.l.b16 %v611
  %v674 = vunpack.c.l.b16 %v612
  %v675 = vunpack.c.l.b16 %v613
  %v676 = vunpack.c.l.b16 %v614
  %v677 = vunpack.c.l.b16 %v615
  %v678 = vunpack.c.l.b16 %v616
  %v679 = vunpack.c.l.b16 %v617
  %v680 = vunpack.c.l.b16 %v618
  %v681 = vunpack.c.l.b16 %v619
  %v682 = vunpack.c.l.b16 %v620
  %v683 = vunpack.c.l.b16 %v621
  %v684 = vpack.c.b16 %v658, %v657
  %v685 = vpack.c.b16 %v660, %v659
  %v686 = vpack.c.b16 %v662, %v661
  %v687 = vpack.c.b16 %v664, %v663
  %v688 = vpack.c.b16 %v666, %v665
  %v689 = vpack.c.b16 %v668, %v667
  %v690 = vpack.c.b16 %v670, %v669
  %v691 = vpack.c.b16 %v672, %v671
  %v692 = vpack.c.b16 %v674, %v673
  %v693 = vpack.c.b16 %v676, %v675
  %v694 = vpack.c.b16 %v678, %v677
  %v695 = vpack.c.b16 %v680, %v679
  %v696 = vpack.c.b16 %v682, %v681
  %v697 = vpack.c.b16 %v683, %v683
  %v712 = vsel %vm179, %v697, 0
  %714 = vmatprep.subr.bf16.mxu0 0
  %715 = vmatpush1.bf16.msra.mxu0 %v684
  %716 = vmatprep.subr.bf16.mxu0 0
  %717 = vmatpush1.bf16.msra.mxu0 %v685
  %718 = vmatprep.subr.bf16.mxu0 0
  %719 = vmatpush1.bf16.msra.mxu0 %v686
  %720 = vmatprep.subr.bf16.mxu0 0
  %721 = vmatpush1.bf16.msra.mxu0 %v687
  %722 = vmatprep.subr.bf16.mxu0 0
  %723 = vmatpush1.bf16.msra.mxu0 %v688
  %724 = vmatprep.subr.bf16.mxu0 0
  %725 = vmatpush1.bf16.msra.mxu0 %v689
  %726 = vmatprep.subr.bf16.mxu0 0
  %727 = vmatpush1.bf16.msra.mxu0 %v690
  %728 = vmatprep.subr.bf16.mxu0 0
  %729 = vmatpush1.bf16.msra.mxu0 %v691
  %730 = vmatprep.subr.bf16.mxu0 0
  %731 = vmatpush1.bf16.msra.mxu0 %v692
  %732 = vmatprep.subr.bf16.mxu0 0
  %733 = vmatpush1.bf16.msra.mxu0 %v693
  %734 = vmatprep.subr.bf16.mxu0 0
  %735 = vmatpush1.bf16.msra.mxu0 %v694
  %736 = vmatprep.subr.bf16.mxu0 0
  %737 = vmatpush1.bf16.msra.mxu0 %v695
  %738 = vmatprep.subr.bf16.mxu0 0
  %739 = vmatpush1.bf16.msra.mxu0 %v696
  %740 = vmatprep.subr.bf16.mxu0 0
  %741 = vmatpush1.bf16.msra.mxu0 %v712
  %742 = vmatprep.subr.bf16.mxu0 0
  %743 = vmatpush1.bf16.msra.mxu0 0
  %744 = vmatprep.subr.bf16.mxu0 0
  %745 = vmatpush1.bf16.msra.mxu0 0
  %746 = vmatprep.mubr.bf16.mxu0 %v174
  %747 = vmatmul.mubr.bf16.gmra.mrb[0].mxu0 %v85
  %v748 = vpop.f32.mrb[0].mxu0
  %v749 = vadd.f32 %v628, %v748
  %v750 = vpop.f32.mrb[0].mxu0
  %v751 = vpop.f32.mrb[0].mxu0
  %v752 = vadd.f32 %v628, %v751
  %v753 = vpop.f32.mrb[0].mxu0
  %754 = vmatprep.mubr.bf16.mxu0 %v177
  %755 = vmatmul.mubr.bf16.gmra.mrb[0].mxu0 %v87
  %v756 = vpop.f32.mrb[0].mxu0
  %v757 = vadd.f32 %v628, %v756
  %v758 = vpop.f32.mrb[0].mxu0
  %v759 = vpop.f32.mrb[0].mxu0
  %v760 = vadd.f32 %v628, %v759
  %v761 = vpop.f32.mrb[0].mxu0
  %762 = vdwg.mxu0
  %v763 = vtanh.pop %v749
  %v764 = vtanh.pop %v752
  %v765 = vtanh.pop %v757
  %v766 = vtanh.pop %v760
  %v767 = vadd.f32 %v590, %v763
  %v768 = vadd.f32 %v591, %v764
  %v769 = vadd.f32 %v592, %v765
  %v770 = vadd.f32 %v593, %v766
  %v771 = vmul.f32 %v767, 0.25
  %v772 = vmul.f32 %v768, 0.25
  %v773 = vmul.f32 %v769, 0.25
  %v774 = vmul.f32 %v770, 0.25
  %v775 = vld [vmem:[%s3] sm:$0xff]
  %v776 = vld [vmem:[%s3 + $0x8] sm:$0xff]
  %s777 = scalar_lea.vmem %s3, 16
  %v778 = vld [vmem:[%s777] sm:$0xff]
  %v779 = vld [vmem:[%s777 + $0x8] sm:$0xff]
  %v781 = vrot.slane %v771, 2
  %vm782 = vcmask 130048
  %v783 = vsel %vm782, %v781, 0
  %785 = vmatprep.subr.mxu0 0.0
  %786 = vmatpush1.msra.mxu0 %v778
  %787 = vmatprep.subr.mxu0 0.0
  %788 = vmatpush1.msra.mxu0 %v779
  %789 = vmatprep.subr.mxu0 0.0
  %790 = vmatpush1.msra.mxu0 0.0
  %791 = vmatprep.subr.mxu0 0.0
  %792 = vmatpush1.msra.mxu0 0.0
  %793 = vmatprep.subr.mxu0 0.0
  %794 = vmatpush1.msra.mxu0 0.0
  %795 = vmatprep.subr.mxu0 0.0
  %796 = vmatpush1.msra.mxu0 0.0
  %797 = vmatprep.subr.mxu0 0.0
  %798 = vmatpush1.msra.mxu0 0.0
  %799 = vmatprep.subr.mxu0 0.0
  %800 = vmatpush1.msra.mxu0 0.0
  %801 = vmatprep.subr.mxu0 0.0
  %802 = vmatpush1.msra.mxu0 0.0
  %803 = vmatprep.subr.mxu0 0.0
  %804 = vmatpush1.msra.mxu0 0.0
  %805 = vmatprep.subr.mxu0 0.0
  %806 = vmatpush1.msra.mxu0 0.0
  %807 = vmatprep.subr.mxu0 0.0
  %808 = vmatpush1.msra.mxu0 0.0
  %809 = vmatprep.subr.mxu0 0.0
  %810 = vmatpush1.msra.mxu0 0.0
  %811 = vmatprep.subr.mxu0 0.0
  %812 = vmatpush1.msra.mxu0 0.0
  %813 = vmatprep.subr.mxu0 0.0
  %814 = vmatpush1.msra.mxu0 0.0
  %815 = vmatprep.subr.mxu0 0.0
  %816 = vmatpush1.msra.mxu0 0.0
  %817 = vmatprep.subr.mxu0 0.0
  %818 = vmatpush1.msra.mxu0 0.0
  %819 = vmatprep.subr.mxu0 0.0
  %820 = vmatpush1.msra.mxu0 0.0
  %821 = vmatprep.subr.mxu0 0.0
  %822 = vmatpush1.msra.mxu0 0.0
  %823 = vmatprep.subr.mxu0 0.0
  %824 = vmatpush1.msra.mxu0 0.0
  %825 = vmatprep.subr.mxu0 0.0
  %826 = vmatpush1.msra.mxu0 0.0
  %827 = vmatprep.subr.mxu0 0.0
  %828 = vmatpush1.msra.mxu0 0.0
  %829 = vmatprep.subr.mxu0 0.0
  %830 = vmatpush1.msra.mxu0 0.0
  %831 = vmatprep.subr.mxu0 0.0
  %832 = vmatpush1.msra.mxu0 0.0
  %833 = vmatprep.subr.mxu0 0.0
  %834 = vmatpush1.msra.mxu0 0.0
  %835 = vmatprep.subr.mxu0 0.0
  %836 = vmatpush1.msra.mxu0 0.0
  %837 = vmatprep.subr.mxu0 0.0
  %838 = vmatpush1.msra.mxu0 0.0
  %839 = vmatprep.subr.mxu0 0.0
  %840 = vmatpush1.msra.mxu0 0.0
  %841 = vmatprep.subr.mxu0 0.0
  %842 = vmatpush1.msra.mxu0 0.0
  %843 = vmatprep.subr.mxu0 0.0
  %844 = vmatpush1.msra.mxu0 0.0
  %845 = vmatprep.subr.mxu0 0.0
  %846 = vmatpush1.msra.mxu0 0.0
  %847 = vmatprep.subr.mxu0 0.0
  %848 = vmatpush1.msra.mxu0 0.0
  %849 = vmatprep.mubr.f32.mxu0 0.0
  %850 = vmatmul.mubr.f32.gmra.mrb[0].mxu0 %v783
  %v851 = vpop.f32.mrb[0].mxu0
  %v852 = vadd.f32 0.0, %v851
  %v853 = vpop.f32.mrb[0].mxu0
  %854 = vdwg.mxu0
  %v855 = vsel %vm782, %v771, 0
  %857 = vmatprep.subr.mxu0 0.0
  %858 = vmatpush1.msra.mxu0 %v775
  %859 = vmatprep.subr.mxu0 0.0
  %860 = vmatpush1.msra.mxu0 %v776
  %861 = vmatprep.subr.mxu0 0.0
  %862 = vmatpush1.msra.mxu0 0.0
  %863 = vmatprep.subr.mxu0 0.0
  %864 = vmatpush1.msra.mxu0 0.0
  %865 = vmatprep.subr.mxu0 0.0
  %866 = vmatpush1.msra.mxu0 0.0
  %867 = vmatprep.subr.mxu0 0.0
  %868 = vmatpush1.msra.mxu0 0.0
  %869 = vmatprep.subr.mxu0 0.0
  %870 = vmatpush1.msra.mxu0 0.0
  %871 = vmatprep.subr.mxu0 0.0
  %872 = vmatpush1.msra.mxu0 0.0
  %873 = vmatprep.subr.mxu0 0.0
  %874 = vmatpush1.msra.mxu0 0.0
  %875 = vmatprep.subr.mxu0 0.0
  %876 = vmatpush1.msra.mxu0 0.0
  %877 = vmatprep.subr.mxu0 0.0
  %878 = vmatpush1.msra.mxu0 0.0
  %879 = vmatprep.subr.mxu0 0.0
  %880 = vmatpush1.msra.mxu0 0.0
  %881 = vmatprep.subr.mxu0 0.0
  %882 = vmatpush1.msra.mxu0 0.0
  %883 = vmatprep.subr.mxu0 0.0
  %884 = vmatpush1.msra.mxu0 0.0
  %885 = vmatprep.subr.mxu0 0.0
  %886 = vmatpush1.msra.mxu0 0.0
  %887 = vmatprep.subr.mxu0 0.0
  %888 = vmatpush1.msra.mxu0 0.0
  %889 = vmatprep.subr.mxu0 0.0
  %890 = vmatpush1.msra.mxu0 0.0
  %891 = vmatprep.subr.mxu0 0.0
  %892 = vmatpush1.msra.mxu0 0.0
  %893 = vmatprep.subr.mxu0 0.0
  %894 = vmatpush1.msra.mxu0 0.0
  %895 = vmatprep.subr.mxu0 0.0
  %896 = vmatpush1.msra.mxu0 0.0
  %897 = vmatprep.subr.mxu0 0.0
  %898 = vmatpush1.msra.mxu0 0.0
  %899 = vmatprep.subr.mxu0 0.0
  %900 = vmatpush1.msra.mxu0 0.0
  %901 = vmatprep.subr.mxu0 0.0
  %902 = vmatpush1.msra.mxu0 0.0
  %903 = vmatprep.subr.mxu0 0.0
  %904 = vmatpush1.msra.mxu0 0.0
  %905 = vmatprep.subr.mxu0 0.0
  %906 = vmatpush1.msra.mxu0 0.0
  %907 = vmatprep.subr.mxu0 0.0
  %908 = vmatpush1.msra.mxu0 0.0
  %909 = vmatprep.subr.mxu0 0.0
  %910 = vmatpush1.msra.mxu0 0.0
  %911 = vmatprep.subr.mxu0 0.0
  %912 = vmatpush1.msra.mxu0 0.0
  %913 = vmatprep.subr.mxu0 0.0
  %914 = vmatpush1.msra.mxu0 0.0
  %915 = vmatprep.subr.mxu0 0.0
  %916 = vmatpush1.msra.mxu0 0.0
  %917 = vmatprep.subr.mxu0 0.0
  %918 = vmatpush1.msra.mxu0 0.0
  %919 = vmatprep.subr.mxu0 0.0
  %920 = vmatpush1.msra.mxu0 0.0
  %921 = vmatprep.mubr.f32.mxu0 0.0
  %922 = vmatmul.mubr.f32.gmra.mrb[0].mxu0 %v855
  %v923 = vpop.f32.mrb[0].mxu0
  %v924 = vadd.f32 %v852, %v923
  %v925 = vpop.f32.mrb[0].mxu0
  %926 = vdwg.mxu0
  %s927 = scalar_lea.vmem %s3, 32
  %v928 = vld [vmem:[%s927] sm:$0xff]
  %v929 = vld [vmem:[%s927 + $0x8] sm:$0xff]
  %v930 = vrot.slane %v771, 4
  %v931 = vsel %vm782, %v930, 0
  %933 = vmatprep.subr.mxu0 0.0
  %934 = vmatpush1.msra.mxu0 %v928
  %935 = vmatprep.subr.mxu0 0.0
  %936 = vmatpush1.msra.mxu0 %v929
  %937 = vmatprep.subr.mxu0 0.0
  %938 = vmatpush1.msra.mxu0 0.0
  %939 = vmatprep.subr.mxu0 0.0
  %940 = vmatpush1.msra.mxu0 0.0
  %941 = vmatprep.subr.mxu0 0.0
  %942 = vmatpush1.msra.mxu0 0.0
  %943 = vmatprep.subr.mxu0 0.0
  %944 = vmatpush1.msra.mxu0 0.0
  %945 = vmatprep.subr.mxu0 0.0
  %946 = vmatpush1.msra.mxu0 0.0
  %947 = vmatprep.subr.mxu0 0.0
  %948 = vmatpush1.msra.mxu0 0.0
  %949 = vmatprep.subr.mxu0 0.0
  %950 = vmatpush1.msra.mxu0 0.0
  %951 = vmatprep.subr.mxu0 0.0
  %952 = vmatpush1.msra.mxu0 0.0
  %953 = vmatprep.subr.mxu0 0.0
  %954 = vmatpush1.msra.mxu0 0.0
  %955 = vmatprep.subr.mxu0 0.0
  %956 = vmatpush1.msra.mxu0 0.0
  %957 = vmatprep.subr.mxu0 0.0
  %958 = vmatpush1.msra.mxu0 0.0
  %959 = vmatprep.subr.mxu0 0.0
  %960 = vmatpush1.msra.mxu0 0.0
  %961 = vmatprep.subr.mxu0 0.0
  %962 = vmatpush1.msra.mxu0 0.0
  %963 = vmatprep.subr.mxu0 0.0
  %964 = vmatpush1.msra.mxu0 0.0
  %965 = vmatprep.subr.mxu0 0.0
  %966 = vmatpush1.msra.mxu0 0.0
  %967 = vmatprep.subr.mxu0 0.0
  %968 = vmatpush1.msra.mxu0 0.0
  %969 = vmatprep.subr.mxu0 0.0
  %970 = vmatpush1.msra.mxu0 0.0
  %971 = vmatprep.subr.mxu0 0.0
  %972 = vmatpush1.msra.mxu0 0.0
  %973 = vmatprep.subr.mxu0 0.0
  %974 = vmatpush1.msra.mxu0 0.0
  %975 = vmatprep.subr.mxu0 0.0
  %976 = vmatpush1.msra.mxu0 0.0
  %977 = vmatprep.subr.mxu0 0.0
  %978 = vmatpush1.msra.mxu0 0.0
  %979 = vmatprep.subr.mxu0 0.0
  %980 = vmatpush1.msra.mxu0 0.0
  %981 = vmatprep.subr.mxu0 0.0
  %982 = vmatpush1.msra.mxu0 0.0
  %983 = vmatprep.subr.mxu0 0.0
  %984 = vmatpush1.msra.mxu0 0.0
  %985 = vmatprep.subr.mxu0 0.0
  %986 = vmatpush1.msra.mxu0 0.0
  %987 = vmatprep.subr.mxu0 0.0
  %988 = vmatpush1.msra.mxu0 0.0
  %989 = vmatprep.subr.mxu0 0.0
  %990 = vmatpush1.msra.mxu0 0.0
  %991 = vmatprep.subr.mxu0 0.0
  %992 = vmatpush1.msra.mxu0 0.0
  %993 = vmatprep.subr.mxu0 0.0
  %994 = vmatpush1.msra.mxu0 0.0
  %995 = vmatprep.subr.mxu0 0.0
  %996 = vmatpush1.msra.mxu0 0.0
  %997 = vmatprep.mubr.f32.mxu0 0.0
  %998 = vmatmul.mubr.f32.gmra.mrb[0].mxu0 %v931
  %v999 = vpop.f32.mrb[0].mxu0
  %v1000 = vadd.f32 0.0, %v999
  %v1001 = vpop.f32.mrb[0].mxu0
  %1002 = vdwg.mxu0
  %v1003 = vadd.f32 %v924, %v1000
  %s1004 = scalar_lea.vmem %s3, 48
  %v1005 = vld [vmem:[%s1004] sm:$0xff]
  %v1006 = vld [vmem:[%s1004 + $0x8] sm:$0xff]
  %v1007 = vrot.slane %v771, 6
  %v1008 = vsel %vm782, %v1007, 0
  %1010 = vmatprep.subr.mxu0 0.0
  %1011 = vmatpush1.msra.mxu0 %v1005
  %1012 = vmatprep.subr.mxu0 0.0
  %1013 = vmatpush1.msra.mxu0 %v1006
  %1014 = vmatprep.subr.mxu0 0.0
  %1015 = vmatpush1.msra.mxu0 0.0
  %1016 = vmatprep.subr.mxu0 0.0
  %1017 = vmatpush1.msra.mxu0 0.0
  %1018 = vmatprep.subr.mxu0 0.0
  %1019 = vmatpush1.msra.mxu0 0.0
  %1020 = vmatprep.subr.mxu0 0.0
  %1021 = vmatpush1.msra.mxu0 0.0
  %1022 = vmatprep.subr.mxu0 0.0
  %1023 = vmatpush1.msra.mxu0 0.0
  %1024 = vmatprep.subr.mxu0 0.0
  %1025 = vmatpush1.msra.mxu0 0.0
  %1026 = vmatprep.subr.mxu0 0.0
  %1027 = vmatpush1.msra.mxu0 0.0
  %1028 = vmatprep.subr.mxu0 0.0
  %1029 = vmatpush1.msra.mxu0 0.0
  %1030 = vmatprep.subr.mxu0 0.0
  %1031 = vmatpush1.msra.mxu0 0.0
  %1032 = vmatprep.subr.mxu0 0.0
  %1033 = vmatpush1.msra.mxu0 0.0
  %1034 = vmatprep.subr.mxu0 0.0
  %1035 = vmatpush1.msra.mxu0 0.0
  %1036 = vmatprep.subr.mxu0 0.0
  %1037 = vmatpush1.msra.mxu0 0.0
  %1038 = vmatprep.subr.mxu0 0.0
  %1039 = vmatpush1.msra.mxu0 0.0
  %1040 = vmatprep.subr.mxu0 0.0
  %1041 = vmatpush1.msra.mxu0 0.0
  %1042 = vmatprep.subr.mxu0 0.0
  %1043 = vmatpush1.msra.mxu0 0.0
  %1044 = vmatprep.subr.mxu0 0.0
  %1045 = vmatpush1.msra.mxu0 0.0
  %1046 = vmatprep.subr.mxu0 0.0
  %1047 = vmatpush1.msra.mxu0 0.0
  %1048 = vmatprep.subr.mxu0 0.0
  %1049 = vmatpush1.msra.mxu0 0.0
  %1050 = vmatprep.subr.mxu0 0.0
  %1051 = vmatpush1.msra.mxu0 0.0
  %1052 = vmatprep.subr.mxu0 0.0
  %1053 = vmatpush1.msra.mxu0 0.0
  %1054 = vmatprep.subr.mxu0 0.0
  %1055 = vmatpush1.msra.mxu0 0.0
  %1056 = vmatprep.subr.mxu0 0.0
  %1057 = vmatpush1.msra.mxu0 0.0
  %1058 = vmatprep.subr.mxu0 0.0
  %1059 = vmatpush1.msra.mxu0 0.0
  %1060 = vmatprep.subr.mxu0 0.0
  %1061 = vmatpush1.msra.mxu0 0.0
  %1062 = vmatprep.subr.mxu0 0.0
  %1063 = vmatpush1.msra.mxu0 0.0
  %1064 = vmatprep.subr.mxu0 0.0
  %1065 = vmatpush1.msra.mxu0 0.0
  %1066 = vmatprep.subr.mxu0 0.0
  %1067 = vmatpush1.msra.mxu0 0.0
  %1068 = vmatprep.subr.mxu0 0.0
  %1069 = vmatpush1.msra.mxu0 0.0
  %1070 = vmatprep.subr.mxu0 0.0
  %1071 = vmatpush1.msra.mxu0 0.0
  %1072 = vmatprep.subr.mxu0 0.0
  %1073 = vmatpush1.msra.mxu0 0.0
  %1074 = vmatprep.mubr.f32.mxu0 0.0
  %1075 = vmatmul.mubr.f32.gmra.mrb[0].mxu0 %v1008
  %v1076 = vpop.f32.mrb[0].mxu0
  %v1077 = vadd.f32 0.0, %v1076
  %v1078 = vpop.f32.mrb[0].mxu0
  %1079 = vdwg.mxu0
  %v1080 = vadd.f32 %v1003, %v1077
  %s1081 = scalar_lea.vmem %s3, 64
  %v1082 = vld [vmem:[%s1081] sm:$0xff]
  %v1083 = vld [vmem:[%s1081 + $0x8] sm:$0xff]
  %v1085 = vsel %vm782, %v772, 0
  %1087 = vmatprep.subr.mxu0 0.0
  %1088 = vmatpush1.msra.mxu0 %v1082
  %1089 = vmatprep.subr.mxu0 0.0
  %1090 = vmatpush1.msra.mxu0 %v1083
  %1091 = vmatprep.subr.mxu0 0.0
  %1092 = vmatpush1.msra.mxu0 0.0
  %1093 = vmatprep.subr.mxu0 0.0
  %1094 = vmatpush1.msra.mxu0 0.0
  %1095 = vmatprep.subr.mxu0 0.0
  %1096 = vmatpush1.msra.mxu0 0.0
  %1097 = vmatprep.subr.mxu0 0.0
  %1098 = vmatpush1.msra.mxu0 0.0
  %1099 = vmatprep.subr.mxu0 0.0
  %1100 = vmatpush1.msra.mxu0 0.0
  %1101 = vmatprep.subr.mxu0 0.0
  %1102 = vmatpush1.msra.mxu0 0.0
  %1103 = vmatprep.subr.mxu0 0.0
  %1104 = vmatpush1.msra.mxu0 0.0
  %1105 = vmatprep.subr.mxu0 0.0
  %1106 = vmatpush1.msra.mxu0 0.0
  %1107 = vmatprep.subr.mxu0 0.0
  %1108 = vmatpush1.msra.mxu0 0.0
  %1109 = vmatprep.subr.mxu0 0.0
  %1110 = vmatpush1.msra.mxu0 0.0
  %1111 = vmatprep.subr.mxu0 0.0
  %1112 = vmatpush1.msra.mxu0 0.0
  %1113 = vmatprep.subr.mxu0 0.0
  %1114 = vmatpush1.msra.mxu0 0.0
  %1115 = vmatprep.subr.mxu0 0.0
  %1116 = vmatpush1.msra.mxu0 0.0
  %1117 = vmatprep.subr.mxu0 0.0
  %1118 = vmatpush1.msra.mxu0 0.0
  %1119 = vmatprep.subr.mxu0 0.0
  %1120 = vmatpush1.msra.mxu0 0.0
  %1121 = vmatprep.subr.mxu0 0.0
  %1122 = vmatpush1.msra.mxu0 0.0
  %1123 = vmatprep.subr.mxu0 0.0
  %1124 = vmatpush1.msra.mxu0 0.0
  %1125 = vmatprep.subr.mxu0 0.0
  %1126 = vmatpush1.msra.mxu0 0.0
  %1127 = vmatprep.subr.mxu0 0.0
  %1128 = vmatpush1.msra.mxu0 0.0
  %1129 = vmatprep.subr.mxu0 0.0
  %1130 = vmatpush1.msra.mxu0 0.0
  %1131 = vmatprep.subr.mxu0 0.0
  %1132 = vmatpush1.msra.mxu0 0.0
  %1133 = vmatprep.subr.mxu0 0.0
  %1134 = vmatpush1.msra.mxu0 0.0
  %1135 = vmatprep.subr.mxu0 0.0
  %1136 = vmatpush1.msra.mxu0 0.0
  %1137 = vmatprep.subr.mxu0 0.0
  %1138 = vmatpush1.msra.mxu0 0.0
  %1139 = vmatprep.subr.mxu0 0.0
  %1140 = vmatpush1.msra.mxu0 0.0
  %1141 = vmatprep.subr.mxu0 0.0
  %1142 = vmatpush1.msra.mxu0 0.0
  %1143 = vmatprep.subr.mxu0 0.0
  %1144 = vmatpush1.msra.mxu0 0.0
  %1145 = vmatprep.subr.mxu0 0.0
  %1146 = vmatpush1.msra.mxu0 0.0
  %1147 = vmatprep.subr.mxu0 0.0
  %1148 = vmatpush1.msra.mxu0 0.0
  %1149 = vmatprep.subr.mxu0 0.0
  %1150 = vmatpush1.msra.mxu0 0.0
  %1151 = vmatprep.mubr.f32.mxu0 0.0
  %1152 = vmatmul.mubr.f32.gmra.mrb[0].mxu0 %v1085
  %v1153 = vpop.f32.mrb[0].mxu0
  %v1154 = vadd.f32 0.0, %v1153
  %v1155 = vpop.f32.mrb[0].mxu0
  %1156 = vdwg.mxu0
  %v1157 = vadd.f32 %v1080, %v1154
  %s1158 = scalar_lea.vmem %s3, 80
  %v1159 = vld [vmem:[%s1158] sm:$0xff]
  %v1160 = vld [vmem:[%s1158 + $0x8] sm:$0xff]
  %v1161 = vrot.slane %v772, 2
  %v1162 = vsel %vm782, %v1161, 0
  %1164 = vmatprep.subr.mxu0 0.0
  %1165 = vmatpush1.msra.mxu0 %v1159
  %1166 = vmatprep.subr.mxu0 0.0
  %1167 = vmatpush1.msra.mxu0 %v1160
  %1168 = vmatprep.subr.mxu0 0.0
  %1169 = vmatpush1.msra.mxu0 0.0
  %1170 = vmatprep.subr.mxu0 0.0
  %1171 = vmatpush1.msra.mxu0 0.0
  %1172 = vmatprep.subr.mxu0 0.0
  %1173 = vmatpush1.msra.mxu0 0.0
  %1174 = vmatprep.subr.mxu0 0.0
  %1175 = vmatpush1.msra.mxu0 0.0
  %1176 = vmatprep.subr.mxu0 0.0
  %1177 = vmatpush1.msra.mxu0 0.0
  %1178 = vmatprep.subr.mxu0 0.0
  %1179 = vmatpush1.msra.mxu0 0.0
  %1180 = vmatprep.subr.mxu0 0.0
  %1181 = vmatpush1.msra.mxu0 0.0
  %1182 = vmatprep.subr.mxu0 0.0
  %1183 = vmatpush1.msra.mxu0 0.0
  %1184 = vmatprep.subr.mxu0 0.0
  %1185 = vmatpush1.msra.mxu0 0.0
  %1186 = vmatprep.subr.mxu0 0.0
  %1187 = vmatpush1.msra.mxu0 0.0
  %1188 = vmatprep.subr.mxu0 0.0
  %1189 = vmatpush1.msra.mxu0 0.0
  %1190 = vmatprep.subr.mxu0 0.0
  %1191 = vmatpush1.msra.mxu0 0.0
  %1192 = vmatprep.subr.mxu0 0.0
  %1193 = vmatpush1.msra.mxu0 0.0
  %1194 = vmatprep.subr.mxu0 0.0
  %1195 = vmatpush1.msra.mxu0 0.0
  %1196 = vmatprep.subr.mxu0 0.0
  %1197 = vmatpush1.msra.mxu0 0.0
  %1198 = vmatprep.subr.mxu0 0.0
  %1199 = vmatpush1.msra.mxu0 0.0
  %1200 = vmatprep.subr.mxu0 0.0
  %1201 = vmatpush1.msra.mxu0 0.0
  %1202 = vmatprep.subr.mxu0 0.0
  %1203 = vmatpush1.msra.mxu0 0.0
  %1204 = vmatprep.subr.mxu0 0.0
  %1205 = vmatpush1.msra.mxu0 0.0
  %1206 = vmatprep.subr.mxu0 0.0
  %1207 = vmatpush1.msra.mxu0 0.0
  %1208 = vmatprep.subr.mxu0 0.0
  %1209 = vmatpush1.msra.mxu0 0.0
  %1210 = vmatprep.subr.mxu0 0.0
  %1211 = vmatpush1.msra.mxu0 0.0
  %1212 = vmatprep.subr.mxu0 0.0
  %1213 = vmatpush1.msra.mxu0 0.0
  %1214 = vmatprep.subr.mxu0 0.0
  %1215 = vmatpush1.msra.mxu0 0.0
  %1216 = vmatprep.subr.mxu0 0.0
  %1217 = vmatpush1.msra.mxu0 0.0
  %1218 = vmatprep.subr.mxu0 0.0
  %1219 = vmatpush1.msra.mxu0 0.0
  %1220 = vmatprep.subr.mxu0 0.0
  %1221 = vmatpush1.msra.mxu0 0.0
  %1222 = vmatprep.subr.mxu0 0.0
  %1223 = vmatpush1.msra.mxu0 0.0
  %1224 = vmatprep.subr.mxu0 0.0
  %1225 = vmatpush1.msra.mxu0 0.0
  %1226 = vmatprep.subr.mxu0 0.0
  %1227 = vmatpush1.msra.mxu0 0.0
  %1228 = vmatprep.mubr.f32.mxu0 0.0
  %1229 = vmatmul.mubr.f32.gmra.mrb[0].mxu0 %v1162
  %v1230 = vpop.f32.mrb[0].mxu0
  %v1231 = vadd.f32 0.0, %v1230
  %v1232 = vpop.f32.mrb[0].mxu0
  %1233 = vdwg.mxu0
  %v1234 = vadd.f32 %v1157, %v1231
  %s1235 = scalar_lea.vmem %s3, 96
  %v1236 = vld [vmem:[%s1235] sm:$0xff]
  %v1237 = vld [vmem:[%s1235 + $0x8] sm:$0xff]
  %v1238 = vrot.slane %v772, 4
  %v1239 = vsel %vm782, %v1238, 0
  %1241 = vmatprep.subr.mxu0 0.0
  %1242 = vmatpush1.msra.mxu0 %v1236
  %1243 = vmatprep.subr.mxu0 0.0
  %1244 = vmatpush1.msra.mxu0 %v1237
  %1245 = vmatprep.subr.mxu0 0.0
  %1246 = vmatpush1.msra.mxu0 0.0
  %1247 = vmatprep.subr.mxu0 0.0
  %1248 = vmatpush1.msra.mxu0 0.0
  %1249 = vmatprep.subr.mxu0 0.0
  %1250 = vmatpush1.msra.mxu0 0.0
  %1251 = vmatprep.subr.mxu0 0.0
  %1252 = vmatpush1.msra.mxu0 0.0
  %1253 = vmatprep.subr.mxu0 0.0
  %1254 = vmatpush1.msra.mxu0 0.0
  %1255 = vmatprep.subr.mxu0 0.0
  %1256 = vmatpush1.msra.mxu0 0.0
  %1257 = vmatprep.subr.mxu0 0.0
  %1258 = vmatpush1.msra.mxu0 0.0
  %1259 = vmatprep.subr.mxu0 0.0
  %1260 = vmatpush1.msra.mxu0 0.0
  %1261 = vmatprep.subr.mxu0 0.0
  %1262 = vmatpush1.msra.mxu0 0.0
  %1263 = vmatprep.subr.mxu0 0.0
  %1264 = vmatpush1.msra.mxu0 0.0
  %1265 = vmatprep.subr.mxu0 0.0
  %1266 = vmatpush1.msra.mxu0 0.0
  %1267 = vmatprep.subr.mxu0 0.0
  %1268 = vmatpush1.msra.mxu0 0.0
  %1269 = vmatprep.subr.mxu0 0.0
  %1270 = vmatpush1.msra.mxu0 0.0
  %1271 = vmatprep.subr.mxu0 0.0
  %1272 = vmatpush1.msra.mxu0 0.0
  %1273 = vmatprep.subr.mxu0 0.0
  %1274 = vmatpush1.msra.mxu0 0.0
  %1275 = vmatprep.subr.mxu0 0.0
  %1276 = vmatpush1.msra.mxu0 0.0
  %1277 = vmatprep.subr.mxu0 0.0
  %1278 = vmatpush1.msra.mxu0 0.0
  %1279 = vmatprep.subr.mxu0 0.0
  %1280 = vmatpush1.msra.mxu0 0.0
  %1281 = vmatprep.subr.mxu0 0.0
  %1282 = vmatpush1.msra.mxu0 0.0
  %1283 = vmatprep.subr.mxu0 0.0
  %1284 = vmatpush1.msra.mxu0 0.0
  %1285 = vmatprep.subr.mxu0 0.0
  %1286 = vmatpush1.msra.mxu0 0.0
  %1287 = vmatprep.subr.mxu0 0.0
  %1288 = vmatpush1.msra.mxu0 0.0
  %1289 = vmatprep.subr.mxu0 0.0
  %1290 = vmatpush1.msra.mxu0 0.0
  %1291 = vmatprep.subr.mxu0 0.0
  %1292 = vmatpush1.msra.mxu0 0.0
  %1293 = vmatprep.subr.mxu0 0.0
  %1294 = vmatpush1.msra.mxu0 0.0
  %1295 = vmatprep.subr.mxu0 0.0
  %1296 = vmatpush1.msra.mxu0 0.0
  %1297 = vmatprep.subr.mxu0 0.0
  %1298 = vmatpush1.msra.mxu0 0.0
  %1299 = vmatprep.subr.mxu0 0.0
  %1300 = vmatpush1.msra.mxu0 0.0
  %1301 = vmatprep.subr.mxu0 0.0
  %1302 = vmatpush1.msra.mxu0 0.0
  %1303 = vmatprep.subr.mxu0 0.0
  %1304 = vmatpush1.msra.mxu0 0.0
  %1305 = vmatprep.mubr.f32.mxu0 0.0
  %1306 = vmatmul.mubr.f32.gmra.mrb[0].mxu0 %v1239
  %v1307 = vpop.f32.mrb[0].mxu0
  %v1308 = vadd.f32 0.0, %v1307
  %v1309 = vpop.f32.mrb[0].mxu0
  %1310 = vdwg.mxu0
  %v1311 = vadd.f32 %v1234, %v1308
  %s1312 = scalar_lea.vmem %s3, 112
  %v1313 = vld [vmem:[%s1312] sm:$0xff]
  %v1314 = vld [vmem:[%s1312 + $0x8] sm:$0xff]
  %v1315 = vrot.slane %v772, 6
  %v1316 = vsel %vm782, %v1315, 0
  %1318 = vmatprep.subr.mxu0 0.0
  %1319 = vmatpush1.msra.mxu0 %v1313
  %1320 = vmatprep.subr.mxu0 0.0
  %1321 = vmatpush1.msra.mxu0 %v1314
  %1322 = vmatprep.subr.mxu0 0.0
  %1323 = vmatpush1.msra.mxu0 0.0
  %1324 = vmatprep.subr.mxu0 0.0
  %1325 = vmatpush1.msra.mxu0 0.0
  %1326 = vmatprep.subr.mxu0 0.0
  %1327 = vmatpush1.msra.mxu0 0.0
  %1328 = vmatprep.subr.mxu0 0.0
  %1329 = vmatpush1.msra.mxu0 0.0
  %1330 = vmatprep.subr.mxu0 0.0
  %1331 = vmatpush1.msra.mxu0 0.0
  %1332 = vmatprep.subr.mxu0 0.0
  %1333 = vmatpush1.msra.mxu0 0.0
  %1334 = vmatprep.subr.mxu0 0.0
  %1335 = vmatpush1.msra.mxu0 0.0
  %1336 = vmatprep.subr.mxu0 0.0
  %1337 = vmatpush1.msra.mxu0 0.0
  %1338 = vmatprep.subr.mxu0 0.0
  %1339 = vmatpush1.msra.mxu0 0.0
  %1340 = vmatprep.subr.mxu0 0.0
  %1341 = vmatpush1.msra.mxu0 0.0
  %1342 = vmatprep.subr.mxu0 0.0
  %1343 = vmatpush1.msra.mxu0 0.0
  %1344 = vmatprep.subr.mxu0 0.0
  %1345 = vmatpush1.msra.mxu0 0.0
  %1346 = vmatprep.subr.mxu0 0.0
  %1347 = vmatpush1.msra.mxu0 0.0
  %1348 = vmatprep.subr.mxu0 0.0
  %1349 = vmatpush1.msra.mxu0 0.0
  %1350 = vmatprep.subr.mxu0 0.0
  %1351 = vmatpush1.msra.mxu0 0.0
  %1352 = vmatprep.subr.mxu0 0.0
  %1353 = vmatpush1.msra.mxu0 0.0
  %1354 = vmatprep.subr.mxu0 0.0
  %1355 = vmatpush1.msra.mxu0 0.0
  %1356 = vmatprep.subr.mxu0 0.0
  %1357 = vmatpush1.msra.mxu0 0.0
  %1358 = vmatprep.subr.mxu0 0.0
  %1359 = vmatpush1.msra.mxu0 0.0
  %1360 = vmatprep.subr.mxu0 0.0
  %1361 = vmatpush1.msra.mxu0 0.0
  %1362 = vmatprep.subr.mxu0 0.0
  %1363 = vmatpush1.msra.mxu0 0.0
  %1364 = vmatprep.subr.mxu0 0.0
  %1365 = vmatpush1.msra.mxu0 0.0
  %1366 = vmatprep.subr.mxu0 0.0
  %1367 = vmatpush1.msra.mxu0 0.0
  %1368 = vmatprep.subr.mxu0 0.0
  %1369 = vmatpush1.msra.mxu0 0.0
  %1370 = vmatprep.subr.mxu0 0.0
  %1371 = vmatpush1.msra.mxu0 0.0
  %1372 = vmatprep.subr.mxu0 0.0
  %1373 = vmatpush1.msra.mxu0 0.0
  %1374 = vmatprep.subr.mxu0 0.0
  %1375 = vmatpush1.msra.mxu0 0.0
  %1376 = vmatprep.subr.mxu0 0.0
  %1377 = vmatpush1.msra.mxu0 0.0
  %1378 = vmatprep.subr.mxu0 0.0
  %1379 = vmatpush1.msra.mxu0 0.0
  %1380 = vmatprep.subr.mxu0 0.0
  %1381 = vmatpush1.msra.mxu0 0.0
  %1382 = vmatprep.mubr.f32.mxu0 0.0
  %1383 = vmatmul.mubr.f32.gmra.mrb[0].mxu0 %v1316
  %v1384 = vpop.f32.mrb[0].mxu0
  %v1385 = vadd.f32 0.0, %v1384
  %v1386 = vpop.f32.mrb[0].mxu0
  %1387 = vdwg.mxu0
  %v1388 = vadd.f32 %v1311, %v1385
  %s1389 = scalar_lea.vmem %s3, 128
  %v1390 = vld [vmem:[%s1389] sm:$0xff]
  %v1391 = vld [vmem:[%s1389 + $0x8] sm:$0xff]
  %v1393 = vsel %vm782, %v773, 0
  %1395 = vmatprep.subr.mxu0 0.0
  %1396 = vmatpush1.msra.mxu0 %v1390
  %1397 = vmatprep.subr.mxu0 0.0
  %1398 = vmatpush1.msra.mxu0 %v1391
  %1399 = vmatprep.subr.mxu0 0.0
  %1400 = vmatpush1.msra.mxu0 0.0
  %1401 = vmatprep.subr.mxu0 0.0
  %1402 = vmatpush1.msra.mxu0 0.0
  %1403 = vmatprep.subr.mxu0 0.0
  %1404 = vmatpush1.msra.mxu0 0.0
  %1405 = vmatprep.subr.mxu0 0.0
  %1406 = vmatpush1.msra.mxu0 0.0
  %1407 = vmatprep.subr.mxu0 0.0
  %1408 = vmatpush1.msra.mxu0 0.0
  %1409 = vmatprep.subr.mxu0 0.0
  %1410 = vmatpush1.msra.mxu0 0.0
  %1411 = vmatprep.subr.mxu0 0.0
  %1412 = vmatpush1.msra.mxu0 0.0
  %1413 = vmatprep.subr.mxu0 0.0
  %1414 = vmatpush1.msra.mxu0 0.0
  %1415 = vmatprep.subr.mxu0 0.0
  %1416 = vmatpush1.msra.mxu0 0.0
  %1417 = vmatprep.subr.mxu0 0.0
  %1418 = vmatpush1.msra.mxu0 0.0
  %1419 = vmatprep.subr.mxu0 0.0
  %1420 = vmatpush1.msra.mxu0 0.0
  %1421 = vmatprep.subr.mxu0 0.0
  %1422 = vmatpush1.msra.mxu0 0.0
  %1423 = vmatprep.subr.mxu0 0.0
  %1424 = vmatpush1.msra.mxu0 0.0
  %1425 = vmatprep.subr.mxu0 0.0
  %1426 = vmatpush1.msra.mxu0 0.0
  %1427 = vmatprep.subr.mxu0 0.0
  %1428 = vmatpush1.msra.mxu0 0.0
  %1429 = vmatprep.subr.mxu0 0.0
  %1430 = vmatpush1.msra.mxu0 0.0
  %1431 = vmatprep.subr.mxu0 0.0
  %1432 = vmatpush1.msra.mxu0 0.0
  %1433 = vmatprep.subr.mxu0 0.0
  %1434 = vmatpush1.msra.mxu0 0.0
  %1435 = vmatprep.subr.mxu0 0.0
  %1436 = vmatpush1.msra.mxu0 0.0
  %1437 = vmatprep.subr.mxu0 0.0
  %1438 = vmatpush1.msra.mxu0 0.0
  %1439 = vmatprep.subr.mxu0 0.0
  %1440 = vmatpush1.msra.mxu0 0.0
  %1441 = vmatprep.subr.mxu0 0.0
  %1442 = vmatpush1.msra.mxu0 0.0
  %1443 = vmatprep.subr.mxu0 0.0
  %1444 = vmatpush1.msra.mxu0 0.0
  %1445 = vmatprep.subr.mxu0 0.0
  %1446 = vmatpush1.msra.mxu0 0.0
  %1447 = vmatprep.subr.mxu0 0.0
  %1448 = vmatpush1.msra.mxu0 0.0
  %1449 = vmatprep.subr.mxu0 0.0
  %1450 = vmatpush1.msra.mxu0 0.0
  %1451 = vmatprep.subr.mxu0 0.0
  %1452 = vmatpush1.msra.mxu0 0.0
  %1453 = vmatprep.subr.mxu0 0.0
  %1454 = vmatpush1.msra.mxu0 0.0
  %1455 = vmatprep.subr.mxu0 0.0
  %1456 = vmatpush1.msra.mxu0 0.0
  %1457 = vmatprep.subr.mxu0 0.0
  %1458 = vmatpush1.msra.mxu0 0.0
  %1459 = vmatprep.mubr.f32.mxu0 0.0
  %1460 = vmatmul.mubr.f32.gmra.mrb[0].mxu0 %v1393
  %v1461 = vpop.f32.mrb[0].mxu0
  %v1462 = vadd.f32 0.0, %v1461
  %v1463 = vpop.f32.mrb[0].mxu0
  %1464 = vdwg.mxu0
  %v1465 = vadd.f32 %v1388, %v1462
  %s1466 = scalar_lea.vmem %s3, 144
  %v1467 = vld [vmem:[%s1466] sm:$0xff]
  %v1468 = vld [vmem:[%s1466 + $0x8] sm:$0xff]
  %v1469 = vrot.slane %v773, 2
  %v1470 = vsel %vm782, %v1469, 0
  %1472 = vmatprep.subr.mxu0 0.0
  %1473 = vmatpush1.msra.mxu0 %v1467
  %1474 = vmatprep.subr.mxu0 0.0
  %1475 = vmatpush1.msra.mxu0 %v1468
  %1476 = vmatprep.subr.mxu0 0.0
  %1477 = vmatpush1.msra.mxu0 0.0
  %1478 = vmatprep.subr.mxu0 0.0
  %1479 = vmatpush1.msra.mxu0 0.0
  %1480 = vmatprep.subr.mxu0 0.0
  %1481 = vmatpush1.msra.mxu0 0.0
  %1482 = vmatprep.subr.mxu0 0.0
  %1483 = vmatpush1.msra.mxu0 0.0
  %1484 = vmatprep.subr.mxu0 0.0
  %1485 = vmatpush1.msra.mxu0 0.0
  %1486 = vmatprep.subr.mxu0 0.0
  %1487 = vmatpush1.msra.mxu0 0.0
  %1488 = vmatprep.subr.mxu0 0.0
  %1489 = vmatpush1.msra.mxu0 0.0
  %1490 = vmatprep.subr.mxu0 0.0
  %1491 = vmatpush1.msra.mxu0 0.0
  %1492 = vmatprep.subr.mxu0 0.0
  %1493 = vmatpush1.msra.mxu0 0.0
  %1494 = vmatprep.subr.mxu0 0.0
  %1495 = vmatpush1.msra.mxu0 0.0
  %1496 = vmatprep.subr.mxu0 0.0
  %1497 = vmatpush1.msra.mxu0 0.0
  %1498 = vmatprep.subr.mxu0 0.0
  %1499 = vmatpush1.msra.mxu0 0.0
  %1500 = vmatprep.subr.mxu0 0.0
  %1501 = vmatpush1.msra.mxu0 0.0
  %1502 = vmatprep.subr.mxu0 0.0
  %1503 = vmatpush1.msra.mxu0 0.0
  %1504 = vmatprep.subr.mxu0 0.0
  %1505 = vmatpush1.msra.mxu0 0.0
  %1506 = vmatprep.subr.mxu0 0.0
  %1507 = vmatpush1.msra.mxu0 0.0
  %1508 = vmatprep.subr.mxu0 0.0
  %1509 = vmatpush1.msra.mxu0 0.0
  %1510 = vmatprep.subr.mxu0 0.0
  %1511 = vmatpush1.msra.mxu0 0.0
  %1512 = vmatprep.subr.mxu0 0.0
  %1513 = vmatpush1.msra.mxu0 0.0
  %1514 = vmatprep.subr.mxu0 0.0
  %1515 = vmatpush1.msra.mxu0 0.0
  %1516 = vmatprep.subr.mxu0 0.0
  %1517 = vmatpush1.msra.mxu0 0.0
  %1518 = vmatprep.subr.mxu0 0.0
  %1519 = vmatpush1.msra.mxu0 0.0
  %1520 = vmatprep.subr.mxu0 0.0
  %1521 = vmatpush1.msra.mxu0 0.0
  %1522 = vmatprep.subr.mxu0 0.0
  %1523 = vmatpush1.msra.mxu0 0.0
  %1524 = vmatprep.subr.mxu0 0.0
  %1525 = vmatpush1.msra.mxu0 0.0
  %1526 = vmatprep.subr.mxu0 0.0
  %1527 = vmatpush1.msra.mxu0 0.0
  %1528 = vmatprep.subr.mxu0 0.0
  %1529 = vmatpush1.msra.mxu0 0.0
  %1530 = vmatprep.subr.mxu0 0.0
  %1531 = vmatpush1.msra.mxu0 0.0
  %1532 = vmatprep.subr.mxu0 0.0
  %1533 = vmatpush1.msra.mxu0 0.0
  %1534 = vmatprep.subr.mxu0 0.0
  %1535 = vmatpush1.msra.mxu0 0.0
  %1536 = vmatprep.mubr.f32.mxu0 0.0
  %1537 = vmatmul.mubr.f32.gmra.mrb[0].mxu0 %v1470
  %v1538 = vpop.f32.mrb[0].mxu0
  %v1539 = vadd.f32 0.0, %v1538
  %v1540 = vpop.f32.mrb[0].mxu0
  %1541 = vdwg.mxu0
  %v1542 = vadd.f32 %v1465, %v1539
  %s1543 = scalar_lea.vmem %s3, 160
  %v1544 = vld [vmem:[%s1543] sm:$0xff]
  %v1545 = vld [vmem:[%s1543 + $0x8] sm:$0xff]
  %v1546 = vrot.slane %v773, 4
  %v1547 = vsel %vm782, %v1546, 0
  %1549 = vmatprep.subr.mxu0 0.0
  %1550 = vmatpush1.msra.mxu0 %v1544
  %1551 = vmatprep.subr.mxu0 0.0
  %1552 = vmatpush1.msra.mxu0 %v1545
  %1553 = vmatprep.subr.mxu0 0.0
  %1554 = vmatpush1.msra.mxu0 0.0
  %1555 = vmatprep.subr.mxu0 0.0
  %1556 = vmatpush1.msra.mxu0 0.0
  %1557 = vmatprep.subr.mxu0 0.0
  %1558 = vmatpush1.msra.mxu0 0.0
  %1559 = vmatprep.subr.mxu0 0.0
  %1560 = vmatpush1.msra.mxu0 0.0
  %1561 = vmatprep.subr.mxu0 0.0
  %1562 = vmatpush1.msra.mxu0 0.0
  %1563 = vmatprep.subr.mxu0 0.0
  %1564 = vmatpush1.msra.mxu0 0.0
  %1565 = vmatprep.subr.mxu0 0.0
  %1566 = vmatpush1.msra.mxu0 0.0
  %1567 = vmatprep.subr.mxu0 0.0
  %1568 = vmatpush1.msra.mxu0 0.0
  %1569 = vmatprep.subr.mxu0 0.0
  %1570 = vmatpush1.msra.mxu0 0.0
  %1571 = vmatprep.subr.mxu0 0.0
  %1572 = vmatpush1.msra.mxu0 0.0
  %1573 = vmatprep.subr.mxu0 0.0
  %1574 = vmatpush1.msra.mxu0 0.0
  %1575 = vmatprep.subr.mxu0 0.0
  %1576 = vmatpush1.msra.mxu0 0.0
  %1577 = vmatprep.subr.mxu0 0.0
  %1578 = vmatpush1.msra.mxu0 0.0
  %1579 = vmatprep.subr.mxu0 0.0
  %1580 = vmatpush1.msra.mxu0 0.0
  %1581 = vmatprep.subr.mxu0 0.0
  %1582 = vmatpush1.msra.mxu0 0.0
  %1583 = vmatprep.subr.mxu0 0.0
  %1584 = vmatpush1.msra.mxu0 0.0
  %1585 = vmatprep.subr.mxu0 0.0
  %1586 = vmatpush1.msra.mxu0 0.0
  %1587 = vmatprep.subr.mxu0 0.0
  %1588 = vmatpush1.msra.mxu0 0.0
  %1589 = vmatprep.subr.mxu0 0.0
  %1590 = vmatpush1.msra.mxu0 0.0
  %1591 = vmatprep.subr.mxu0 0.0
  %1592 = vmatpush1.msra.mxu0 0.0
  %1593 = vmatprep.subr.mxu0 0.0
  %1594 = vmatpush1.msra.mxu0 0.0
  %1595 = vmatprep.subr.mxu0 0.0
  %1596 = vmatpush1.msra.mxu0 0.0
  %1597 = vmatprep.subr.mxu0 0.0
  %1598 = vmatpush1.msra.mxu0 0.0
  %1599 = vmatprep.subr.mxu0 0.0
  %1600 = vmatpush1.msra.mxu0 0.0
  %1601 = vmatprep.subr.mxu0 0.0
  %1602 = vmatpush1.msra.mxu0 0.0
  %1603 = vmatprep.subr.mxu0 0.0
  %1604 = vmatpush1.msra.mxu0 0.0
  %1605 = vmatprep.subr.mxu0 0.0
  %1606 = vmatpush1.msra.mxu0 0.0
  %1607 = vmatprep.subr.mxu0 0.0
  %1608 = vmatpush1.msra.mxu0 0.0
  %1609 = vmatprep.subr.mxu0 0.0
  %1610 = vmatpush1.msra.mxu0 0.0
  %1611 = vmatprep.subr.mxu0 0.0
  %1612 = vmatpush1.msra.mxu0 0.0
  %1613 = vmatprep.mubr.f32.mxu0 0.0
  %1614 = vmatmul.mubr.f32.gmra.mrb[0].mxu0 %v1547
  %v1615 = vpop.f32.mrb[0].mxu0
  %v1616 = vadd.f32 0.0, %v1615
  %v1617 = vpop.f32.mrb[0].mxu0
  %1618 = vdwg.mxu0
  %v1619 = vadd.f32 %v1542, %v1616
  %s1620 = scalar_lea.vmem %s3, 176
  %v1621 = vld [vmem:[%s1620] sm:$0xff]
  %v1622 = vld [vmem:[%s1620 + $0x8] sm:$0xff]
  %v1623 = vrot.slane %v773, 6
  %v1624 = vsel %vm782, %v1623, 0
  %1626 = vmatprep.subr.mxu0 0.0
  %1627 = vmatpush1.msra.mxu0 %v1621
  %1628 = vmatprep.subr.mxu0 0.0
  %1629 = vmatpush1.msra.mxu0 %v1622
  %1630 = vmatprep.subr.mxu0 0.0
  %1631 = vmatpush1.msra.mxu0 0.0
  %1632 = vmatprep.subr.mxu0 0.0
  %1633 = vmatpush1.msra.mxu0 0.0
  %1634 = vmatprep.subr.mxu0 0.0
  %1635 = vmatpush1.msra.mxu0 0.0
  %1636 = vmatprep.subr.mxu0 0.0
  %1637 = vmatpush1.msra.mxu0 0.0
  %1638 = vmatprep.subr.mxu0 0.0
  %1639 = vmatpush1.msra.mxu0 0.0
  %1640 = vmatprep.subr.mxu0 0.0
  %1641 = vmatpush1.msra.mxu0 0.0
  %1642 = vmatprep.subr.mxu0 0.0
  %1643 = vmatpush1.msra.mxu0 0.0
  %1644 = vmatprep.subr.mxu0 0.0
  %1645 = vmatpush1.msra.mxu0 0.0
  %1646 = vmatprep.subr.mxu0 0.0
  %1647 = vmatpush1.msra.mxu0 0.0
  %1648 = vmatprep.subr.mxu0 0.0
  %1649 = vmatpush1.msra.mxu0 0.0
  %1650 = vmatprep.subr.mxu0 0.0
  %1651 = vmatpush1.msra.mxu0 0.0
  %1652 = vmatprep.subr.mxu0 0.0
  %1653 = vmatpush1.msra.mxu0 0.0
  %1654 = vmatprep.subr.mxu0 0.0
  %1655 = vmatpush1.msra.mxu0 0.0
  %1656 = vmatprep.subr.mxu0 0.0
  %1657 = vmatpush1.msra.mxu0 0.0
  %1658 = vmatprep.subr.mxu0 0.0
  %1659 = vmatpush1.msra.mxu0 0.0
  %1660 = vmatprep.subr.mxu0 0.0
  %1661 = vmatpush1.msra.mxu0 0.0
  %1662 = vmatprep.subr.mxu0 0.0
  %1663 = vmatpush1.msra.mxu0 0.0
  %1664 = vmatprep.subr.mxu0 0.0
  %1665 = vmatpush1.msra.mxu0 0.0
  %1666 = vmatprep.subr.mxu0 0.0
  %1667 = vmatpush1.msra.mxu0 0.0
  %1668 = vmatprep.subr.mxu0 0.0
  %1669 = vmatpush1.msra.mxu0 0.0
  %1670 = vmatprep.subr.mxu0 0.0
  %1671 = vmatpush1.msra.mxu0 0.0
  %1672 = vmatprep.subr.mxu0 0.0
  %1673 = vmatpush1.msra.mxu0 0.0
  %1674 = vmatprep.subr.mxu0 0.0
  %1675 = vmatpush1.msra.mxu0 0.0
  %1676 = vmatprep.subr.mxu0 0.0
  %1677 = vmatpush1.msra.mxu0 0.0
  %1678 = vmatprep.subr.mxu0 0.0
  %1679 = vmatpush1.msra.mxu0 0.0
  %1680 = vmatprep.subr.mxu0 0.0
  %1681 = vmatpush1.msra.mxu0 0.0
  %1682 = vmatprep.subr.mxu0 0.0
  %1683 = vmatpush1.msra.mxu0 0.0
  %1684 = vmatprep.subr.mxu0 0.0
  %1685 = vmatpush1.msra.mxu0 0.0
  %1686 = vmatprep.subr.mxu0 0.0
  %1687 = vmatpush1.msra.mxu0 0.0
  %1688 = vmatprep.subr.mxu0 0.0
  %1689 = vmatpush1.msra.mxu0 0.0
  %1690 = vmatprep.mubr.f32.mxu0 0.0
  %1691 = vmatmul.mubr.f32.gmra.mrb[0].mxu0 %v1624
  %v1692 = vpop.f32.mrb[0].mxu0
  %v1693 = vadd.f32 0.0, %v1692
  %v1694 = vpop.f32.mrb[0].mxu0
  %1695 = vdwg.mxu0
  %v1696 = vadd.f32 %v1619, %v1693
  %s1697 = scalar_lea.vmem %s3, 192
  %v1698 = vld [vmem:[%s1697] sm:$0xff]
  %v1699 = vld [vmem:[%s1697 + $0x8] sm:$0xff]
  %v1701 = vsel %vm782, %v774, 0
  %1703 = vmatprep.subr.mxu0 0.0
  %1704 = vmatpush1.msra.mxu0 %v1698
  %1705 = vmatprep.subr.mxu0 0.0
  %1706 = vmatpush1.msra.mxu0 %v1699
  %1707 = vmatprep.subr.mxu0 0.0
  %1708 = vmatpush1.msra.mxu0 0.0
  %1709 = vmatprep.subr.mxu0 0.0
  %1710 = vmatpush1.msra.mxu0 0.0
  %1711 = vmatprep.subr.mxu0 0.0
  %1712 = vmatpush1.msra.mxu0 0.0
  %1713 = vmatprep.subr.mxu0 0.0
  %1714 = vmatpush1.msra.mxu0 0.0
  %1715 = vmatprep.subr.mxu0 0.0
  %1716 = vmatpush1.msra.mxu0 0.0
  %1717 = vmatprep.subr.mxu0 0.0
  %1718 = vmatpush1.msra.mxu0 0.0
  %1719 = vmatprep.subr.mxu0 0.0
  %1720 = vmatpush1.msra.mxu0 0.0
  %1721 = vmatprep.subr.mxu0 0.0
  %1722 = vmatpush1.msra.mxu0 0.0
  %1723 = vmatprep.subr.mxu0 0.0
  %1724 = vmatpush1.msra.mxu0 0.0
  %1725 = vmatprep.subr.mxu0 0.0
  %1726 = vmatpush1.msra.mxu0 0.0
  %1727 = vmatprep.subr.mxu0 0.0
  %1728 = vmatpush1.msra.mxu0 0.0
  %1729 = vmatprep.subr.mxu0 0.0
  %1730 = vmatpush1.msra.mxu0 0.0
  %1731 = vmatprep.subr.mxu0 0.0
  %1732 = vmatpush1.msra.mxu0 0.0
  %1733 = vmatprep.subr.mxu0 0.0
  %1734 = vmatpush1.msra.mxu0 0.0
  %1735 = vmatprep.subr.mxu0 0.0
  %1736 = vmatpush1.msra.mxu0 0.0
  %1737 = vmatprep.subr.mxu0 0.0
  %1738 = vmatpush1.msra.mxu0 0.0
  %1739 = vmatprep.subr.mxu0 0.0
  %1740 = vmatpush1.msra.mxu0 0.0
  %1741 = vmatprep.subr.mxu0 0.0
  %1742 = vmatpush1.msra.mxu0 0.0
  %1743 = vmatprep.subr.mxu0 0.0
  %1744 = vmatpush1.msra.mxu0 0.0
  %1745 = vmatprep.subr.mxu0 0.0
  %1746 = vmatpush1.msra.mxu0 0.0
  %1747 = vmatprep.subr.mxu0 0.0
  %1748 = vmatpush1.msra.mxu0 0.0
  %1749 = vmatprep.subr.mxu0 0.0
  %1750 = vmatpush1.msra.mxu0 0.0
  %1751 = vmatprep.subr.mxu0 0.0
  %1752 = vmatpush1.msra.mxu0 0.0
  %1753 = vmatprep.subr.mxu0 0.0
  %1754 = vmatpush1.msra.mxu0 0.0
  %1755 = vmatprep.subr.mxu0 0.0
  %1756 = vmatpush1.msra.mxu0 0.0
  %1757 = vmatprep.subr.mxu0 0.0
  %1758 = vmatpush1.msra.mxu0 0.0
  %1759 = vmatprep.subr.mxu0 0.0
  %1760 = vmatpush1.msra.mxu0 0.0
  %1761 = vmatprep.subr.mxu0 0.0
  %1762 = vmatpush1.msra.mxu0 0.0
  %1763 = vmatprep.subr.mxu0 0.0
  %1764 = vmatpush1.msra.mxu0 0.0
  %1765 = vmatprep.subr.mxu0 0.0
  %1766 = vmatpush1.msra.mxu0 0.0
  %1767 = vmatprep.mubr.f32.mxu0 0.0
  %1768 = vmatmul.mubr.f32.gmra.mrb[0].mxu0 %v1701
  %v1769 = vpop.f32.mrb[0].mxu0
  %v1770 = vadd.f32 0.0, %v1769
  %v1771 = vpop.f32.mrb[0].mxu0
  %1772 = vdwg.mxu0
  %v1773 = vadd.f32 %v1696, %v1770
  %s1774 = scalar_lea.vmem %s3, 208
  %v1775 = vld [vmem:[%s1774] sm:$0xff]
  %v1776 = vld [vmem:[%s1774 + $0x8] sm:$0xff]
  %v1777 = vrot.slane %v774, 2
  %v1778 = vsel %vm782, %v1777, 0
  %1780 = vmatprep.subr.mxu0 0.0
  %1781 = vmatpush1.msra.mxu0 %v1775
  %1782 = vmatprep.subr.mxu0 0.0
  %1783 = vmatpush1.msra.mxu0 %v1776
  %1784 = vmatprep.subr.mxu0 0.0
  %1785 = vmatpush1.msra.mxu0 0.0
  %1786 = vmatprep.subr.mxu0 0.0
  %1787 = vmatpush1.msra.mxu0 0.0
  %1788 = vmatprep.subr.mxu0 0.0
  %1789 = vmatpush1.msra.mxu0 0.0
  %1790 = vmatprep.subr.mxu0 0.0
  %1791 = vmatpush1.msra.mxu0 0.0
  %1792 = vmatprep.subr.mxu0 0.0
  %1793 = vmatpush1.msra.mxu0 0.0
  %1794 = vmatprep.subr.mxu0 0.0
  %1795 = vmatpush1.msra.mxu0 0.0
  %1796 = vmatprep.subr.mxu0 0.0
  %1797 = vmatpush1.msra.mxu0 0.0
  %1798 = vmatprep.subr.mxu0 0.0
  %1799 = vmatpush1.msra.mxu0 0.0
  %1800 = vmatprep.subr.mxu0 0.0
  %1801 = vmatpush1.msra.mxu0 0.0
  %1802 = vmatprep.subr.mxu0 0.0
  %1803 = vmatpush1.msra.mxu0 0.0
  %1804 = vmatprep.subr.mxu0 0.0
  %1805 = vmatpush1.msra.mxu0 0.0
  %1806 = vmatprep.subr.mxu0 0.0
  %1807 = vmatpush1.msra.mxu0 0.0
  %1808 = vmatprep.subr.mxu0 0.0
  %1809 = vmatpush1.msra.mxu0 0.0
  %1810 = vmatprep.subr.mxu0 0.0
  %1811 = vmatpush1.msra.mxu0 0.0
  %1812 = vmatprep.subr.mxu0 0.0
  %1813 = vmatpush1.msra.mxu0 0.0
  %1814 = vmatprep.subr.mxu0 0.0
  %1815 = vmatpush1.msra.mxu0 0.0
  %1816 = vmatprep.subr.mxu0 0.0
  %1817 = vmatpush1.msra.mxu0 0.0
  %1818 = vmatprep.subr.mxu0 0.0
  %1819 = vmatpush1.msra.mxu0 0.0
  %1820 = vmatprep.subr.mxu0 0.0
  %1821 = vmatpush1.msra.mxu0 0.0
  %1822 = vmatprep.subr.mxu0 0.0
  %1823 = vmatpush1.msra.mxu0 0.0
  %1824 = vmatprep.subr.mxu0 0.0
  %1825 = vmatpush1.msra.mxu0 0.0
  %1826 = vmatprep.subr.mxu0 0.0
  %1827 = vmatpush1.msra.mxu0 0.0
  %1828 = vmatprep.subr.mxu0 0.0
  %1829 = vmatpush1.msra.mxu0 0.0
  %1830 = vmatprep.subr.mxu0 0.0
  %1831 = vmatpush1.msra.mxu0 0.0
  %1832 = vmatprep.subr.mxu0 0.0
  %1833 = vmatpush1.msra.mxu0 0.0
  %1834 = vmatprep.subr.mxu0 0.0
  %1835 = vmatpush1.msra.mxu0 0.0
  %1836 = vmatprep.subr.mxu0 0.0
  %1837 = vmatpush1.msra.mxu0 0.0
  %1838 = vmatprep.subr.mxu0 0.0
  %1839 = vmatpush1.msra.mxu0 0.0
  %1840 = vmatprep.subr.mxu0 0.0
  %1841 = vmatpush1.msra.mxu0 0.0
  %1842 = vmatprep.subr.mxu0 0.0
  %1843 = vmatpush1.msra.mxu0 0.0
  %1844 = vmatprep.mubr.f32.mxu0 0.0
  %1845 = vmatmul.mubr.f32.gmra.mrb[0].mxu0 %v1778
  %v1846 = vpop.f32.mrb[0].mxu0
  %v1847 = vadd.f32 0.0, %v1846
  %v1848 = vpop.f32.mrb[0].mxu0
  %1849 = vdwg.mxu0
  %v1850 = vadd.f32 %v1773, %v1847
  %s1851 = scalar_lea.vmem %s3, 224
  %v1852 = vld [vmem:[%s1851] sm:$0xff]
  %v1853 = vld [vmem:[%s1851 + $0x8] sm:$0xff]
  %v1854 = vrot.slane %v774, 4
  %v1855 = vsel %vm782, %v1854, 0
  %1857 = vmatprep.subr.mxu0 0.0
  %1858 = vmatpush1.msra.mxu0 %v1852
  %1859 = vmatprep.subr.mxu0 0.0
  %1860 = vmatpush1.msra.mxu0 %v1853
  %1861 = vmatprep.subr.mxu0 0.0
  %1862 = vmatpush1.msra.mxu0 0.0
  %1863 = vmatprep.subr.mxu0 0.0
  %1864 = vmatpush1.msra.mxu0 0.0
  %1865 = vmatprep.subr.mxu0 0.0
  %1866 = vmatpush1.msra.mxu0 0.0
  %1867 = vmatprep.subr.mxu0 0.0
  %1868 = vmatpush1.msra.mxu0 0.0
  %1869 = vmatprep.subr.mxu0 0.0
  %1870 = vmatpush1.msra.mxu0 0.0
  %1871 = vmatprep.subr.mxu0 0.0
  %1872 = vmatpush1.msra.mxu0 0.0
  %1873 = vmatprep.subr.mxu0 0.0
  %1874 = vmatpush1.msra.mxu0 0.0
  %1875 = vmatprep.subr.mxu0 0.0
  %1876 = vmatpush1.msra.mxu0 0.0
  %1877 = vmatprep.subr.mxu0 0.0
  %1878 = vmatpush1.msra.mxu0 0.0
  %1879 = vmatprep.subr.mxu0 0.0
  %1880 = vmatpush1.msra.mxu0 0.0
  %1881 = vmatprep.subr.mxu0 0.0
  %1882 = vmatpush1.msra.mxu0 0.0
  %1883 = vmatprep.subr.mxu0 0.0
  %1884 = vmatpush1.msra.mxu0 0.0
  %1885 = vmatprep.subr.mxu0 0.0
  %1886 = vmatpush1.msra.mxu0 0.0
  %1887 = vmatprep.subr.mxu0 0.0
  %1888 = vmatpush1.msra.mxu0 0.0
  %1889 = vmatprep.subr.mxu0 0.0
  %1890 = vmatpush1.msra.mxu0 0.0
  %1891 = vmatprep.subr.mxu0 0.0
  %1892 = vmatpush1.msra.mxu0 0.0
  %1893 = vmatprep.subr.mxu0 0.0
  %1894 = vmatpush1.msra.mxu0 0.0
  %1895 = vmatprep.subr.mxu0 0.0
  %1896 = vmatpush1.msra.mxu0 0.0
  %1897 = vmatprep.subr.mxu0 0.0
  %1898 = vmatpush1.msra.mxu0 0.0
  %1899 = vmatprep.subr.mxu0 0.0
  %1900 = vmatpush1.msra.mxu0 0.0
  %1901 = vmatprep.subr.mxu0 0.0
  %1902 = vmatpush1.msra.mxu0 0.0
  %1903 = vmatprep.subr.mxu0 0.0
  %1904 = vmatpush1.msra.mxu0 0.0
  %1905 = vmatprep.subr.mxu0 0.0
  %1906 = vmatpush1.msra.mxu0 0.0
  %1907 = vmatprep.subr.mxu0 0.0
  %1908 = vmatpush1.msra.mxu0 0.0
  %1909 = vmatprep.subr.mxu0 0.0
  %1910 = vmatpush1.msra.mxu0 0.0
  %1911 = vmatprep.subr.mxu0 0.0
  %1912 = vmatpush1.msra.mxu0 0.0
  %1913 = vmatprep.subr.mxu0 0.0
  %1914 = vmatpush1.msra.mxu0 0.0
  %1915 = vmatprep.subr.mxu0 0.0
  %1916 = vmatpush1.msra.mxu0 0.0
  %1917 = vmatprep.subr.mxu0 0.0
  %1918 = vmatpush1.msra.mxu0 0.0
  %1919 = vmatprep.subr.mxu0 0.0
  %1920 = vmatpush1.msra.mxu0 0.0
  %1921 = vmatprep.mubr.f32.mxu0 0.0
  %1922 = vmatmul.mubr.f32.gmra.mrb[0].mxu0 %v1855
  %v1923 = vpop.f32.mrb[0].mxu0
  %v1924 = vadd.f32 0.0, %v1923
  %v1925 = vpop.f32.mrb[0].mxu0
  %1926 = vdwg.mxu0
  %v1927 = vadd.f32 %v1850, %v1924
  %s1928 = scalar_lea.vmem %s3, 240
  %v1929 = vld [vmem:[%s1928] sm:$0xff]
  %v1930 = vld [vmem:[%s1928 + $0x8] sm:$0xff]
  %v1931 = vrot.slane %v774, 6
  %v1932 = vsel %vm782, %v1931, 0
  %1934 = vmatprep.subr.mxu0 0.0
  %1935 = vmatpush1.msra.mxu0 %v1929
  %1936 = vmatprep.subr.mxu0 0.0
  %1937 = vmatpush1.msra.mxu0 %v1930
  %1938 = vmatprep.subr.mxu0 0.0
  %1939 = vmatpush1.msra.mxu0 0.0
  %1940 = vmatprep.subr.mxu0 0.0
  %1941 = vmatpush1.msra.mxu0 0.0
  %1942 = vmatprep.subr.mxu0 0.0
  %1943 = vmatpush1.msra.mxu0 0.0
  %1944 = vmatprep.subr.mxu0 0.0
  %1945 = vmatpush1.msra.mxu0 0.0
  %1946 = vmatprep.subr.mxu0 0.0
  %1947 = vmatpush1.msra.mxu0 0.0
  %1948 = vmatprep.subr.mxu0 0.0
  %1949 = vmatpush1.msra.mxu0 0.0
  %1950 = vmatprep.subr.mxu0 0.0
  %1951 = vmatpush1.msra.mxu0 0.0
  %1952 = vmatprep.subr.mxu0 0.0
  %1953 = vmatpush1.msra.mxu0 0.0
  %1954 = vmatprep.subr.mxu0 0.0
  %1955 = vmatpush1.msra.mxu0 0.0
  %1956 = vmatprep.subr.mxu0 0.0
  %1957 = vmatpush1.msra.mxu0 0.0
  %1958 = vmatprep.subr.mxu0 0.0
  %1959 = vmatpush1.msra.mxu0 0.0
  %1960 = vmatprep.subr.mxu0 0.0
  %1961 = vmatpush1.msra.mxu0 0.0
  %1962 = vmatprep.subr.mxu0 0.0
  %1963 = vmatpush1.msra.mxu0 0.0
  %1964 = vmatprep.subr.mxu0 0.0
  %1965 = vmatpush1.msra.mxu0 0.0
  %1966 = vmatprep.subr.mxu0 0.0
  %1967 = vmatpush1.msra.mxu0 0.0
  %1968 = vmatprep.subr.mxu0 0.0
  %1969 = vmatpush1.msra.mxu0 0.0
  %1970 = vmatprep.subr.mxu0 0.0
  %1971 = vmatpush1.msra.mxu0 0.0
  %1972 = vmatprep.subr.mxu0 0.0
  %1973 = vmatpush1.msra.mxu0 0.0
  %1974 = vmatprep.subr.mxu0 0.0
  %1975 = vmatpush1.msra.mxu0 0.0
  %1976 = vmatprep.subr.mxu0 0.0
  %1977 = vmatpush1.msra.mxu0 0.0
  %1978 = vmatprep.subr.mxu0 0.0
  %1979 = vmatpush1.msra.mxu0 0.0
  %1980 = vmatprep.subr.mxu0 0.0
  %1981 = vmatpush1.msra.mxu0 0.0
  %1982 = vmatprep.subr.mxu0 0.0
  %1983 = vmatpush1.msra.mxu0 0.0
  %1984 = vmatprep.subr.mxu0 0.0
  %1985 = vmatpush1.msra.mxu0 0.0
  %1986 = vmatprep.subr.mxu0 0.0
  %1987 = vmatpush1.msra.mxu0 0.0
  %1988 = vmatprep.subr.mxu0 0.0
  %1989 = vmatpush1.msra.mxu0 0.0
  %1990 = vmatprep.subr.mxu0 0.0
  %1991 = vmatpush1.msra.mxu0 0.0
  %1992 = vmatprep.subr.mxu0 0.0
  %1993 = vmatpush1.msra.mxu0 0.0
  %1994 = vmatprep.subr.mxu0 0.0
  %1995 = vmatpush1.msra.mxu0 0.0
  %1996 = vmatprep.subr.mxu0 0.0
  %1997 = vmatpush1.msra.mxu0 0.0
  %1998 = vmatprep.mubr.f32.mxu0 0.0
  %1999 = vmatmul.mubr.f32.gmra.mrb[0].mxu0 %v1932
  %v2000 = vpop.f32.mrb[0].mxu0
  %v2001 = vadd.f32 0.0, %v2000
  %v2002 = vpop.f32.mrb[0].mxu0
  %2003 = vdwg.mxu0
  %v2004 = vadd.f32 %v1927, %v2001
  %v2005 = vld [vmem:[%s4] sm:$0x1]
  %v2007 = vlaneseq
  %v2008 = vshrl.u32 %v2007, 7
  %v2009 = vsub.s32 0, %v2008
  %v2010 = vrot.slane %v2005, %v2009
  %v2012 = vadd.f32 %v2004, %v2010
  %v2013 = vtanh.pop %v2012
  %v2014 = vld [vmem:[%s5] sm:$0xff]
  %v2015 = vld [vmem:[%s5 + $0x8] sm:$0xff]
  %v2016 = vld [vmem:[%s5 + $0x10] sm:$0xff]
  %v2017 = vld [vmem:[%s5 + $0x18] sm:$0xff]
  %v2018 = vld [vmem:[%s5 + $0x20] sm:$0xff]
  %v2019 = vld [vmem:[%s5 + $0x28] sm:$0xff]
  %v2020 = vld [vmem:[%s5 + $0x30] sm:$0xff]
  %v2021 = vld [vmem:[%s5 + $0x38] sm:$0xff]
  %v2022 = vld [vmem:[%s5 + $0x40] sm:$0xff]
  %v2023 = vld [vmem:[%s5 + $0x48] sm:$0xff]
  %v2024 = vld [vmem:[%s5 + $0x50] sm:$0xff]
  %v2025 = vld [vmem:[%s5 + $0x58] sm:$0xff]
  %v2026 = vld [vmem:[%s5 + $0x60] sm:$0xff]
  %v2027 = vld [vmem:[%s5 + $0x68] sm:$0xff]
  %v2028 = vld [vmem:[%s5 + $0x70] sm:$0xff]
  %v2029 = vld [vmem:[%s6] sm:$0x1]
  %v2031 = vlaneseq
  %v2032 = vshrl.u32 %v2031, 7
  %v2033 = vsub.s32 0, %v2032
  %v2034 = vrot.slane %v2029, %v2033
  %vm2036 = vcmask 982016
  %v2038 = vsel %vm2036, %v2013, 0
  %2040 = vmatprep.subr.mxu0 0.0
  %2041 = vmatpush1.msra.mxu0 %v2014
  %2042 = vmatprep.subr.mxu0 0.0
  %2043 = vmatpush1.msra.mxu0 %v2015
  %2044 = vmatprep.subr.mxu0 0.0
  %2045 = vmatpush1.msra.mxu0 %v2016
  %2046 = vmatprep.subr.mxu0 0.0
  %2047 = vmatpush1.msra.mxu0 %v2017
  %2048 = vmatprep.subr.mxu0 0.0
  %2049 = vmatpush1.msra.mxu0 %v2018
  %2050 = vmatprep.subr.mxu0 0.0
  %2051 = vmatpush1.msra.mxu0 %v2019
  %2052 = vmatprep.subr.mxu0 0.0
  %2053 = vmatpush1.msra.mxu0 %v2020
  %2054 = vmatprep.subr.mxu0 0.0
  %2055 = vmatpush1.msra.mxu0 %v2021
  %2056 = vmatprep.subr.mxu0 0.0
  %2057 = vmatpush1.msra.mxu0 %v2022
  %2058 = vmatprep.subr.mxu0 0.0
  %2059 = vmatpush1.msra.mxu0 %v2023
  %2060 = vmatprep.subr.mxu0 0.0
  %2061 = vmatpush1.msra.mxu0 %v2024
  %2062 = vmatprep.subr.mxu0 0.0
  %2063 = vmatpush1.msra.mxu0 %v2025
  %2064 = vmatprep.subr.mxu0 0.0
  %2065 = vmatpush1.msra.mxu0 %v2026
  %2066 = vmatprep.subr.mxu0 0.0
  %2067 = vmatpush1.msra.mxu0 %v2027
  %2068 = vmatprep.subr.mxu0 0.0
  %2069 = vmatpush1.msra.mxu0 %v2028
  %2070 = vmatprep.subr.mxu0 0.0
  %2071 = vmatpush1.msra.mxu0 0.0
  %2072 = vmatprep.subr.mxu0 0.0
  %2073 = vmatpush1.msra.mxu0 0.0
  %2074 = vmatprep.subr.mxu0 0.0
  %2075 = vmatpush1.msra.mxu0 0.0
  %2076 = vmatprep.subr.mxu0 0.0
  %2077 = vmatpush1.msra.mxu0 0.0
  %2078 = vmatprep.subr.mxu0 0.0
  %2079 = vmatpush1.msra.mxu0 0.0
  %2080 = vmatprep.subr.mxu0 0.0
  %2081 = vmatpush1.msra.mxu0 0.0
  %2082 = vmatprep.subr.mxu0 0.0
  %2083 = vmatpush1.msra.mxu0 0.0
  %2084 = vmatprep.subr.mxu0 0.0
  %2085 = vmatpush1.msra.mxu0 0.0
  %2086 = vmatprep.subr.mxu0 0.0
  %2087 = vmatpush1.msra.mxu0 0.0
  %2088 = vmatprep.subr.mxu0 0.0
  %2089 = vmatpush1.msra.mxu0 0.0
  %2090 = vmatprep.subr.mxu0 0.0
  %2091 = vmatpush1.msra.mxu0 0.0
  %2092 = vmatprep.subr.mxu0 0.0
  %2093 = vmatpush1.msra.mxu0 0.0
  %2094 = vmatprep.subr.mxu0 0.0
  %2095 = vmatpush1.msra.mxu0 0.0
  %2096 = vmatprep.subr.mxu0 0.0
  %2097 = vmatpush1.msra.mxu0 0.0
  %2098 = vmatprep.subr.mxu0 0.0
  %2099 = vmatpush1.msra.mxu0 0.0
  %2100 = vmatprep.subr.mxu0 0.0
  %2101 = vmatpush1.msra.mxu0 0.0
  %2102 = vmatprep.subr.mxu0 0.0
  %2103 = vmatpush1.msra.mxu0 0.0
  %2104 = vmatprep.mubr.f32.mxu0 0.0
  %2105 = vmatmul.mubr.f32.gmra.mrb[0].mxu0 %v2038
  %v2106 = vpop.f32.mrb[0].mxu0
  %v2107 = vadd.f32 %v2034, %v2106
  %v2108 = vpop.f32.mrb[0].mxu0
  %2109 = vdwg.mxu0
  %v2110 = vtanh.pop %v2107
  %v2111 = vld [vmem:[%s7] sm:$0xff]
  %v2112 = vld [vmem:[%s7 + $0x8] sm:$0xff]
  %v2113 = vld [vmem:[%s7 + $0x10] sm:$0xff]
  %v2114 = vld [vmem:[%s7 + $0x18] sm:$0xff]
  %v2115 = vld [vmem:[%s7 + $0x20] sm:$0xff]
  %v2116 = vld [vmem:[%s7 + $0x28] sm:$0xff]
  %v2117 = vld [vmem:[%s7 + $0x30] sm:$0xff]
  %v2118 = vld [vmem:[%s7 + $0x38] sm:$0xff]
  %v2119 = vld [vmem:[%s7 + $0x40] sm:$0xff]
  %v2120 = vld [vmem:[%s7 + $0x48] sm:$0xff]
  %v2121 = vld [vmem:[%s7 + $0x50] sm:$0xf]
  %v2122 = vld [vmem:[#allocation2] sm:$0x1]
  %v2124 = vlaneseq
  %v2125 = vshrl.u32 %v2124, 7
  %v2126 = vsub.s32 0, %v2125
  %v2127 = vrot.slane %v2122, %v2126
  %vm2129 = vcmask 687104
  %v2131 = vsel %vm2129, %v2110, 0
  %v2134 = vsel %vm179, %v2121, 0
  %2136 = vmatprep.subr.mxu0 0.0
  %2137 = vmatpush1.msra.mxu0 %v2111
  %2138 = vmatprep.subr.mxu0 0.0
  %2139 = vmatpush1.msra.mxu0 %v2112
  %2140 = vmatprep.subr.mxu0 0.0
  %2141 = vmatpush1.msra.mxu0 %v2113
  %2142 = vmatprep.subr.mxu0 0.0
  %2143 = vmatpush1.msra.mxu0 %v2114
  %2144 = vmatprep.subr.mxu0 0.0
  %2145 = vmatpush1.msra.mxu0 %v2115
  %2146 = vmatprep.subr.mxu0 0.0
  %2147 = vmatpush1.msra.mxu0 %v2116
  %2148 = vmatprep.subr.mxu0 0.0
  %2149 = vmatpush1.msra.mxu0 %v2117
  %2150 = vmatprep.subr.mxu0 0.0
  %2151 = vmatpush1.msra.mxu0 %v2118
  %2152 = vmatprep.subr.mxu0 0.0
  %2153 = vmatpush1.msra.mxu0 %v2119
  %2154 = vmatprep.subr.mxu0 0.0
  %2155 = vmatpush1.msra.mxu0 %v2120
  %2156 = vmatprep.subr.mxu0 0.0
  %2157 = vmatpush1.msra.mxu0 %v2134
  %2158 = vmatprep.subr.mxu0 0.0
  %2159 = vmatpush1.msra.mxu0 0.0
  %2160 = vmatprep.subr.mxu0 0.0
  %2161 = vmatpush1.msra.mxu0 0.0
  %2162 = vmatprep.subr.mxu0 0.0
  %2163 = vmatpush1.msra.mxu0 0.0
  %2164 = vmatprep.subr.mxu0 0.0
  %2165 = vmatpush1.msra.mxu0 0.0
  %2166 = vmatprep.subr.mxu0 0.0
  %2167 = vmatpush1.msra.mxu0 0.0
  %2168 = vmatprep.subr.mxu0 0.0
  %2169 = vmatpush1.msra.mxu0 0.0
  %2170 = vmatprep.subr.mxu0 0.0
  %2171 = vmatpush1.msra.mxu0 0.0
  %2172 = vmatprep.subr.mxu0 0.0
  %2173 = vmatpush1.msra.mxu0 0.0
  %2174 = vmatprep.subr.mxu0 0.0
  %2175 = vmatpush1.msra.mxu0 0.0
  %2176 = vmatprep.subr.mxu0 0.0
  %2177 = vmatpush1.msra.mxu0 0.0
  %2178 = vmatprep.subr.mxu0 0.0
  %2179 = vmatpush1.msra.mxu0 0.0
  %2180 = vmatprep.subr.mxu0 0.0
  %2181 = vmatpush1.msra.mxu0 0.0
  %2182 = vmatprep.subr.mxu0 0.0
  %2183 = vmatpush1.msra.mxu0 0.0
  %2184 = vmatprep.subr.mxu0 0.0
  %2185 = vmatpush1.msra.mxu0 0.0
  %2186 = vmatprep.subr.mxu0 0.0
  %2187 = vmatpush1.msra.mxu0 0.0
  %2188 = vmatprep.subr.mxu0 0.0
  %2189 = vmatpush1.msra.mxu0 0.0
  %2190 = vmatprep.subr.mxu0 0.0
  %2191 = vmatpush1.msra.mxu0 0.0
  %2192 = vmatprep.subr.mxu0 0.0
  %2193 = vmatpush1.msra.mxu0 0.0
  %2194 = vmatprep.subr.mxu0 0.0
  %2195 = vmatpush1.msra.mxu0 0.0
  %2196 = vmatprep.subr.mxu0 0.0
  %2197 = vmatpush1.msra.mxu0 0.0
  %2198 = vmatprep.subr.mxu0 0.0
  %2199 = vmatpush1.msra.mxu0 0.0
  %2200 = vmatprep.mubr.f32.mxu0 0.0
  %2201 = vmatmul.mubr.f32.gmra.mrb[0].mxu0 %v2131
  %v2202 = vpop.f32.mrb[0].mxu0
  %v2203 = vadd.f32 %v2127, %v2202
  %v2204 = vpop.f32.mrb[0].mxu0
  %2205 = vdwg.mxu0
  %v2206 = vxor.u32 %v2203, 2147483648
  %v2207 = vmul.f32 %v2206, 1.442695
  %v2208 = vpow.pop %v2207
  %v2209 = vadd.f32 %v2208, 1.0
  %v2210 = vrcp.pop %v2209
  %v2211 = vmul.f32 1.0, %v2210
  %vm2212 = vcmask 1024
  %2213 = vst.msk [vmem:[%s9] sm:$0x3] %vm2212, %v2211
  // Predicated region
  $region38: #{cnn_forward.3} parent=0 // pred_check
    _
  $region39: #{cnn_forward.3} parent=0 // pred_check_branch
    %2215 = sbr.rel (0) target = $region41
  $region40: #{cnn_forward.3} parent=0 // pred_region
    _
  $region41: #{cnn_forward.3} parent=0 // pred_fallthru
    _
  // Predicated region
  $region42: #{cnn_forward.3} parent=0 // pred_check
    _
  $region43: #{cnn_forward.3} parent=0 // pred_check_branch
    %2217 = sbr.rel (0) target = $region45
  $region44: #{cnn_forward.3} parent=0 // pred_region
    _
  $region45: #{cnn_forward.3} parent=0 // pred_fallthru
    _

</llo_original>
